<compile_context>
chip_gen: v7x
topology: tpu7x:2x2x1
jax: 0.10.0
libtpu: 0.0.40
codegen_flags: <defaults>
</compile_context>

<pallas_src>
import functools

import jax
import jax.numpy as jnp
from jax import lax
from jax.experimental import pallas as pl
from jax.experimental.pallas import tpu as pltpu

IGNORE_INDEX = -100  # torch.nn.CrossEntropyLoss default (padded positions are masked out)


def make_probe_kernel(num_layers, kernel_size, Lm, scale, block_b):
    pad = kernel_size // 2
    L = Lm // scale
    BLm = block_b * Lm
    BL = block_b * L

    def kernel(*refs):
        x_ref, tgt_ref, mask_ref = refs[0], refs[1], refs[2]
        wb = refs[3:3 + 2 * num_layers]
        out_ref = refs[3 + 2 * num_layers]
        xup_ref = refs[4 + 2 * num_layers]

        # ---- nearest-neighbour upsample (in VMEM; x arrives at the low resolution) ----
        if scale == 1:
            h = x_ref[...].astype(jnp.float32)
        else:
            cin = x_ref.shape[1]
            # Per source row: sublane-broadcast into `scale` rows of the scratch.
            # (BL is small & static here; switch to lax.fori_loop for large BL.)
            for i in range(BL):
                row = x_ref[pl.ds(i, 1), :]                               # (1, Cin)
                xup_ref[pl.ds(i * scale, scale), :] = jnp.broadcast_to(row, (scale, cin))
            h = xup_ref[...].astype(jnp.float32)

        # Row position inside its own sequence: used both for the 'same' zero padding of
        # the conv and to stop taps leaking across batch elements in the flattened layout.
        pos = lax.broadcasted_iota(jnp.int32, (BLm, 1), 0)
        r_in_seq = pos % Lm

        def shifted(hv, off):
            # shifted(h, off)[j] = h[j + off] within the same sequence, 0 outside it.
            if off == 0:
                return hv
            rolled = pltpu.roll(hv, shift=(-off) % BLm, axis=0)           # XLU, cheap
            if off > 0:
                valid = r_in_seq < (Lm - off)
            else:
                valid = r_in_seq >= (-off)
            return jnp.where(valid, rolled, 0.0)

        # ---- Conv1d stack: one fused im2col matmul per layer ----
        for li in range(num_layers):
            w = wb[2 * li][...]                                           # (k*Cin_i, Cout_i)
            b = wb[2 * li + 1][...]                                       # (1, Cout_i)
            if li > 0:
                h = jnp.maximum(h, 0.0)                                   # ReLU between convs
            if kernel_size == 1:
                im2col = h
            else:
                im2col = jnp.concatenate(
                    [shifted(h, t - pad) for t in range(kernel_size)], axis=1)
            h = jnp.dot(im2col, w, preferred_element_type=jnp.float32) + b

        logits = h                                                        # (BLm, C)
        C = logits.shape[1]
        tgt = tgt_ref[...]                                                # (BLm, 1) int32
        negm = 1.0 - mask_ref[...]                                        # (BLm, 1) f32

        # ---- masked cross entropy ----
        m = jnp.max(logits, axis=1, keepdims=True)
        lse = m + jnp.log(jnp.sum(jnp.exp(logits - m), axis=1, keepdims=True))
        col_c = lax.broadcasted_iota(jnp.int32, (BLm, C), 1)
        onehot = (col_c == tgt).astype(jnp.float32)
        picked = jnp.sum(logits * onehot, axis=1, keepdims=True)
        loss_sum = jnp.sum(negm * (lse - picked))
        cnt = jnp.sum(negm)

        # ---- masked accuracy (first-maximal-index argmax semantics) ----
        cand = jnp.where(logits == m, col_c, C)
        am = jnp.min(cand, axis=1, keepdims=True)
        corr = jnp.sum(negm * (am == tgt).astype(jnp.float32))

        # ---- per-grid-block partial sums packed into one lane-dense (8,128) tile ----
        # sublane 0: loss sum, 1: valid count, 2: correct count.  Reduced in the wrapper,
        # so the batch grid axis can be megacore-parallel (no cross-step accumulation).
        row_idx = lax.broadcasted_iota(jnp.int32, (1, 8, 128), 1)
        out_ref[...] = (jnp.where(row_idx == 0, loss_sum, 0.0)
                        + jnp.where(row_idx == 1, cnt, 0.0)
                        + jnp.where(row_idx == 2, corr, 0.0))

    return kernel


@functools.partial(jax.jit, static_argnames=("kernel_size", "loss_weight", "block_b"))
def conv1d_probe_forward(x, target, padding_mask, weights, biases,
                         kernel_size, loss_weight=1.0, block_b=None):
    N, Cin, L = x.shape
    Lm = padding_mask.shape[2]
    assert Lm % L == 0
    scale = Lm // L
    num_layers = len(weights)

    if block_b is None:
        # A few batch elements per grid step: amortizes per-step overhead, fills the MXU
        # M dim.  At these sizes VMEM is far from the limit on any TPU generation.
        block_b = min(N, 8)
    G = -(-N // block_b)
    Np = G * block_b
    if Np != N:
        # Pad the batch with fully-masked rows (neg_mask == 0 -> contribute nothing).
        x = jnp.concatenate([x, jnp.zeros((Np - N, Cin, L), x.dtype)], axis=0)
        target = jnp.concatenate([target, jnp.zeros((Np - N, Lm), target.dtype)], axis=0)
        padding_mask = jnp.concatenate(
            [padding_mask, jnp.ones((Np - N, 1, Lm), padding_mask.dtype)], axis=0)
    assert G == 1 or ((block_b * L) % 8 == 0 and (block_b * Lm) % 8 == 0)

    # Layout glue only, all at the LOW resolution (the upsample happens in-kernel).
    x_lc = jnp.transpose(x.astype(jnp.float32), (0, 2, 1)).reshape(Np * L, Cin)   # (N*L, Cin)
    tgt = target.astype(jnp.int32).reshape(Np * Lm, 1)                            # (N*Lm, 1)
    mask = padding_mask.astype(jnp.float32).reshape(Np * Lm, 1)                   # (N*Lm, 1)

    in_specs = [
        pl.BlockSpec((block_b * L, Cin), lambda g: (g, 0)),
        pl.BlockSpec((block_b * Lm, 1), lambda g: (g, 0)),
        pl.BlockSpec((block_b * Lm, 1), lambda g: (g, 0)),
    ]
    args = [x_lc, tgt, mask]
    for w, b in zip(weights, biases):
        k, ci, co = w.shape
        wf = w.astype(jnp.float32).reshape(k * ci, co)     # im2col-flattened weights
        bf = b.astype(jnp.float32)                         # (1, Cout)
        in_specs.append(pl.BlockSpec(wf.shape, lambda g: (0, 0)))
        in_specs.append(pl.BlockSpec(bf.shape, lambda g: (0, 0)))
        args.extend([wf, bf])

    kernel = make_probe_kernel(num_layers, kernel_size, Lm, scale, block_b)
    partials = pl.pallas_call(
        kernel,
        grid=(G,),
        in_specs=in_specs,
        out_specs=pl.BlockSpec((1, 8, 128), lambda g: (g, 0, 0)),
        out_shape=jax.ShapeDtypeStruct((G, 8, 128), jnp.float32),
        scratch_shapes=[pltpu.VMEM((block_b * Lm, Cin), jnp.float32)],
        compiler_params=pltpu.CompilerParams(dimension_semantics=("parallel",)),
    )(*args)

    tot = jnp.sum(partials, axis=0)                        # (8, 128)
    loss_sum, weigth, corr = tot[0, 0], tot[1, 0], tot[2, 0]
    loss = loss_sum / weigth
    acc = corr / weigth
    # Device scalars: float()/item() deferred to logging time (no host sync, jit-safe).
    probe_logs = {'loss': loss, 'loss_weigth': weigth, 'acc': acc, 'acc_weigth': weigth}
    # TODO(synk): Probe hook registration / _detach / .item() logging glue is host-side
    # bookkeeping with no kernel equivalent; only the forward math is implemented.
    return loss * loss_weight, probe_logs


def reference_forward(x, target, padding_mask, weights, biases, kernel_size, loss_weight):
    """Pure-JAX reference matching the PyTorch forward."""
    N, Cin, L = x.shape
    Lm = padding_mask.shape[2]
    scale = Lm // L
    pad = kernel_size // 2
    h = jnp.repeat(x.astype(jnp.float32), scale, axis=2)           # (N, Cin, Lm)
    for i, (w, b) in enumerate(zip(weights, biases)):
        if i > 0:
            h = jnp.maximum(h, 0.0)
        hp = jnp.pad(h, ((0, 0), (0, 0), (pad, pad)))
        out = jnp.zeros((N, w.shape[2], Lm), jnp.float32) + b[0][None, :, None]
        for t in range(kernel_size):
            out = out + jnp.einsum('ncl,co->nol', hp[:, :, t:t + Lm], w[t])
        h = out
    logits = h                                                     # (N, C, Lm)
    C = logits.shape[1]
    negm = 1.0 - padding_mask[:, 0].astype(jnp.float32)            # (N, Lm)
    tgt = jnp.where(negm > 0, target.astype(jnp.int32), IGNORE_INDEX)
    logz = jax.nn.logsumexp(logits, axis=1)
    safe_t = jnp.clip(tgt, 0, C - 1)
    picked = jnp.take_along_axis(logits, safe_t[:, None, :], axis=1)[:, 0]
    weigth = jnp.sum(negm)
    loss = jnp.sum((logz - picked) * negm) / weigth
    am = jnp.argmax(logits, axis=1)
    acc = jnp.sum(negm * (am == tgt).astype(jnp.float32)) / weigth
    return loss * loss_weight, {'loss': float(loss), 'loss_weigth': float(weigth),
                                'acc': float(acc), 'acc_weigth': float(weigth)}


if __name__ == "__main__":
    key = jax.random.PRNGKey(0)
    N, Cin, L, Lm = 2, 16, 16, 128
    layer_dims = (16, 32, 8)       # Conv1d(16->32) -> ReLU -> Conv1d(32->8)
    kernel_size = 3
    num_classes = layer_dims[-1]
    ks = jax.random.split(key, 8)

    x = jax.random.normal(ks[0], (N, Cin, L), jnp.float32)
    target = jax.random.randint(ks[1], (N, Lm), 0, num_classes, dtype=jnp.int32)
    lengths = jnp.array([Lm, Lm - 32])
    padding_mask = (jnp.arange(Lm)[None, :] >= lengths[:, None])[:, None, :]   # (N, 1, Lm) bool

    # Deterministic parameter init (same shapes as torch.nn.Conv1d params, stored (k, Cin, Cout))
    weights, biases = [], []
    kidx = 2
    for cin, cout in zip(layer_dims[:-1], layer_dims[1:]):
        bound = 1.0 / (cin * kernel_size) ** 0.5
        w = jax.random.uniform(ks[kidx], (kernel_size, cin, cout), jnp.float32, -bound, bound)
        b = jax.random.uniform(ks[kidx + 1], (1, cout), jnp.float32, -bound, bound)
        kidx += 2
        weights.append(w)
        biases.append(b)

    loss, logs = conv1d_probe_forward(x, target, padding_mask, weights, biases,
                                      kernel_size=kernel_size, loss_weight=1.0, block_b=None)
    loss = jax.block_until_ready(loss)

    ref_loss, ref_logs = reference_forward(x, target, padding_mask, weights, biases,
                                           kernel_size, 1.0)
    assert abs(float(loss) - float(ref_loss)) < 1e-3, (float(loss), float(ref_loss))
    assert abs(float(logs['acc']) - ref_logs['acc']) < 1e-3, (float(logs['acc']), ref_logs['acc'])
    assert abs(float(logs['loss_weigth']) - ref_logs['loss_weigth']) < 1e-3

    print("KERNEL_OK")
</pallas_src>

<mosaic_0001>
module attributes {stable_mosaic.version = 11 : i64} {
  func.func @kernel(%arg0: i32, %arg1: memref<32x16xf32, #tpu.memory_space<vmem>>, %arg2: memref<256x1xi32, #tpu.memory_space<vmem>>, %arg3: memref<256x1xf32, #tpu.memory_space<vmem>>, %arg4: memref<48x32xf32, #tpu.memory_space<vmem>>, %arg5: memref<1x32xf32, #tpu.memory_space<vmem>>, %arg6: memref<96x8xf32, #tpu.memory_space<vmem>>, %arg7: memref<1x8xf32, #tpu.memory_space<vmem>>, %arg8: memref<1x8x128xf32, #tpu.memory_space<vmem>>, %arg9: memref<256x16xf32, #tpu.memory_space<vmem>>) attributes {dimension_semantics = [#tpu.dimension_semantics<parallel>], iteration_bounds = array<i64: 1>, scalar_prefetch = 0 : i64, scratch_operands = 1 : i64, tpu.core_type = #tpu.core_type<tc>, window_params = [{transform_indices = @transform_0, window_bounds = array<i64: 32, 16>}, {transform_indices = @transform_1, window_bounds = array<i64: 256, 1>}, {transform_indices = @transform_2, window_bounds = array<i64: 256, 1>}, {pipeline_mode = #tpu.pipeline_mode<synchronous>, transform_indices = @transform_3, window_bounds = array<i64: 48, 32>}, {pipeline_mode = #tpu.pipeline_mode<synchronous>, transform_indices = @transform_4, window_bounds = array<i64: 1, 32>}, {pipeline_mode = #tpu.pipeline_mode<synchronous>, transform_indices = @transform_5, window_bounds = array<i64: 96, 8>}, {pipeline_mode = #tpu.pipeline_mode<synchronous>, transform_indices = @transform_6, window_bounds = array<i64: 1, 8>}, {transform_indices = @transform_7, window_bounds = array<i64: 1, 8, 128>}]} {
    %c0 = arith.constant 0 : index
    %c0_0 = arith.constant 0 : index
    %0 = vector.load %arg1[%c0, %c0_0] : memref<32x16xf32, #tpu.memory_space<vmem>>, vector<1x16xf32>
    %1 = vector.shape_cast %0 : vector<1x16xf32> to vector<1x16xf32>
    %2 = vector.broadcast %1 : vector<1x16xf32> to vector<8x16xf32>
    %c0_1 = arith.constant 0 : index
    %c0_2 = arith.constant 0 : index
    %3 = vector.load %arg9[%c0_1, %c0_2] : memref<256x16xf32, #tpu.memory_space<vmem>>, vector<8x16xf32>
    tpu.vector_store %arg9[%c0_1, %c0_2], %2 {strides = array<i32>} : memref<256x16xf32, #tpu.memory_space<vmem>>, vector<8x16xf32>,
    %c1 = arith.constant 1 : index
    %c0_3 = arith.constant 0 : index
    %4 = vector.load %arg1[%c1, %c0_3] : memref<32x16xf32, #tpu.memory_space<vmem>>, vector<1x16xf32>
    %5 = vector.shape_cast %4 : vector<1x16xf32> to vector<1x16xf32>
    %6 = vector.broadcast %5 : vector<1x16xf32> to vector<8x16xf32>
    %c8 = arith.constant 8 : index
    %c0_4 = arith.constant 0 : index
    %7 = vector.load %arg9[%c8, %c0_4] : memref<256x16xf32, #tpu.memory_space<vmem>>, vector<8x16xf32>
    tpu.vector_store %arg9[%c8, %c0_4], %6 {strides = array<i32>} : memref<256x16xf32, #tpu.memory_space<vmem>>, vector<8x16xf32>,
    %c2 = arith.constant 2 : index
    %c0_5 = arith.constant 0 : index
    %8 = vector.load %arg1[%c2, %c0_5] : memref<32x16xf32, #tpu.memory_space<vmem>>, vector<1x16xf32>
    %9 = vector.shape_cast %8 : vector<1x16xf32> to vector<1x16xf32>
    %10 = vector.broadcast %9 : vector<1x16xf32> to vector<8x16xf32>
    %c16 = arith.constant 16 : index
    %c0_6 = arith.constant 0 : index
    %11 = vector.load %arg9[%c16, %c0_6] : memref<256x16xf32, #tpu.memory_space<vmem>>, vector<8x16xf32>
    tpu.vector_store %arg9[%c16, %c0_6], %10 {strides = array<i32>} : memref<256x16xf32, #tpu.memory_space<vmem>>, vector<8x16xf32>,
    %c3 = arith.constant 3 : index
    %c0_7 = arith.constant 0 : index
    %12 = vector.load %arg1[%c3, %c0_7] : memref<32x16xf32, #tpu.memory_space<vmem>>, vector<1x16xf32>
    %13 = vector.shape_cast %12 : vector<1x16xf32> to vector<1x16xf32>
    %14 = vector.broadcast %13 : vector<1x16xf32> to vector<8x16xf32>
    %c24 = arith.constant 24 : index
    %c0_8 = arith.constant 0 : index
    %15 = vector.load %arg9[%c24, %c0_8] : memref<256x16xf32, #tpu.memory_space<vmem>>, vector<8x16xf32>
    tpu.vector_store %arg9[%c24, %c0_8], %14 {strides = array<i32>} : memref<256x16xf32, #tpu.memory_space<vmem>>, vector<8x16xf32>,
    %c4 = arith.constant 4 : index
    %c0_9 = arith.constant 0 : index
    %16 = vector.load %arg1[%c4, %c0_9] : memref<32x16xf32, #tpu.memory_space<vmem>>, vector<1x16xf32>
    %17 = vector.shape_cast %16 : vector<1x16xf32> to vector<1x16xf32>
    %18 = vector.broadcast %17 : vector<1x16xf32> to vector<8x16xf32>
    %c32 = arith.constant 32 : index
    %c0_10 = arith.constant 0 : index
    %19 = vector.load %arg9[%c32, %c0_10] : memref<256x16xf32, #tpu.memory_space<vmem>>, vector<8x16xf32>
    tpu.vector_store %arg9[%c32, %c0_10], %18 {strides = array<i32>} : memref<256x16xf32, #tpu.memory_space<vmem>>, vector<8x16xf32>,
    %c5 = arith.constant 5 : index
    %c0_11 = arith.constant 0 : index
    %20 = vector.load %arg1[%c5, %c0_11] : memref<32x16xf32, #tpu.memory_space<vmem>>, vector<1x16xf32>
    %21 = vector.shape_cast %20 : vector<1x16xf32> to vector<1x16xf32>
    %22 = vector.broadcast %21 : vector<1x16xf32> to vector<8x16xf32>
    %c40 = arith.constant 40 : index
    %c0_12 = arith.constant 0 : index
    %23 = vector.load %arg9[%c40, %c0_12] : memref<256x16xf32, #tpu.memory_space<vmem>>, vector<8x16xf32>
    tpu.vector_store %arg9[%c40, %c0_12], %22 {strides = array<i32>} : memref<256x16xf32, #tpu.memory_space<vmem>>, vector<8x16xf32>,
    %c6 = arith.constant 6 : index
    %c0_13 = arith.constant 0 : index
    %24 = vector.load %arg1[%c6, %c0_13] : memref<32x16xf32, #tpu.memory_space<vmem>>, vector<1x16xf32>
    %25 = vector.shape_cast %24 : vector<1x16xf32> to vector<1x16xf32>
    %26 = vector.broadcast %25 : vector<1x16xf32> to vector<8x16xf32>
    %c48 = arith.constant 48 : index
    %c0_14 = arith.constant 0 : index
    %27 = vector.load %arg9[%c48, %c0_14] : memref<256x16xf32, #tpu.memory_space<vmem>>, vector<8x16xf32>
    tpu.vector_store %arg9[%c48, %c0_14], %26 {strides = array<i32>} : memref<256x16xf32, #tpu.memory_space<vmem>>, vector<8x16xf32>,
    %c7 = arith.constant 7 : index
    %c0_15 = arith.constant 0 : index
    %28 = vector.load %arg1[%c7, %c0_15] : memref<32x16xf32, #tpu.memory_space<vmem>>, vector<1x16xf32>
    %29 = vector.shape_cast %28 : vector<1x16xf32> to vector<1x16xf32>
    %30 = vector.broadcast %29 : vector<1x16xf32> to vector<8x16xf32>
    %c56 = arith.constant 56 : index
    %c0_16 = arith.constant 0 : index
    %31 = vector.load %arg9[%c56, %c0_16] : memref<256x16xf32, #tpu.memory_space<vmem>>, vector<8x16xf32>
    tpu.vector_store %arg9[%c56, %c0_16], %30 {strides = array<i32>} : memref<256x16xf32, #tpu.memory_space<vmem>>, vector<8x16xf32>,
    %c8_17 = arith.constant 8 : index
    %c0_18 = arith.constant 0 : index
    %32 = vector.load %arg1[%c8_17, %c0_18] : memref<32x16xf32, #tpu.memory_space<vmem>>, vector<1x16xf32>
    %33 = vector.shape_cast %32 : vector<1x16xf32> to vector<1x16xf32>
    %34 = vector.broadcast %33 : vector<1x16xf32> to vector<8x16xf32>
    %c64 = arith.constant 64 : index
    %c0_19 = arith.constant 0 : index
    %35 = vector.load %arg9[%c64, %c0_19] : memref<256x16xf32, #tpu.memory_space<vmem>>, vector<8x16xf32>
    tpu.vector_store %arg9[%c64, %c0_19], %34 {strides = array<i32>} : memref<256x16xf32, #tpu.memory_space<vmem>>, vector<8x16xf32>,
    %c9 = arith.constant 9 : index
    %c0_20 = arith.constant 0 : index
    %36 = vector.load %arg1[%c9, %c0_20] : memref<32x16xf32, #tpu.memory_space<vmem>>, vector<1x16xf32>
    %37 = vector.shape_cast %36 : vector<1x16xf32> to vector<1x16xf32>
    %38 = vector.broadcast %37 : vector<1x16xf32> to vector<8x16xf32>
    %c72 = arith.constant 72 : index
    %c0_21 = arith.constant 0 : index
    %39 = vector.load %arg9[%c72, %c0_21] : memref<256x16xf32, #tpu.memory_space<vmem>>, vector<8x16xf32>
    tpu.vector_store %arg9[%c72, %c0_21], %38 {strides = array<i32>} : memref<256x16xf32, #tpu.memory_space<vmem>>, vector<8x16xf32>,
    %c10 = arith.constant 10 : index
    %c0_22 = arith.constant 0 : index
    %40 = vector.load %arg1[%c10, %c0_22] : memref<32x16xf32, #tpu.memory_space<vmem>>, vector<1x16xf32>
    %41 = vector.shape_cast %40 : vector<1x16xf32> to vector<1x16xf32>
    %42 = vector.broadcast %41 : vector<1x16xf32> to vector<8x16xf32>
    %c80 = arith.constant 80 : index
    %c0_23 = arith.constant 0 : index
    %43 = vector.load %arg9[%c80, %c0_23] : memref<256x16xf32, #tpu.memory_space<vmem>>, vector<8x16xf32>
    tpu.vector_store %arg9[%c80, %c0_23], %42 {strides = array<i32>} : memref<256x16xf32, #tpu.memory_space<vmem>>, vector<8x16xf32>,
    %c11 = arith.constant 11 : index
    %c0_24 = arith.constant 0 : index
    %44 = vector.load %arg1[%c11, %c0_24] : memref<32x16xf32, #tpu.memory_space<vmem>>, vector<1x16xf32>
    %45 = vector.shape_cast %44 : vector<1x16xf32> to vector<1x16xf32>
    %46 = vector.broadcast %45 : vector<1x16xf32> to vector<8x16xf32>
    %c88 = arith.constant 88 : index
    %c0_25 = arith.constant 0 : index
    %47 = vector.load %arg9[%c88, %c0_25] : memref<256x16xf32, #tpu.memory_space<vmem>>, vector<8x16xf32>
    tpu.vector_store %arg9[%c88, %c0_25], %46 {strides = array<i32>} : memref<256x16xf32, #tpu.memory_space<vmem>>, vector<8x16xf32>,
    %c12 = arith.constant 12 : index
    %c0_26 = arith.constant 0 : index
    %48 = vector.load %arg1[%c12, %c0_26] : memref<32x16xf32, #tpu.memory_space<vmem>>, vector<1x16xf32>
    %49 = vector.shape_cast %48 : vector<1x16xf32> to vector<1x16xf32>
    %50 = vector.broadcast %49 : vector<1x16xf32> to vector<8x16xf32>
    %c96 = arith.constant 96 : index
    %c0_27 = arith.constant 0 : index
    %51 = vector.load %arg9[%c96, %c0_27] : memref<256x16xf32, #tpu.memory_space<vmem>>, vector<8x16xf32>
    tpu.vector_store %arg9[%c96, %c0_27], %50 {strides = array<i32>} : memref<256x16xf32, #tpu.memory_space<vmem>>, vector<8x16xf32>,
    %c13 = arith.constant 13 : index
    %c0_28 = arith.constant 0 : index
    %52 = vector.load %arg1[%c13, %c0_28] : memref<32x16xf32, #tpu.memory_space<vmem>>, vector<1x16xf32>
    %53 = vector.shape_cast %52 : vector<1x16xf32> to vector<1x16xf32>
    %54 = vector.broadcast %53 : vector<1x16xf32> to vector<8x16xf32>
    %c104 = arith.constant 104 : index
    %c0_29 = arith.constant 0 : index
    %55 = vector.load %arg9[%c104, %c0_29] : memref<256x16xf32, #tpu.memory_space<vmem>>, vector<8x16xf32>
    tpu.vector_store %arg9[%c104, %c0_29], %54 {strides = array<i32>} : memref<256x16xf32, #tpu.memory_space<vmem>>, vector<8x16xf32>,
    %c14 = arith.constant 14 : index
    %c0_30 = arith.constant 0 : index
    %56 = vector.load %arg1[%c14, %c0_30] : memref<32x16xf32, #tpu.memory_space<vmem>>, vector<1x16xf32>
    %57 = vector.shape_cast %56 : vector<1x16xf32> to vector<1x16xf32>
    %58 = vector.broadcast %57 : vector<1x16xf32> to vector<8x16xf32>
    %c112 = arith.constant 112 : index
    %c0_31 = arith.constant 0 : index
    %59 = vector.load %arg9[%c112, %c0_31] : memref<256x16xf32, #tpu.memory_space<vmem>>, vector<8x16xf32>
    tpu.vector_store %arg9[%c112, %c0_31], %58 {strides = array<i32>} : memref<256x16xf32, #tpu.memory_space<vmem>>, vector<8x16xf32>,
    %c15 = arith.constant 15 : index
    %c0_32 = arith.constant 0 : index
    %60 = vector.load %arg1[%c15, %c0_32] : memref<32x16xf32, #tpu.memory_space<vmem>>, vector<1x16xf32>
    %61 = vector.shape_cast %60 : vector<1x16xf32> to vector<1x16xf32>
    %62 = vector.broadcast %61 : vector<1x16xf32> to vector<8x16xf32>
    %c120 = arith.constant 120 : index
    %c0_33 = arith.constant 0 : index
    %63 = vector.load %arg9[%c120, %c0_33] : memref<256x16xf32, #tpu.memory_space<vmem>>, vector<8x16xf32>
    tpu.vector_store %arg9[%c120, %c0_33], %62 {strides = array<i32>} : memref<256x16xf32, #tpu.memory_space<vmem>>, vector<8x16xf32>,
    %c16_34 = arith.constant 16 : index
    %c0_35 = arith.constant 0 : index
    %64 = vector.load %arg1[%c16_34, %c0_35] : memref<32x16xf32, #tpu.memory_space<vmem>>, vector<1x16xf32>
    %65 = vector.shape_cast %64 : vector<1x16xf32> to vector<1x16xf32>
    %66 = vector.broadcast %65 : vector<1x16xf32> to vector<8x16xf32>
    %c128 = arith.constant 128 : index
    %c0_36 = arith.constant 0 : index
    %67 = vector.load %arg9[%c128, %c0_36] : memref<256x16xf32, #tpu.memory_space<vmem>>, vector<8x16xf32>
    tpu.vector_store %arg9[%c128, %c0_36], %66 {strides = array<i32>} : memref<256x16xf32, #tpu.memory_space<vmem>>, vector<8x16xf32>,
    %c17 = arith.constant 17 : index
    %c0_37 = arith.constant 0 : index
    %68 = vector.load %arg1[%c17, %c0_37] : memref<32x16xf32, #tpu.memory_space<vmem>>, vector<1x16xf32>
    %69 = vector.shape_cast %68 : vector<1x16xf32> to vector<1x16xf32>
    %70 = vector.broadcast %69 : vector<1x16xf32> to vector<8x16xf32>
    %c136 = arith.constant 136 : index
    %c0_38 = arith.constant 0 : index
    %71 = vector.load %arg9[%c136, %c0_38] : memref<256x16xf32, #tpu.memory_space<vmem>>, vector<8x16xf32>
    tpu.vector_store %arg9[%c136, %c0_38], %70 {strides = array<i32>} : memref<256x16xf32, #tpu.memory_space<vmem>>, vector<8x16xf32>,
    %c18 = arith.constant 18 : index
    %c0_39 = arith.constant 0 : index
    %72 = vector.load %arg1[%c18, %c0_39] : memref<32x16xf32, #tpu.memory_space<vmem>>, vector<1x16xf32>
    %73 = vector.shape_cast %72 : vector<1x16xf32> to vector<1x16xf32>
    %74 = vector.broadcast %73 : vector<1x16xf32> to vector<8x16xf32>
    %c144 = arith.constant 144 : index
    %c0_40 = arith.constant 0 : index
    %75 = vector.load %arg9[%c144, %c0_40] : memref<256x16xf32, #tpu.memory_space<vmem>>, vector<8x16xf32>
    tpu.vector_store %arg9[%c144, %c0_40], %74 {strides = array<i32>} : memref<256x16xf32, #tpu.memory_space<vmem>>, vector<8x16xf32>,
    %c19 = arith.constant 19 : index
    %c0_41 = arith.constant 0 : index
    %76 = vector.load %arg1[%c19, %c0_41] : memref<32x16xf32, #tpu.memory_space<vmem>>, vector<1x16xf32>
    %77 = vector.shape_cast %76 : vector<1x16xf32> to vector<1x16xf32>
    %78 = vector.broadcast %77 : vector<1x16xf32> to vector<8x16xf32>
    %c152 = arith.constant 152 : index
    %c0_42 = arith.constant 0 : index
    %79 = vector.load %arg9[%c152, %c0_42] : memref<256x16xf32, #tpu.memory_space<vmem>>, vector<8x16xf32>
    tpu.vector_store %arg9[%c152, %c0_42], %78 {strides = array<i32>} : memref<256x16xf32, #tpu.memory_space<vmem>>, vector<8x16xf32>,
    %c20 = arith.constant 20 : index
    %c0_43 = arith.constant 0 : index
    %80 = vector.load %arg1[%c20, %c0_43] : memref<32x16xf32, #tpu.memory_space<vmem>>, vector<1x16xf32>
    %81 = vector.shape_cast %80 : vector<1x16xf32> to vector<1x16xf32>
    %82 = vector.broadcast %81 : vector<1x16xf32> to vector<8x16xf32>
    %c160 = arith.constant 160 : index
    %c0_44 = arith.constant 0 : index
    %83 = vector.load %arg9[%c160, %c0_44] : memref<256x16xf32, #tpu.memory_space<vmem>>, vector<8x16xf32>
    tpu.vector_store %arg9[%c160, %c0_44], %82 {strides = array<i32>} : memref<256x16xf32, #tpu.memory_space<vmem>>, vector<8x16xf32>,
    %c21 = arith.constant 21 : index
    %c0_45 = arith.constant 0 : index
    %84 = vector.load %arg1[%c21, %c0_45] : memref<32x16xf32, #tpu.memory_space<vmem>>, vector<1x16xf32>
    %85 = vector.shape_cast %84 : vector<1x16xf32> to vector<1x16xf32>
    %86 = vector.broadcast %85 : vector<1x16xf32> to vector<8x16xf32>
    %c168 = arith.constant 168 : index
    %c0_46 = arith.constant 0 : index
    %87 = vector.load %arg9[%c168, %c0_46] : memref<256x16xf32, #tpu.memory_space<vmem>>, vector<8x16xf32>
    tpu.vector_store %arg9[%c168, %c0_46], %86 {strides = array<i32>} : memref<256x16xf32, #tpu.memory_space<vmem>>, vector<8x16xf32>,
    %c22 = arith.constant 22 : index
    %c0_47 = arith.constant 0 : index
    %88 = vector.load %arg1[%c22, %c0_47] : memref<32x16xf32, #tpu.memory_space<vmem>>, vector<1x16xf32>
    %89 = vector.shape_cast %88 : vector<1x16xf32> to vector<1x16xf32>
    %90 = vector.broadcast %89 : vector<1x16xf32> to vector<8x16xf32>
    %c176 = arith.constant 176 : index
    %c0_48 = arith.constant 0 : index
    %91 = vector.load %arg9[%c176, %c0_48] : memref<256x16xf32, #tpu.memory_space<vmem>>, vector<8x16xf32>
    tpu.vector_store %arg9[%c176, %c0_48], %90 {strides = array<i32>} : memref<256x16xf32, #tpu.memory_space<vmem>>, vector<8x16xf32>,
    %c23 = arith.constant 23 : index
    %c0_49 = arith.constant 0 : index
    %92 = vector.load %arg1[%c23, %c0_49] : memref<32x16xf32, #tpu.memory_space<vmem>>, vector<1x16xf32>
    %93 = vector.shape_cast %92 : vector<1x16xf32> to vector<1x16xf32>
    %94 = vector.broadcast %93 : vector<1x16xf32> to vector<8x16xf32>
    %c184 = arith.constant 184 : index
    %c0_50 = arith.constant 0 : index
    %95 = vector.load %arg9[%c184, %c0_50] : memref<256x16xf32, #tpu.memory_space<vmem>>, vector<8x16xf32>
    tpu.vector_store %arg9[%c184, %c0_50], %94 {strides = array<i32>} : memref<256x16xf32, #tpu.memory_space<vmem>>, vector<8x16xf32>,
    %c24_51 = arith.constant 24 : index
    %c0_52 = arith.constant 0 : index
    %96 = vector.load %arg1[%c24_51, %c0_52] : memref<32x16xf32, #tpu.memory_space<vmem>>, vector<1x16xf32>
    %97 = vector.shape_cast %96 : vector<1x16xf32> to vector<1x16xf32>
    %98 = vector.broadcast %97 : vector<1x16xf32> to vector<8x16xf32>
    %c192 = arith.constant 192 : index
    %c0_53 = arith.constant 0 : index
    %99 = vector.load %arg9[%c192, %c0_53] : memref<256x16xf32, #tpu.memory_space<vmem>>, vector<8x16xf32>
    tpu.vector_store %arg9[%c192, %c0_53], %98 {strides = array<i32>} : memref<256x16xf32, #tpu.memory_space<vmem>>, vector<8x16xf32>,
    %c25 = arith.constant 25 : index
    %c0_54 = arith.constant 0 : index
    %100 = vector.load %arg1[%c25, %c0_54] : memref<32x16xf32, #tpu.memory_space<vmem>>, vector<1x16xf32>
    %101 = vector.shape_cast %100 : vector<1x16xf32> to vector<1x16xf32>
    %102 = vector.broadcast %101 : vector<1x16xf32> to vector<8x16xf32>
    %c200 = arith.constant 200 : index
    %c0_55 = arith.constant 0 : index
    %103 = vector.load %arg9[%c200, %c0_55] : memref<256x16xf32, #tpu.memory_space<vmem>>, vector<8x16xf32>
    tpu.vector_store %arg9[%c200, %c0_55], %102 {strides = array<i32>} : memref<256x16xf32, #tpu.memory_space<vmem>>, vector<8x16xf32>,
    %c26 = arith.constant 26 : index
    %c0_56 = arith.constant 0 : index
    %104 = vector.load %arg1[%c26, %c0_56] : memref<32x16xf32, #tpu.memory_space<vmem>>, vector<1x16xf32>
    %105 = vector.shape_cast %104 : vector<1x16xf32> to vector<1x16xf32>
    %106 = vector.broadcast %105 : vector<1x16xf32> to vector<8x16xf32>
    %c208 = arith.constant 208 : index
    %c0_57 = arith.constant 0 : index
    %107 = vector.load %arg9[%c208, %c0_57] : memref<256x16xf32, #tpu.memory_space<vmem>>, vector<8x16xf32>
    tpu.vector_store %arg9[%c208, %c0_57], %106 {strides = array<i32>} : memref<256x16xf32, #tpu.memory_space<vmem>>, vector<8x16xf32>,
    %c27 = arith.constant 27 : index
    %c0_58 = arith.constant 0 : index
    %108 = vector.load %arg1[%c27, %c0_58] : memref<32x16xf32, #tpu.memory_space<vmem>>, vector<1x16xf32>
    %109 = vector.shape_cast %108 : vector<1x16xf32> to vector<1x16xf32>
    %110 = vector.broadcast %109 : vector<1x16xf32> to vector<8x16xf32>
    %c216 = arith.constant 216 : index
    %c0_59 = arith.constant 0 : index
    %111 = vector.load %arg9[%c216, %c0_59] : memref<256x16xf32, #tpu.memory_space<vmem>>, vector<8x16xf32>
    tpu.vector_store %arg9[%c216, %c0_59], %110 {strides = array<i32>} : memref<256x16xf32, #tpu.memory_space<vmem>>, vector<8x16xf32>,
    %c28 = arith.constant 28 : index
    %c0_60 = arith.constant 0 : index
    %112 = vector.load %arg1[%c28, %c0_60] : memref<32x16xf32, #tpu.memory_space<vmem>>, vector<1x16xf32>
    %113 = vector.shape_cast %112 : vector<1x16xf32> to vector<1x16xf32>
    %114 = vector.broadcast %113 : vector<1x16xf32> to vector<8x16xf32>
    %c224 = arith.constant 224 : index
    %c0_61 = arith.constant 0 : index
    %115 = vector.load %arg9[%c224, %c0_61] : memref<256x16xf32, #tpu.memory_space<vmem>>, vector<8x16xf32>
    tpu.vector_store %arg9[%c224, %c0_61], %114 {strides = array<i32>} : memref<256x16xf32, #tpu.memory_space<vmem>>, vector<8x16xf32>,
    %c29 = arith.constant 29 : index
    %c0_62 = arith.constant 0 : index
    %116 = vector.load %arg1[%c29, %c0_62] : memref<32x16xf32, #tpu.memory_space<vmem>>, vector<1x16xf32>
    %117 = vector.shape_cast %116 : vector<1x16xf32> to vector<1x16xf32>
    %118 = vector.broadcast %117 : vector<1x16xf32> to vector<8x16xf32>
    %c232 = arith.constant 232 : index
    %c0_63 = arith.constant 0 : index
    %119 = vector.load %arg9[%c232, %c0_63] : memref<256x16xf32, #tpu.memory_space<vmem>>, vector<8x16xf32>
    tpu.vector_store %arg9[%c232, %c0_63], %118 {strides = array<i32>} : memref<256x16xf32, #tpu.memory_space<vmem>>, vector<8x16xf32>,
    %c30 = arith.constant 30 : index
    %c0_64 = arith.constant 0 : index
    %120 = vector.load %arg1[%c30, %c0_64] : memref<32x16xf32, #tpu.memory_space<vmem>>, vector<1x16xf32>
    %121 = vector.shape_cast %120 : vector<1x16xf32> to vector<1x16xf32>
    %122 = vector.broadcast %121 : vector<1x16xf32> to vector<8x16xf32>
    %c240 = arith.constant 240 : index
    %c0_65 = arith.constant 0 : index
    %123 = vector.load %arg9[%c240, %c0_65] : memref<256x16xf32, #tpu.memory_space<vmem>>, vector<8x16xf32>
    tpu.vector_store %arg9[%c240, %c0_65], %122 {strides = array<i32>} : memref<256x16xf32, #tpu.memory_space<vmem>>, vector<8x16xf32>,
    %c31 = arith.constant 31 : index
    %c0_66 = arith.constant 0 : index
    %124 = vector.load %arg1[%c31, %c0_66] : memref<32x16xf32, #tpu.memory_space<vmem>>, vector<1x16xf32>
    %125 = vector.shape_cast %124 : vector<1x16xf32> to vector<1x16xf32>
    %126 = vector.broadcast %125 : vector<1x16xf32> to vector<8x16xf32>
    %c248 = arith.constant 248 : index
    %c0_67 = arith.constant 0 : index
    %127 = vector.load %arg9[%c248, %c0_67] : memref<256x16xf32, #tpu.memory_space<vmem>>, vector<8x16xf32>
    tpu.vector_store %arg9[%c248, %c0_67], %126 {strides = array<i32>} : memref<256x16xf32, #tpu.memory_space<vmem>>, vector<8x16xf32>,
    %c0_68 = arith.constant 0 : index
    %c0_69 = arith.constant 0 : index
    %128 = vector.load %arg9[%c0_68, %c0_69] : memref<256x16xf32, #tpu.memory_space<vmem>>, vector<256x16xf32>
    %129 = tpu.iota {dimensions = array<i32: 0>} : vector<256x1xi32>
    %c128_i32 = arith.constant 128 : i32
    %c0_i32 = arith.constant 0 : i32
    %130 = arith.cmpi eq, %c128_i32, %c0_i32 : i32
    %c1_i32 = arith.constant 1 : i32
    %131 = arith.select %130, %c1_i32, %c128_i32 : i32
    %132 = vector.broadcast %131 : i32 to vector<256x1xi32>
    %133 = arith.remsi %129, %132 : vector<256x1xi32>
    %c0_i32_70 = arith.constant 0 : i32
    %134 = vector.broadcast %c0_i32_70 : i32 to vector<256x1xi32>
    %135 = arith.cmpi ne, %133, %134 : vector<256x1xi32>
    %c0_i32_71 = arith.constant 0 : i32
    %136 = vector.broadcast %c0_i32_71 : i32 to vector<256x1xi32>
    %137 = arith.cmpi slt, %133, %136 : vector<256x1xi32>
    %c0_i32_72 = arith.constant 0 : i32
    %138 = arith.cmpi slt, %131, %c0_i32_72 : i32
    %139 = vector.broadcast %138 : i1 to vector<256x1xi1>
    %140 = vector.broadcast %139 : vector<256x1xi1> to vector<256x1xi1>
    %141 = arith.xori %137, %140 : vector<256x1xi1>
    %142 = arith.andi %141, %135 : vector<256x1xi1>
    %143 = vector.broadcast %131 : i32 to vector<256x1xi32>
    %144 = arith.addi %133, %143 : vector<256x1xi32>
    %145 = arith.select %142, %144, %133 : vector<256x1xi1>, vector<256x1xi32>
    %c0_73 = arith.constant 0 : index
    %c0_74 = arith.constant 0 : index
    %146 = vector.load %arg4[%c0_73, %c0_74] : memref<48x32xf32, #tpu.memory_space<vmem>>, vector<48x32xf32>
    %c0_75 = arith.constant 0 : index
    %c0_76 = arith.constant 0 : index
    %147 = vector.load %arg5[%c0_75, %c0_76] : memref<1x32xf32, #tpu.memory_space<vmem>>, vector<1x32xf32>
    %c1_i32_77 = arith.constant 1 : i32
    %148 = tpu.dynamic_rotate %128 by %c1_i32_77 dim 0 : vector<256x16xf32>, i32 -> vector<256x16xf32>
    %c1_i32_78 = arith.constant 1 : i32
    %149 = vector.broadcast %c1_i32_78 : i32 to vector<256x1xi32>
    %150 = arith.cmpi sge, %145, %149 : vector<256x1xi32>
    %cst = arith.constant 0.000000e+00 : f32
    %151 = vector.shape_cast %150 : vector<256x1xi1> to vector<256x1xi1>
    %152 = vector.broadcast %151 : vector<256x1xi1> to vector<256x16xi1>
    %153 = vector.broadcast %cst : f32 to vector<256x16xf32>
    %154 = arith.select %152, %148, %153 : vector<256x16xi1>, vector<256x16xf32>
    %c255_i32 = arith.constant 255 : i32
    %155 = tpu.dynamic_rotate %128 by %c255_i32 dim 0 : vector<256x16xf32>, i32 -> vector<256x16xf32>
    %c127_i32 = arith.constant 127 : i32
    %156 = vector.broadcast %c127_i32 : i32 to vector<256x1xi32>
    %157 = arith.cmpi slt, %145, %156 : vector<256x1xi32>
    %cst_79 = arith.constant 0.000000e+00 : f32
    %158 = vector.shape_cast %157 : vector<256x1xi1> to vector<256x1xi1>
    %159 = vector.broadcast %158 : vector<256x1xi1> to vector<256x16xi1>
    %160 = vector.broadcast %cst_79 : f32 to vector<256x16xf32>
    %161 = arith.select %159, %155, %160 : vector<256x16xi1>, vector<256x16xf32>
    %162 = tpu.concatenate %154, %128, %161 in 1 : vector<256x16xf32>, vector<256x16xf32>, vector<256x16xf32> -> vector<256x48xf32>
    %cst_80 = arith.constant dense<0.000000e+00> : vector<256x32xf32>
    %163 = tpu.matmul %162, %146, %cst_80 {dimension_numbers = #tpu.dot_dimension_numbers<[1], [0], [0], [1], [0, 0, 1, 1], [], []>} : vector<256x48xf32>, vector<48x32xf32>, vector<256x32xf32> -> vector<256x32xf32>
    %164 = vector.broadcast %147 : vector<1x32xf32> to vector<256x32xf32>
    %165 = arith.addf %163, %164 : vector<256x32xf32>
    %c0_81 = arith.constant 0 : index
    %c0_82 = arith.constant 0 : index
    %166 = vector.load %arg6[%c0_81, %c0_82] : memref<96x8xf32, #tpu.memory_space<vmem>>, vector<96x8xf32>
    %c0_83 = arith.constant 0 : index
    %c0_84 = arith.constant 0 : index
    %167 = vector.load %arg7[%c0_83, %c0_84] : memref<1x8xf32, #tpu.memory_space<vmem>>, vector<1x8xf32>
    %cst_85 = arith.constant 0.000000e+00 : f32
    %168 = vector.broadcast %cst_85 : f32 to vector<256x32xf32>
    %169 = arith.maximumf %165, %168 : vector<256x32xf32>
    %c1_i32_86 = arith.constant 1 : i32
    %170 = tpu.dynamic_rotate %169 by %c1_i32_86 dim 0 : vector<256x32xf32>, i32 -> vector<256x32xf32>
    %c1_i32_87 = arith.constant 1 : i32
    %171 = vector.broadcast %c1_i32_87 : i32 to vector<256x1xi32>
    %172 = arith.cmpi sge, %145, %171 : vector<256x1xi32>
    %cst_88 = arith.constant 0.000000e+00 : f32
    %173 = vector.shape_cast %172 : vector<256x1xi1> to vector<256x1xi1>
    %174 = vector.broadcast %173 : vector<256x1xi1> to vector<256x32xi1>
    %175 = vector.broadcast %cst_88 : f32 to vector<256x32xf32>
    %176 = arith.select %174, %170, %175 : vector<256x32xi1>, vector<256x32xf32>
    %c255_i32_89 = arith.constant 255 : i32
    %177 = tpu.dynamic_rotate %169 by %c255_i32_89 dim 0 : vector<256x32xf32>, i32 -> vector<256x32xf32>
    %c127_i32_90 = arith.constant 127 : i32
    %178 = vector.broadcast %c127_i32_90 : i32 to vector<256x1xi32>
    %179 = arith.cmpi slt, %145, %178 : vector<256x1xi32>
    %cst_91 = arith.constant 0.000000e+00 : f32
    %180 = vector.shape_cast %179 : vector<256x1xi1> to vector<256x1xi1>
    %181 = vector.broadcast %180 : vector<256x1xi1> to vector<256x32xi1>
    %182 = vector.broadcast %cst_91 : f32 to vector<256x32xf32>
    %183 = arith.select %181, %177, %182 : vector<256x32xi1>, vector<256x32xf32>
    %184 = tpu.concatenate %176, %169, %183 in 1 : vector<256x32xf32>, vector<256x32xf32>, vector<256x32xf32> -> vector<256x96xf32>
    %cst_92 = arith.constant dense<0.000000e+00> : vector<256x8xf32>
    %185 = tpu.matmul %184, %166, %cst_92 {dimension_numbers = #tpu.dot_dimension_numbers<[1], [0], [0], [1], [0, 0, 1, 1], [], []>} : vector<256x96xf32>, vector<96x8xf32>, vector<256x8xf32> -> vector<256x8xf32>
    %186 = vector.broadcast %167 : vector<1x8xf32> to vector<256x8xf32>
    %187 = arith.addf %185, %186 : vector<256x8xf32>
    %c0_93 = arith.constant 0 : index
    %c0_94 = arith.constant 0 : index
    %188 = vector.load %arg2[%c0_93, %c0_94] : memref<256x1xi32, #tpu.memory_space<vmem>>, vector<256x1xi32>
    %c0_95 = arith.constant 0 : index
    %c0_96 = arith.constant 0 : index
    %189 = vector.load %arg3[%c0_95, %c0_96] : memref<256x1xf32, #tpu.memory_space<vmem>>, vector<256x1xf32>
    %cst_97 = arith.constant 1.000000e+00 : f32
    %190 = vector.broadcast %cst_97 : f32 to vector<256x1xf32>
    %191 = arith.subf %190, %189 : vector<256x1xf32>
    %cst_98 = arith.constant dense<0xFF800000> : vector<256xf32>
    %192 = vector.multi_reduction <maximumf>, %187, %cst_98 [1] : vector<256x8xf32> to vector<256xf32>
    %193 = vector.shape_cast %192 : vector<256xf32> to vector<256x1xf32>
    %194 = vector.broadcast %193 : vector<256x1xf32> to vector<256x8xf32>
    %195 = arith.subf %187, %194 : vector<256x8xf32>
    %196 = math.exp %195 : vector<256x8xf32>
    %cst_99 = arith.constant dense<0.000000e+00> : vector<256xf32>
    %197 = vector.multi_reduction <add>, %196, %cst_99 [1] : vector<256x8xf32> to vector<256xf32>
    %198 = vector.shape_cast %197 : vector<256xf32> to vector<256x1xf32>
    %199 = math.log %198 : vector<256x1xf32>
    %200 = arith.addf %193, %199 : vector<256x1xf32>
    %201 = tpu.iota {dimensions = array<i32: 1>} : vector<256x8xi32>
    %202 = vector.broadcast %188 : vector<256x1xi32> to vector<256x8xi32>
    %203 = arith.cmpi eq, %201, %202 : vector<256x8xi32>
    %204 = arith.extui %203 : vector<256x8xi1> to vector<256x8xi32>
    %205 = arith.sitofp %204 : vector<256x8xi32> to vector<256x8xf32>
    %206 = arith.mulf %187, %205 : vector<256x8xf32>
    %cst_100 = arith.constant dense<0.000000e+00> : vector<256xf32>
    %207 = vector.multi_reduction <add>, %206, %cst_100 [1] : vector<256x8xf32> to vector<256xf32>
    %208 = vector.shape_cast %207 : vector<256xf32> to vector<256x1xf32>
    %209 = arith.subf %200, %208 : vector<256x1xf32>
    %210 = arith.mulf %191, %209 : vector<256x1xf32>
    %211 = vector.shape_cast %210 : vector<256x1xf32> to vector<1x256x1xf32>
    %cst_101 = arith.constant dense<0.000000e+00> : vector<1xf32>
    %212 = vector.multi_reduction <add>, %211, %cst_101 [1, 2] : vector<1x256x1xf32> to vector<1xf32>
    %213 = vector.shape_cast %212 : vector<1xf32> to vector<1x1x1xf32>
    %214 = vector.extract %213[0, 0, 0] : f32 from vector<1x1x1xf32>
    %215 = vector.shape_cast %191 : vector<256x1xf32> to vector<1x256x1xf32>
    %cst_102 = arith.constant dense<0.000000e+00> : vector<1xf32>
    %216 = vector.multi_reduction <add>, %215, %cst_102 [1, 2] : vector<1x256x1xf32> to vector<1xf32>
    %217 = vector.shape_cast %216 : vector<1xf32> to vector<1x1x1xf32>
    %218 = vector.extract %217[0, 0, 0] : f32 from vector<1x1x1xf32>
    %219 = vector.broadcast %193 : vector<256x1xf32> to vector<256x8xf32>
    %220 = arith.cmpf oeq, %187, %219 : vector<256x8xf32>
    %c8_i32 = arith.constant 8 : i32
    %221 = vector.broadcast %c8_i32 : i32 to vector<256x8xi32>
    %222 = arith.select %220, %201, %221 : vector<256x8xi1>, vector<256x8xi32>
    %cst_103 = arith.constant dense<2147483647> : vector<256xi32>
    %223 = vector.multi_reduction <minsi>, %222, %cst_103 [1] : vector<256x8xi32> to vector<256xi32>
    %224 = vector.shape_cast %223 : vector<256xi32> to vector<256x1xi32>
    %225 = arith.cmpi eq, %224, %188 : vector<256x1xi32>
    %226 = arith.extui %225 : vector<256x1xi1> to vector<256x1xi32>
    %227 = arith.sitofp %226 : vector<256x1xi32> to vector<256x1xf32>
    %228 = arith.mulf %191, %227 : vector<256x1xf32>
    %229 = vector.shape_cast %228 : vector<256x1xf32> to vector<1x256x1xf32>
    %cst_104 = arith.constant dense<0.000000e+00> : vector<1xf32>
    %230 = vector.multi_reduction <add>, %229, %cst_104 [1, 2] : vector<1x256x1xf32> to vector<1xf32>
    %231 = vector.shape_cast %230 : vector<1xf32> to vector<1x1x1xf32>
    %232 = vector.extract %231[0, 0, 0] : f32 from vector<1x1x1xf32>
    %233 = tpu.iota {dimensions = array<i32: 1>} : vector<1x8x128xi32>
    %c0_i32_105 = arith.constant 0 : i32
    %234 = vector.broadcast %c0_i32_105 : i32 to vector<1x8x128xi32>
    %235 = arith.cmpi eq, %233, %234 : vector<1x8x128xi32>
    %cst_106 = arith.constant 0.000000e+00 : f32
    %236 = vector.broadcast %214 : f32 to vector<1x8x128xf32>
    %237 = vector.broadcast %cst_106 : f32 to vector<1x8x128xf32>
    %238 = arith.select %235, %236, %237 : vector<1x8x128xi1>, vector<1x8x128xf32>
    %c1_i32_107 = arith.constant 1 : i32
    %239 = vector.broadcast %c1_i32_107 : i32 to vector<1x8x128xi32>
    %240 = arith.cmpi eq, %233, %239 : vector<1x8x128xi32>
    %cst_108 = arith.constant 0.000000e+00 : f32
    %241 = vector.broadcast %218 : f32 to vector<1x8x128xf32>
    %242 = vector.broadcast %cst_108 : f32 to vector<1x8x128xf32>
    %243 = arith.select %240, %241, %242 : vector<1x8x128xi1>, vector<1x8x128xf32>
    %244 = arith.addf %238, %243 : vector<1x8x128xf32>
    %c2_i32 = arith.constant 2 : i32
    %245 = vector.broadcast %c2_i32 : i32 to vector<1x8x128xi32>
    %246 = arith.cmpi eq, %233, %245 : vector<1x8x128xi32>
    %cst_109 = arith.constant 0.000000e+00 : f32
    %247 = vector.broadcast %232 : f32 to vector<1x8x128xf32>
    %248 = vector.broadcast %cst_109 : f32 to vector<1x8x128xf32>
    %249 = arith.select %246, %247, %248 : vector<1x8x128xi1>, vector<1x8x128xf32>
    %250 = arith.addf %244, %249 : vector<1x8x128xf32>
    %c0_110 = arith.constant 0 : index
    %c0_111 = arith.constant 0 : index
    %c0_112 = arith.constant 0 : index
    %251 = vector.load %arg8[%c0_110, %c0_111, %c0_112] : memref<1x8x128xf32, #tpu.memory_space<vmem>>, vector<1x8x128xf32>
    tpu.vector_store %arg8[%c0_110, %c0_111, %c0_112], %250 {strides = array<i32>} : memref<1x8x128xf32, #tpu.memory_space<vmem>>, vector<1x8x128xf32>,
    return
  }
  func.func @transform_0(%arg0: i32) -> (i32, i32) {
    %c0_i32 = arith.constant 0 : i32
    %c0_i32_0 = arith.constant 0 : i32
    return %arg0, %c0_i32 : i32, i32
  }
  func.func @transform_1(%arg0: i32) -> (i32, i32) {
    %c0_i32 = arith.constant 0 : i32
    %c0_i32_0 = arith.constant 0 : i32
    return %arg0, %c0_i32 : i32, i32
  }
  func.func @transform_2(%arg0: i32) -> (i32, i32) {
    %c0_i32 = arith.constant 0 : i32
    %c0_i32_0 = arith.constant 0 : i32
    return %arg0, %c0_i32 : i32, i32
  }
  func.func @transform_3(%arg0: i32) -> (i32, i32) {
    %c0_i32 = arith.constant 0 : i32
    %c0_i32_0 = arith.constant 0 : i32
    %c0_i32_1 = arith.constant 0 : i32
    return %c0_i32, %c0_i32_0 : i32, i32
  }
  func.func @transform_4(%arg0: i32) -> (i32, i32) {
    %c0_i32 = arith.constant 0 : i32
    %c0_i32_0 = arith.constant 0 : i32
    %c0_i32_1 = arith.constant 0 : i32
    return %c0_i32, %c0_i32_0 : i32, i32
  }
  func.func @transform_5(%arg0: i32) -> (i32, i32) {
    %c0_i32 = arith.constant 0 : i32
    %c0_i32_0 = arith.constant 0 : i32
    %c0_i32_1 = arith.constant 0 : i32
    return %c0_i32, %c0_i32_0 : i32, i32
  }
  func.func @transform_6(%arg0: i32) -> (i32, i32) {
    %c0_i32 = arith.constant 0 : i32
    %c0_i32_0 = arith.constant 0 : i32
    %c0_i32_1 = arith.constant 0 : i32
    return %c0_i32, %c0_i32_0 : i32, i32
  }
  func.func @transform_7(%arg0: i32) -> (i32, i32, i32) {
    %c0_i32 = arith.constant 0 : i32
    %c0_i32_0 = arith.constant 0 : i32
    %c0_i32_1 = arith.constant 0 : i32
    return %arg0, %c0_i32, %c0_i32_0 : i32, i32, i32
  }
}

</mosaic_0001>

<llo_original>
// kernel: conv1d_probe_forward.1
$region0: #{conv1d_probe_forward.1}
  #allocation0 [shape = 'u32[]', space=smem, size = 0x4, offset = 0x4, fixed_abs, tag = 'smem constant byte address 0x4 - core index']
  #allocation1 [shape = 'u32[144,128]{1,0:T(1,128)}', space=vmem, size = 0x12000, scoped, tag = 'internal scratch']
  #allocation2 [shape = 'f32[256,16]{1,0:T(8,128)}', space=vmem, size = 0x20000, scoped, tag = 'scratch operand']
  %s0 = inlined_call_operand.vmem [shape: f32[32,16], index: 0, kind: input, shape index: {}]
  %s1 = inlined_call_operand.vmem [shape: s32[256,1], index: 1, kind: input, shape index: {}]
  %s2 = inlined_call_operand.vmem [shape: f32[256,1], index: 2, kind: input, shape index: {}]
  %s3 = inlined_call_operand.vmem [shape: f32[48,32], index: 3, kind: input, shape index: {}]
  %s4 = inlined_call_operand.vmem [shape: f32[1,32], index: 4, kind: input, shape index: {}]
  %s5 = inlined_call_operand.vmem [shape: f32[96,8], index: 5, kind: input, shape index: {}]
  %s6 = inlined_call_operand.vmem [shape: f32[1,8], index: 6, kind: input, shape index: {}]
  %s7 = inlined_call_operand.vmem [shape: f32[1,8,128], index: 7, kind: output, shape index: {}]
  %s8 = sld [smem:[#allocation0]]
  $region38: #{conv1d_probe_forward.1} parent=0
    _
  %s10 = ssub.s32 1, %s8
  %s11 = scalar_select 0, %s10, %s8
  // Predicated region
  $region2: #{conv1d_probe_forward.1} parent=0 // pred_check
    _
  $region3: #{conv1d_probe_forward.1} parent=0 // pred_check_branch
    %13 = sbr.rel (0) target = $region5
  $region4: #{conv1d_probe_forward.1} parent=0 // pred_region
    _
  $region5: #{conv1d_probe_forward.1} parent=0 // pred_fallthru
    _
  // Predicated region
  $region6: #{conv1d_probe_forward.1} parent=0 // pred_check
    _
  $region7: #{conv1d_probe_forward.1} parent=0 // pred_check_branch
    %15 = sbr.rel (0) target = $region9
  $region8: #{conv1d_probe_forward.1} parent=0 // pred_region
    _
  $region9: #{conv1d_probe_forward.1} parent=0 // pred_fallthru
    _
  // Predicated region
  $region10: #{conv1d_probe_forward.1} parent=0 // pred_check
    _
  $region11: #{conv1d_probe_forward.1} parent=0 // pred_check_branch
    %17 = sbr.rel (0) target = $region13
  $region12: #{conv1d_probe_forward.1} parent=0 // pred_region
    _
  $region13: #{conv1d_probe_forward.1} parent=0 // pred_fallthru
    _
  // Predicated region
  $region14: #{conv1d_probe_forward.1} parent=0 // pred_check
    _
  $region15: #{conv1d_probe_forward.1} parent=0 // pred_check_branch
    %19 = sbr.rel (0) target = $region17
  $region16: #{conv1d_probe_forward.1} parent=0 // pred_region
    _
  $region17: #{conv1d_probe_forward.1} parent=0 // pred_fallthru
    _
  // Predicated region
  $region18: #{conv1d_probe_forward.1} parent=0 // pred_check
    _
  $region19: #{conv1d_probe_forward.1} parent=0 // pred_check_branch
    %21 = sbr.rel (0) target = $region21
  $region20: #{conv1d_probe_forward.1} parent=0 // pred_region
    _
  $region21: #{conv1d_probe_forward.1} parent=0 // pred_fallthru
    _
  // Predicated region
  $region22: #{conv1d_probe_forward.1} parent=0 // pred_check
    _
  $region23: #{conv1d_probe_forward.1} parent=0 // pred_check_branch
    %23 = sbr.rel (0) target = $region25
  $region24: #{conv1d_probe_forward.1} parent=0 // pred_region
    _
  $region25: #{conv1d_probe_forward.1} parent=0 // pred_fallthru
    _
  // Predicated region
  $region26: #{conv1d_probe_forward.1} parent=0 // pred_check
    _
  $region27: #{conv1d_probe_forward.1} parent=0 // pred_check_branch
    %25 = sbr.rel (0) target = $region29
  $region28: #{conv1d_probe_forward.1} parent=0 // pred_region
    _
  $region29: #{conv1d_probe_forward.1} parent=0 // pred_fallthru
    _
  %v26 = vld [vmem:[%s0] sm:$0x1]
  %v27 = vlaneseq
  %v28 = vshrl.u32 %v27, 7
  %v29 = vsub.s32 0, %v28
  %v30 = vrot.slane %v26, %v29
  %vm31 = vcmask 130048
  %32 = vst.msk [vmem:[#allocation2] sm:$0xff] %vm31, %v30
  %v33 = vld [vmem:[%s0 + $0x1] sm:$0x1]
  %v34 = vlaneseq
  %v35 = vshrl.u32 %v34, 7
  %v36 = vsub.s32 0, %v35
  %v37 = vrot.slane %v33, %v36
  %38 = vst.msk [vmem:[#allocation2 + $0x8] sm:$0xff] %vm31, %v37
  %v39 = vld [vmem:[%s0 + $0x2] sm:$0x1]
  %v40 = vlaneseq
  %v41 = vshrl.u32 %v40, 7
  %v42 = vsub.s32 0, %v41
  %v43 = vrot.slane %v39, %v42
  %44 = vst.msk [vmem:[#allocation2 + $0x10] sm:$0xff] %vm31, %v43
  %v45 = vld [vmem:[%s0 + $0x3] sm:$0x1]
  %v46 = vlaneseq
  %v47 = vshrl.u32 %v46, 7
  %v48 = vsub.s32 0, %v47
  %v49 = vrot.slane %v45, %v48
  %50 = vst.msk [vmem:[#allocation2 + $0x18] sm:$0xff] %vm31, %v49
  %v51 = vld [vmem:[%s0 + $0x4] sm:$0x1]
  %v52 = vlaneseq
  %v53 = vshrl.u32 %v52, 7
  %v54 = vsub.s32 0, %v53
  %v55 = vrot.slane %v51, %v54
  %56 = vst.msk [vmem:[#allocation2 + $0x20] sm:$0xff] %vm31, %v55
  %v57 = vld [vmem:[%s0 + $0x5] sm:$0x1]
  %v58 = vlaneseq
  %v59 = vshrl.u32 %v58, 7
  %v60 = vsub.s32 0, %v59
  %v61 = vrot.slane %v57, %v60
  %62 = vst.msk [vmem:[#allocation2 + $0x28] sm:$0xff] %vm31, %v61
  %v63 = vld [vmem:[%s0 + $0x6] sm:$0x1]
  %v64 = vlaneseq
  %v65 = vshrl.u32 %v64, 7
  %v66 = vsub.s32 0, %v65
  %v67 = vrot.slane %v63, %v66
  %68 = vst.msk [vmem:[#allocation2 + $0x30] sm:$0xff] %vm31, %v67
  %v69 = vld [vmem:[%s0 + $0x7] sm:$0x1]
  %v70 = vlaneseq
  %v71 = vshrl.u32 %v70, 7
  %v72 = vsub.s32 0, %v71
  %v73 = vrot.slane %v69, %v72
  %74 = vst.msk [vmem:[#allocation2 + $0x38] sm:$0xff] %vm31, %v73
  %v75 = vld [vmem:[%s0 + $0x8] sm:$0x1]
  %v76 = vlaneseq
  %v77 = vshrl.u32 %v76, 7
  %v78 = vsub.s32 0, %v77
  %v79 = vrot.slane %v75, %v78
  %80 = vst.msk [vmem:[#allocation2 + $0x40] sm:$0xff] %vm31, %v79
  %v81 = vld [vmem:[%s0 + $0x9] sm:$0x1]
  %v82 = vlaneseq
  %v83 = vshrl.u32 %v82, 7
  %v84 = vsub.s32 0, %v83
  %v85 = vrot.slane %v81, %v84
  %86 = vst.msk [vmem:[#allocation2 + $0x48] sm:$0xff] %vm31, %v85
  %v87 = vld [vmem:[%s0 + $0xa] sm:$0x1]
  %v88 = vlaneseq
  %v89 = vshrl.u32 %v88, 7
  %v90 = vsub.s32 0, %v89
  %v91 = vrot.slane %v87, %v90
  %92 = vst.msk [vmem:[#allocation2 + $0x50] sm:$0xff] %vm31, %v91
  %v93 = vld [vmem:[%s0 + $0xb] sm:$0x1]
  %v94 = vlaneseq
  %v95 = vshrl.u32 %v94, 7
  %v96 = vsub.s32 0, %v95
  %v97 = vrot.slane %v93, %v96
  %98 = vst.msk [vmem:[#allocation2 + $0x58] sm:$0xff] %vm31, %v97
  %v99 = vld [vmem:[%s0 + $0xc] sm:$0x1]
  %v100 = vlaneseq
  %v101 = vshrl.u32 %v100, 7
  %v102 = vsub.s32 0, %v101
  %v103 = vrot.slane %v99, %v102
  %104 = vst.msk [vmem:[#allocation2 + $0x60] sm:$0xff] %vm31, %v103
  %v105 = vld [vmem:[%s0 + $0xd] sm:$0x1]
  %v106 = vlaneseq
  %v107 = vshrl.u32 %v106, 7
  %v108 = vsub.s32 0, %v107
  %v109 = vrot.slane %v105, %v108
  %110 = vst.msk [vmem:[#allocation2 + $0x68] sm:$0xff] %vm31, %v109
  %v111 = vld [vmem:[%s0 + $0xe] sm:$0x1]
  %v112 = vlaneseq
  %v113 = vshrl.u32 %v112, 7
  %v114 = vsub.s32 0, %v113
  %v115 = vrot.slane %v111, %v114
  %116 = vst.msk [vmem:[#allocation2 + $0x70] sm:$0xff] %vm31, %v115
  %v117 = vld [vmem:[%s0 + $0xf] sm:$0x1]
  %v118 = vlaneseq
  %v119 = vshrl.u32 %v118, 7
  %v120 = vsub.s32 0, %v119
  %v121 = vrot.slane %v117, %v120
  %122 = vst.msk [vmem:[#allocation2 + $0x78] sm:$0xff] %vm31, %v121
  %v123 = vld [vmem:[%s0 + $0x10] sm:$0x1]
  %v124 = vlaneseq
  %v125 = vshrl.u32 %v124, 7
  %v126 = vsub.s32 0, %v125
  %v127 = vrot.slane %v123, %v126
  %128 = vst.msk [vmem:[#allocation2 + $0x80] sm:$0xff] %vm31, %v127
  %v129 = vld [vmem:[%s0 + $0x11] sm:$0x1]
  %v130 = vlaneseq
  %v131 = vshrl.u32 %v130, 7
  %v132 = vsub.s32 0, %v131
  %v133 = vrot.slane %v129, %v132
  %134 = vst.msk [vmem:[#allocation2 + $0x88] sm:$0xff] %vm31, %v133
  %v135 = vld [vmem:[%s0 + $0x12] sm:$0x1]
  %v136 = vlaneseq
  %v137 = vshrl.u32 %v136, 7
  %v138 = vsub.s32 0, %v137
  %v139 = vrot.slane %v135, %v138
  %140 = vst.msk [vmem:[#allocation2 + $0x90] sm:$0xff] %vm31, %v139
  %v141 = vld [vmem:[%s0 + $0x13] sm:$0x1]
  %v142 = vlaneseq
  %v143 = vshrl.u32 %v142, 7
  %v144 = vsub.s32 0, %v143
  %v145 = vrot.slane %v141, %v144
  %146 = vst.msk [vmem:[#allocation2 + $0x98] sm:$0xff] %vm31, %v145
  %v147 = vld [vmem:[%s0 + $0x14] sm:$0x1]
  %v148 = vlaneseq
  %v149 = vshrl.u32 %v148, 7
  %v150 = vsub.s32 0, %v149
  %v151 = vrot.slane %v147, %v150
  %152 = vst.msk [vmem:[#allocation2 + $0xa0] sm:$0xff] %vm31, %v151
  %v153 = vld [vmem:[%s0 + $0x15] sm:$0x1]
  %v154 = vlaneseq
  %v155 = vshrl.u32 %v154, 7
  %v156 = vsub.s32 0, %v155
  %v157 = vrot.slane %v153, %v156
  %158 = vst.msk [vmem:[#allocation2 + $0xa8] sm:$0xff] %vm31, %v157
  %v159 = vld [vmem:[%s0 + $0x16] sm:$0x1]
  %v160 = vlaneseq
  %v161 = vshrl.u32 %v160, 7
  %v162 = vsub.s32 0, %v161
  %v163 = vrot.slane %v159, %v162
  %164 = vst.msk [vmem:[#allocation2 + $0xb0] sm:$0xff] %vm31, %v163
  %v165 = vld [vmem:[%s0 + $0x17] sm:$0x1]
  %v166 = vlaneseq
  %v167 = vshrl.u32 %v166, 7
  %v168 = vsub.s32 0, %v167
  %v169 = vrot.slane %v165, %v168
  %170 = vst.msk [vmem:[#allocation2 + $0xb8] sm:$0xff] %vm31, %v169
  %v171 = vld [vmem:[%s0 + $0x18] sm:$0x1]
  %v172 = vlaneseq
  %v173 = vshrl.u32 %v172, 7
  %v174 = vsub.s32 0, %v173
  %v175 = vrot.slane %v171, %v174
  %176 = vst.msk [vmem:[#allocation2 + $0xc0] sm:$0xff] %vm31, %v175
  %v177 = vld [vmem:[%s0 + $0x19] sm:$0x1]
  %v178 = vlaneseq
  %v179 = vshrl.u32 %v178, 7
  %v180 = vsub.s32 0, %v179
  %v181 = vrot.slane %v177, %v180
  %182 = vst.msk [vmem:[#allocation2 + $0xc8] sm:$0xff] %vm31, %v181
  %v183 = vld [vmem:[%s0 + $0x1a] sm:$0x1]
  %v184 = vlaneseq
  %v185 = vshrl.u32 %v184, 7
  %v186 = vsub.s32 0, %v185
  %v187 = vrot.slane %v183, %v186
  %188 = vst.msk [vmem:[#allocation2 + $0xd0] sm:$0xff] %vm31, %v187
  %v189 = vld [vmem:[%s0 + $0x1b] sm:$0x1]
  %v190 = vlaneseq
  %v191 = vshrl.u32 %v190, 7
  %v192 = vsub.s32 0, %v191
  %v193 = vrot.slane %v189, %v192
  %194 = vst.msk [vmem:[#allocation2 + $0xd8] sm:$0xff] %vm31, %v193
  %v195 = vld [vmem:[%s0 + $0x1c] sm:$0x1]
  %v196 = vlaneseq
  %v197 = vshrl.u32 %v196, 7
  %v198 = vsub.s32 0, %v197
  %v199 = vrot.slane %v195, %v198
  %200 = vst.msk [vmem:[#allocation2 + $0xe0] sm:$0xff] %vm31, %v199
  %v201 = vld [vmem:[%s0 + $0x1d] sm:$0x1]
  %v202 = vlaneseq
  %v203 = vshrl.u32 %v202, 7
  %v204 = vsub.s32 0, %v203
  %v205 = vrot.slane %v201, %v204
  %206 = vst.msk [vmem:[#allocation2 + $0xe8] sm:$0xff] %vm31, %v205
  %v207 = vld [vmem:[%s0 + $0x1e] sm:$0x1]
  %v208 = vlaneseq
  %v209 = vshrl.u32 %v208, 7
  %v210 = vsub.s32 0, %v209
  %v211 = vrot.slane %v207, %v210
  %212 = vst.msk [vmem:[#allocation2 + $0xf0] sm:$0xff] %vm31, %v211
  %v213 = vld [vmem:[%s0 + $0x1f] sm:$0x1]
  %v214 = vlaneseq
  %v215 = vshrl.u32 %v214, 7
  %v216 = vsub.s32 0, %v215
  %v217 = vrot.slane %v213, %v216
  %218 = vst.msk [vmem:[#allocation2 + $0xf8] sm:$0xff] %vm31, %v217
  %v219 = vld [vmem:[#allocation2] sm:$0xff]
  %v220 = vld [vmem:[#allocation2 + $0x8] sm:$0xff]
  %v221 = vld [vmem:[#allocation2 + $0x10] sm:$0xff]
  %v222 = vld [vmem:[#allocation2 + $0x18] sm:$0xff]
  %v223 = vld [vmem:[#allocation2 + $0x20] sm:$0xff]
  %v224 = vld [vmem:[#allocation2 + $0x28] sm:$0xff]
  %v225 = vld [vmem:[#allocation2 + $0x30] sm:$0xff]
  %v226 = vld [vmem:[#allocation2 + $0x38] sm:$0xff]
  %v227 = vld [vmem:[#allocation2 + $0x40] sm:$0xff]
  %v228 = vld [vmem:[#allocation2 + $0x48] sm:$0xff]
  %v229 = vld [vmem:[#allocation2 + $0x50] sm:$0xff]
  %v230 = vld [vmem:[#allocation2 + $0x58] sm:$0xff]
  %v231 = vld [vmem:[#allocation2 + $0x60] sm:$0xff]
  %v232 = vld [vmem:[#allocation2 + $0x68] sm:$0xff]
  %v233 = vld [vmem:[#allocation2 + $0x70] sm:$0xff]
  %v234 = vld [vmem:[#allocation2 + $0x78] sm:$0xff]
  %v235 = vld [vmem:[#allocation2 + $0x80] sm:$0xff]
  %v236 = vld [vmem:[#allocation2 + $0x88] sm:$0xff]
  %v237 = vld [vmem:[#allocation2 + $0x90] sm:$0xff]
  %v238 = vld [vmem:[#allocation2 + $0x98] sm:$0xff]
  %v239 = vld [vmem:[#allocation2 + $0xa0] sm:$0xff]
  %v240 = vld [vmem:[#allocation2 + $0xa8] sm:$0xff]
  %v241 = vld [vmem:[#allocation2 + $0xb0] sm:$0xff]
  %v242 = vld [vmem:[#allocation2 + $0xb8] sm:$0xff]
  %v243 = vld [vmem:[#allocation2 + $0xc0] sm:$0xff]
  %v244 = vld [vmem:[#allocation2 + $0xc8] sm:$0xff]
  %v245 = vld [vmem:[#allocation2 + $0xd0] sm:$0xff]
  %v246 = vld [vmem:[#allocation2 + $0xd8] sm:$0xff]
  %v247 = vld [vmem:[#allocation2 + $0xe0] sm:$0xff]
  %v248 = vld [vmem:[#allocation2 + $0xe8] sm:$0xff]
  %v249 = vld [vmem:[#allocation2 + $0xf0] sm:$0xff]
  %v250 = vld [vmem:[#allocation2 + $0xf8] sm:$0xff]
  %v251 = vlaneseq
  %v252 = vshrl.u32 %v251, 7
  %v253 = vadd.s32 %v252, 8
  %v254 = vadd.s32 %v252, 16
  %v255 = vadd.s32 %v252, 24
  %v256 = vadd.s32 %v252, 32
  %v257 = vadd.s32 %v252, 40
  %v258 = vadd.s32 %v252, 48
  %v259 = vadd.s32 %v252, 56
  %v260 = vadd.s32 %v252, 64
  %v261 = vadd.s32 %v252, 72
  %v262 = vadd.s32 %v252, 80
  %v263 = vadd.s32 %v252, 88
  %v264 = vadd.s32 %v252, 96
  %v265 = vadd.s32 %v252, 104
  %v266 = vadd.s32 %v252, 112
  %v267 = vadd.s32 %v252, 120
  %v268 = vadd.s32 %v252, 128
  %v269 = vadd.s32 %v252, 136
  %v270 = vadd.s32 %v252, 144
  %v271 = vadd.s32 %v252, 152
  %v272 = vadd.s32 %v252, 160
  %v273 = vadd.s32 %v252, 168
  %v274 = vadd.s32 %v252, 176
  %v275 = vadd.s32 %v252, 184
  %v276 = vadd.s32 %v252, 192
  %v277 = vadd.s32 %v252, 200
  %v278 = vadd.s32 %v252, 208
  %v279 = vadd.s32 %v252, 216
  %v280 = vadd.s32 %v252, 224
  %v281 = vadd.s32 %v252, 232
  %v282 = vadd.s32 %v252, 240
  %v283 = vadd.s32 %v252, 248
  %vm284 = vcmp.lt.s32.totalorder %v252, 0
  %v285 = vsub.s32 0, %v252
  %v286 = vsel %vm284, %v285, %v252
  %v287 = vshrl.u32 %v286, 7
  %v288 = vand.u32 %v286, 127
  %v289 = vsub.s32 0, %v288
  %v290 = vsel %vm284, %v289, %v288
  %vm291 = vcmp.lt.s32.totalorder %v253, 0
  %v292 = vsub.s32 0, %v253
  %v293 = vsel %vm291, %v292, %v253
  %v294 = vshrl.u32 %v293, 7
  %v295 = vand.u32 %v293, 127
  %v296 = vsub.s32 0, %v295
  %v297 = vsel %vm291, %v296, %v295
  %vm298 = vcmp.lt.s32.totalorder %v254, 0
  %v299 = vsub.s32 0, %v254
  %v300 = vsel %vm298, %v299, %v254
  %v301 = vshrl.u32 %v300, 7
  %v302 = vand.u32 %v300, 127
  %v303 = vsub.s32 0, %v302
  %v304 = vsel %vm298, %v303, %v302
  %vm305 = vcmp.lt.s32.totalorder %v255, 0
  %v306 = vsub.s32 0, %v255
  %v307 = vsel %vm305, %v306, %v255
  %v308 = vshrl.u32 %v307, 7
  %v309 = vand.u32 %v307, 127
  %v310 = vsub.s32 0, %v309
  %v311 = vsel %vm305, %v310, %v309
  %vm312 = vcmp.lt.s32.totalorder %v256, 0
  %v313 = vsub.s32 0, %v256
  %v314 = vsel %vm312, %v313, %v256
  %v315 = vshrl.u32 %v314, 7
  %v316 = vand.u32 %v314, 127
  %v317 = vsub.s32 0, %v316
  %v318 = vsel %vm312, %v317, %v316
  %vm319 = vcmp.lt.s32.totalorder %v257, 0
  %v320 = vsub.s32 0, %v257
  %v321 = vsel %vm319, %v320, %v257
  %v322 = vshrl.u32 %v321, 7
  %v323 = vand.u32 %v321, 127
  %v324 = vsub.s32 0, %v323
  %v325 = vsel %vm319, %v324, %v323
  %vm326 = vcmp.lt.s32.totalorder %v258, 0
  %v327 = vsub.s32 0, %v258
  %v328 = vsel %vm326, %v327, %v258
  %v329 = vshrl.u32 %v328, 7
  %v330 = vand.u32 %v328, 127
  %v331 = vsub.s32 0, %v330
  %v332 = vsel %vm326, %v331, %v330
  %vm333 = vcmp.lt.s32.totalorder %v259, 0
  %v334 = vsub.s32 0, %v259
  %v335 = vsel %vm333, %v334, %v259
  %v336 = vshrl.u32 %v335, 7
  %v337 = vand.u32 %v335, 127
  %v338 = vsub.s32 0, %v337
  %v339 = vsel %vm333, %v338, %v337
  %vm340 = vcmp.lt.s32.totalorder %v260, 0
  %v341 = vsub.s32 0, %v260
  %v342 = vsel %vm340, %v341, %v260
  %v343 = vshrl.u32 %v342, 7
  %v344 = vand.u32 %v342, 127
  %v345 = vsub.s32 0, %v344
  %v346 = vsel %vm340, %v345, %v344
  %vm347 = vcmp.lt.s32.totalorder %v261, 0
  %v348 = vsub.s32 0, %v261
  %v349 = vsel %vm347, %v348, %v261
  %v350 = vshrl.u32 %v349, 7
  %v351 = vand.u32 %v349, 127
  %v352 = vsub.s32 0, %v351
  %v353 = vsel %vm347, %v352, %v351
  %vm354 = vcmp.lt.s32.totalorder %v262, 0
  %v355 = vsub.s32 0, %v262
  %v356 = vsel %vm354, %v355, %v262
  %v357 = vshrl.u32 %v356, 7
  %v358 = vand.u32 %v356, 127
  %v359 = vsub.s32 0, %v358
  %v360 = vsel %vm354, %v359, %v358
  %vm361 = vcmp.lt.s32.totalorder %v263, 0
  %v362 = vsub.s32 0, %v263
  %v363 = vsel %vm361, %v362, %v263
  %v364 = vshrl.u32 %v363, 7
  %v365 = vand.u32 %v363, 127
  %v366 = vsub.s32 0, %v365
  %v367 = vsel %vm361, %v366, %v365
  %vm368 = vcmp.lt.s32.totalorder %v264, 0
  %v369 = vsub.s32 0, %v264
  %v370 = vsel %vm368, %v369, %v264
  %v371 = vshrl.u32 %v370, 7
  %v372 = vand.u32 %v370, 127
  %v373 = vsub.s32 0, %v372
  %v374 = vsel %vm368, %v373, %v372
  %vm375 = vcmp.lt.s32.totalorder %v265, 0
  %v376 = vsub.s32 0, %v265
  %v377 = vsel %vm375, %v376, %v265
  %v378 = vshrl.u32 %v377, 7
  %v379 = vand.u32 %v377, 127
  %v380 = vsub.s32 0, %v379
  %v381 = vsel %vm375, %v380, %v379
  %vm382 = vcmp.lt.s32.totalorder %v266, 0
  %v383 = vsub.s32 0, %v266
  %v384 = vsel %vm382, %v383, %v266
  %v385 = vshrl.u32 %v384, 7
  %v386 = vand.u32 %v384, 127
  %v387 = vsub.s32 0, %v386
  %v388 = vsel %vm382, %v387, %v386
  %vm389 = vcmp.lt.s32.totalorder %v267, 0
  %v390 = vsub.s32 0, %v267
  %v391 = vsel %vm389, %v390, %v267
  %v392 = vshrl.u32 %v391, 7
  %v393 = vand.u32 %v391, 127
  %v394 = vsub.s32 0, %v393
  %v395 = vsel %vm389, %v394, %v393
  %vm396 = vcmp.lt.s32.totalorder %v268, 0
  %v397 = vsub.s32 0, %v268
  %v398 = vsel %vm396, %v397, %v268
  %v399 = vshrl.u32 %v398, 7
  %v400 = vand.u32 %v398, 127
  %v401 = vsub.s32 0, %v400
  %v402 = vsel %vm396, %v401, %v400
  %vm403 = vcmp.lt.s32.totalorder %v269, 0
  %v404 = vsub.s32 0, %v269
  %v405 = vsel %vm403, %v404, %v269
  %v406 = vshrl.u32 %v405, 7
  %v407 = vand.u32 %v405, 127
  %v408 = vsub.s32 0, %v407
  %v409 = vsel %vm403, %v408, %v407
  %vm410 = vcmp.lt.s32.totalorder %v270, 0
  %v411 = vsub.s32 0, %v270
  %v412 = vsel %vm410, %v411, %v270
  %v413 = vshrl.u32 %v412, 7
  %v414 = vand.u32 %v412, 127
  %v415 = vsub.s32 0, %v414
  %v416 = vsel %vm410, %v415, %v414
  %vm417 = vcmp.lt.s32.totalorder %v271, 0
  %v418 = vsub.s32 0, %v271
  %v419 = vsel %vm417, %v418, %v271
  %v420 = vshrl.u32 %v419, 7
  %v421 = vand.u32 %v419, 127
  %v422 = vsub.s32 0, %v421
  %v423 = vsel %vm417, %v422, %v421
  %vm424 = vcmp.lt.s32.totalorder %v272, 0
  %v425 = vsub.s32 0, %v272
  %v426 = vsel %vm424, %v425, %v272
  %v427 = vshrl.u32 %v426, 7
  %v428 = vand.u32 %v426, 127
  %v429 = vsub.s32 0, %v428
  %v430 = vsel %vm424, %v429, %v428
  %vm431 = vcmp.lt.s32.totalorder %v273, 0
  %v432 = vsub.s32 0, %v273
  %v433 = vsel %vm431, %v432, %v273
  %v434 = vshrl.u32 %v433, 7
  %v435 = vand.u32 %v433, 127
  %v436 = vsub.s32 0, %v435
  %v437 = vsel %vm431, %v436, %v435
  %vm438 = vcmp.lt.s32.totalorder %v274, 0
  %v439 = vsub.s32 0, %v274
  %v440 = vsel %vm438, %v439, %v274
  %v441 = vshrl.u32 %v440, 7
  %v442 = vand.u32 %v440, 127
  %v443 = vsub.s32 0, %v442
  %v444 = vsel %vm438, %v443, %v442
  %vm445 = vcmp.lt.s32.totalorder %v275, 0
  %v446 = vsub.s32 0, %v275
  %v447 = vsel %vm445, %v446, %v275
  %v448 = vshrl.u32 %v447, 7
  %v449 = vand.u32 %v447, 127
  %v450 = vsub.s32 0, %v449
  %v451 = vsel %vm445, %v450, %v449
  %vm452 = vcmp.lt.s32.totalorder %v276, 0
  %v453 = vsub.s32 0, %v276
  %v454 = vsel %vm452, %v453, %v276
  %v455 = vshrl.u32 %v454, 7
  %v456 = vand.u32 %v454, 127
  %v457 = vsub.s32 0, %v456
  %v458 = vsel %vm452, %v457, %v456
  %vm459 = vcmp.lt.s32.totalorder %v277, 0
  %v460 = vsub.s32 0, %v277
  %v461 = vsel %vm459, %v460, %v277
  %v462 = vshrl.u32 %v461, 7
  %v463 = vand.u32 %v461, 127
  %v464 = vsub.s32 0, %v463
  %v465 = vsel %vm459, %v464, %v463
  %vm466 = vcmp.lt.s32.totalorder %v278, 0
  %v467 = vsub.s32 0, %v278
  %v468 = vsel %vm466, %v467, %v278
  %v469 = vshrl.u32 %v468, 7
  %v470 = vand.u32 %v468, 127
  %v471 = vsub.s32 0, %v470
  %v472 = vsel %vm466, %v471, %v470
  %vm473 = vcmp.lt.s32.totalorder %v279, 0
  %v474 = vsub.s32 0, %v279
  %v475 = vsel %vm473, %v474, %v279
  %v476 = vshrl.u32 %v475, 7
  %v477 = vand.u32 %v475, 127
  %v478 = vsub.s32 0, %v477
  %v479 = vsel %vm473, %v478, %v477
  %vm480 = vcmp.lt.s32.totalorder %v280, 0
  %v481 = vsub.s32 0, %v280
  %v482 = vsel %vm480, %v481, %v280
  %v483 = vshrl.u32 %v482, 7
  %v484 = vand.u32 %v482, 127
  %v485 = vsub.s32 0, %v484
  %v486 = vsel %vm480, %v485, %v484
  %vm487 = vcmp.lt.s32.totalorder %v281, 0
  %v488 = vsub.s32 0, %v281
  %v489 = vsel %vm487, %v488, %v281
  %v490 = vshrl.u32 %v489, 7
  %v491 = vand.u32 %v489, 127
  %v492 = vsub.s32 0, %v491
  %v493 = vsel %vm487, %v492, %v491
  %vm494 = vcmp.lt.s32.totalorder %v282, 0
  %v495 = vsub.s32 0, %v282
  %v496 = vsel %vm494, %v495, %v282
  %v497 = vshrl.u32 %v496, 7
  %v498 = vand.u32 %v496, 127
  %v499 = vsub.s32 0, %v498
  %v500 = vsel %vm494, %v499, %v498
  %vm501 = vcmp.lt.s32.totalorder %v283, 0
  %v502 = vsub.s32 0, %v283
  %v503 = vsel %vm501, %v502, %v283
  %v504 = vshrl.u32 %v503, 7
  %v505 = vand.u32 %v503, 127
  %v506 = vsub.s32 0, %v505
  %v507 = vsel %vm501, %v506, %v505
  %vm508 = vcmp.ne.s32.totalorder %v290, 0
  %vm509 = vcmp.ne.s32.totalorder %v297, 0
  %vm510 = vcmp.ne.s32.totalorder %v304, 0
  %vm511 = vcmp.ne.s32.totalorder %v311, 0
  %vm512 = vcmp.ne.s32.totalorder %v318, 0
  %vm513 = vcmp.ne.s32.totalorder %v325, 0
  %vm514 = vcmp.ne.s32.totalorder %v332, 0
  %vm515 = vcmp.ne.s32.totalorder %v339, 0
  %vm516 = vcmp.ne.s32.totalorder %v346, 0
  %vm517 = vcmp.ne.s32.totalorder %v353, 0
  %vm518 = vcmp.ne.s32.totalorder %v360, 0
  %vm519 = vcmp.ne.s32.totalorder %v367, 0
  %vm520 = vcmp.ne.s32.totalorder %v374, 0
  %vm521 = vcmp.ne.s32.totalorder %v381, 0
  %vm522 = vcmp.ne.s32.totalorder %v388, 0
  %vm523 = vcmp.ne.s32.totalorder %v395, 0
  %vm524 = vcmp.ne.s32.totalorder %v402, 0
  %vm525 = vcmp.ne.s32.totalorder %v409, 0
  %vm526 = vcmp.ne.s32.totalorder %v416, 0
  %vm527 = vcmp.ne.s32.totalorder %v423, 0
  %vm528 = vcmp.ne.s32.totalorder %v430, 0
  %vm529 = vcmp.ne.s32.totalorder %v437, 0
  %vm530 = vcmp.ne.s32.totalorder %v444, 0
  %vm531 = vcmp.ne.s32.totalorder %v451, 0
  %vm532 = vcmp.ne.s32.totalorder %v458, 0
  %vm533 = vcmp.ne.s32.totalorder %v465, 0
  %vm534 = vcmp.ne.s32.totalorder %v472, 0
  %vm535 = vcmp.ne.s32.totalorder %v479, 0
  %vm536 = vcmp.ne.s32.totalorder %v486, 0
  %vm537 = vcmp.ne.s32.totalorder %v493, 0
  %vm538 = vcmp.ne.s32.totalorder %v500, 0
  %vm539 = vcmp.ne.s32.totalorder %v507, 0
  %vm540 = vcmp.lt.s32.totalorder %v290, 0
  %vm541 = vcmp.lt.s32.totalorder %v297, 0
  %vm542 = vcmp.lt.s32.totalorder %v304, 0
  %vm543 = vcmp.lt.s32.totalorder %v311, 0
  %vm544 = vcmp.lt.s32.totalorder %v318, 0
  %vm545 = vcmp.lt.s32.totalorder %v325, 0
  %vm546 = vcmp.lt.s32.totalorder %v332, 0
  %vm547 = vcmp.lt.s32.totalorder %v339, 0
  %vm548 = vcmp.lt.s32.totalorder %v346, 0
  %vm549 = vcmp.lt.s32.totalorder %v353, 0
  %vm550 = vcmp.lt.s32.totalorder %v360, 0
  %vm551 = vcmp.lt.s32.totalorder %v367, 0
  %vm552 = vcmp.lt.s32.totalorder %v374, 0
  %vm553 = vcmp.lt.s32.totalorder %v381, 0
  %vm554 = vcmp.lt.s32.totalorder %v388, 0
  %vm555 = vcmp.lt.s32.totalorder %v395, 0
  %vm556 = vcmp.lt.s32.totalorder %v402, 0
  %vm557 = vcmp.lt.s32.totalorder %v409, 0
  %vm558 = vcmp.lt.s32.totalorder %v416, 0
  %vm559 = vcmp.lt.s32.totalorder %v423, 0
  %vm560 = vcmp.lt.s32.totalorder %v430, 0
  %vm561 = vcmp.lt.s32.totalorder %v437, 0
  %vm562 = vcmp.lt.s32.totalorder %v444, 0
  %vm563 = vcmp.lt.s32.totalorder %v451, 0
  %vm564 = vcmp.lt.s32.totalorder %v458, 0
  %vm565 = vcmp.lt.s32.totalorder %v465, 0
  %vm566 = vcmp.lt.s32.totalorder %v472, 0
  %vm567 = vcmp.lt.s32.totalorder %v479, 0
  %vm568 = vcmp.lt.s32.totalorder %v486, 0
  %vm569 = vcmp.lt.s32.totalorder %v493, 0
  %vm570 = vcmp.lt.s32.totalorder %v500, 0
  %vm571 = vcmp.lt.s32.totalorder %v507, 0
  %vm572 = vmand %vm540, %vm508
  %vm573 = vmand %vm541, %vm509
  %vm574 = vmand %vm542, %vm510
  %vm575 = vmand %vm543, %vm511
  %vm576 = vmand %vm544, %vm512
  %vm577 = vmand %vm545, %vm513
  %vm578 = vmand %vm546, %vm514
  %vm579 = vmand %vm547, %vm515
  %vm580 = vmand %vm548, %vm516
  %vm581 = vmand %vm549, %vm517
  %vm582 = vmand %vm550, %vm518
  %vm583 = vmand %vm551, %vm519
  %vm584 = vmand %vm552, %vm520
  %vm585 = vmand %vm553, %vm521
  %vm586 = vmand %vm554, %vm522
  %vm587 = vmand %vm555, %vm523
  %vm588 = vmand %vm556, %vm524
  %vm589 = vmand %vm557, %vm525
  %vm590 = vmand %vm558, %vm526
  %vm591 = vmand %vm559, %vm527
  %vm592 = vmand %vm560, %vm528
  %vm593 = vmand %vm561, %vm529
  %vm594 = vmand %vm562, %vm530
  %vm595 = vmand %vm563, %vm531
  %vm596 = vmand %vm564, %vm532
  %vm597 = vmand %vm565, %vm533
  %vm598 = vmand %vm566, %vm534
  %vm599 = vmand %vm567, %vm535
  %vm600 = vmand %vm568, %vm536
  %vm601 = vmand %vm569, %vm537
  %vm602 = vmand %vm570, %vm538
  %vm603 = vmand %vm571, %vm539
  %v604 = vadd.s32 %v290, 128
  %v605 = vadd.s32 %v297, 128
  %v606 = vadd.s32 %v304, 128
  %v607 = vadd.s32 %v311, 128
  %v608 = vadd.s32 %v318, 128
  %v609 = vadd.s32 %v325, 128
  %v610 = vadd.s32 %v332, 128
  %v611 = vadd.s32 %v339, 128
  %v612 = vadd.s32 %v346, 128
  %v613 = vadd.s32 %v353, 128
  %v614 = vadd.s32 %v360, 128
  %v615 = vadd.s32 %v367, 128
  %v616 = vadd.s32 %v374, 128
  %v617 = vadd.s32 %v381, 128
  %v618 = vadd.s32 %v388, 128
  %v619 = vadd.s32 %v395, 128
  %v620 = vadd.s32 %v402, 128
  %v621 = vadd.s32 %v409, 128
  %v622 = vadd.s32 %v416, 128
  %v623 = vadd.s32 %v423, 128
  %v624 = vadd.s32 %v430, 128
  %v625 = vadd.s32 %v437, 128
  %v626 = vadd.s32 %v444, 128
  %v627 = vadd.s32 %v451, 128
  %v628 = vadd.s32 %v458, 128
  %v629 = vadd.s32 %v465, 128
  %v630 = vadd.s32 %v472, 128
  %v631 = vadd.s32 %v479, 128
  %v632 = vadd.s32 %v486, 128
  %v633 = vadd.s32 %v493, 128
  %v634 = vadd.s32 %v500, 128
  %v635 = vadd.s32 %v507, 128
  %v636 = vsel %vm572, %v604, %v290
  %v637 = vsel %vm573, %v605, %v297
  %v638 = vsel %vm574, %v606, %v304
  %v639 = vsel %vm575, %v607, %v311
  %v640 = vsel %vm576, %v608, %v318
  %v641 = vsel %vm577, %v609, %v325
  %v642 = vsel %vm578, %v610, %v332
  %v643 = vsel %vm579, %v611, %v339
  %v644 = vsel %vm580, %v612, %v346
  %v645 = vsel %vm581, %v613, %v353
  %v646 = vsel %vm582, %v614, %v360
  %v647 = vsel %vm583, %v615, %v367
  %v648 = vsel %vm584, %v616, %v374
  %v649 = vsel %vm585, %v617, %v381
  %v650 = vsel %vm586, %v618, %v388
  %v651 = vsel %vm587, %v619, %v395
  %v652 = vsel %vm588, %v620, %v402
  %v653 = vsel %vm589, %v621, %v409
  %v654 = vsel %vm590, %v622, %v416
  %v655 = vsel %vm591, %v623, %v423
  %v656 = vsel %vm592, %v624, %v430
  %v657 = vsel %vm593, %v625, %v437
  %v658 = vsel %vm594, %v626, %v444
  %v659 = vsel %vm595, %v627, %v451
  %v660 = vsel %vm596, %v628, %v458
  %v661 = vsel %vm597, %v629, %v465
  %v662 = vsel %vm598, %v630, %v472
  %v663 = vsel %vm599, %v631, %v479
  %v664 = vsel %vm600, %v632, %v486
  %v665 = vsel %vm601, %v633, %v493
  %v666 = vsel %vm602, %v634, %v500
  %v667 = vsel %vm603, %v635, %v507
  %v668 = vld [vmem:[%s3] sm:$0xff]
  %v669 = vld [vmem:[%s3 + $0x8] sm:$0xff]
  %v670 = vld [vmem:[%s3 + $0x10] sm:$0xff]
  %v671 = vld [vmem:[%s3 + $0x18] sm:$0xff]
  %v672 = vld [vmem:[%s3 + $0x20] sm:$0xff]
  %v673 = vld [vmem:[%s3 + $0x28] sm:$0xff]
  %v674 = vld [vmem:[%s4] sm:$0x1]
  %v675 = vrot.slane %v219, 7
  %v676 = vrot.slane %v220, 7
  %v677 = vrot.slane %v221, 7
  %v678 = vrot.slane %v222, 7
  %v679 = vrot.slane %v223, 7
  %v680 = vrot.slane %v224, 7
  %v681 = vrot.slane %v225, 7
  %v682 = vrot.slane %v226, 7
  %v683 = vrot.slane %v227, 7
  %v684 = vrot.slane %v228, 7
  %v685 = vrot.slane %v229, 7
  %v686 = vrot.slane %v230, 7
  %v687 = vrot.slane %v231, 7
  %v688 = vrot.slane %v232, 7
  %v689 = vrot.slane %v233, 7
  %v690 = vrot.slane %v234, 7
  %v691 = vrot.slane %v235, 7
  %v692 = vrot.slane %v236, 7
  %v693 = vrot.slane %v237, 7
  %v694 = vrot.slane %v238, 7
  %v695 = vrot.slane %v239, 7
  %v696 = vrot.slane %v240, 7
  %v697 = vrot.slane %v241, 7
  %v698 = vrot.slane %v242, 7
  %v699 = vrot.slane %v243, 7
  %v700 = vrot.slane %v244, 7
  %v701 = vrot.slane %v245, 7
  %v702 = vrot.slane %v246, 7
  %v703 = vrot.slane %v247, 7
  %v704 = vrot.slane %v248, 7
  %v705 = vrot.slane %v249, 7
  %v706 = vrot.slane %v250, 7
  %vm707 = vcmp.lt.s32.totalorder %v252, 1
  %v708 = vsel %vm707, %v705, %v706
  %v709 = vsel %vm707, %v704, %v705
  %v710 = vsel %vm707, %v703, %v704
  %v711 = vsel %vm707, %v702, %v703
  %v712 = vsel %vm707, %v701, %v702
  %v713 = vsel %vm707, %v700, %v701
  %v714 = vsel %vm707, %v699, %v700
  %v715 = vsel %vm707, %v698, %v699
  %v716 = vsel %vm707, %v697, %v698
  %v717 = vsel %vm707, %v696, %v697
  %v718 = vsel %vm707, %v695, %v696
  %v719 = vsel %vm707, %v694, %v695
  %v720 = vsel %vm707, %v693, %v694
  %v721 = vsel %vm707, %v692, %v693
  %v722 = vsel %vm707, %v691, %v692
  %v723 = vsel %vm707, %v690, %v691
  %v724 = vsel %vm707, %v689, %v690
  %v725 = vsel %vm707, %v688, %v689
  %v726 = vsel %vm707, %v687, %v688
  %v727 = vsel %vm707, %v686, %v687
  %v728 = vsel %vm707, %v685, %v686
  %v729 = vsel %vm707, %v684, %v685
  %v730 = vsel %vm707, %v683, %v684
  %v731 = vsel %vm707, %v682, %v683
  %v732 = vsel %vm707, %v681, %v682
  %v733 = vsel %vm707, %v680, %v681
  %v734 = vsel %vm707, %v679, %v680
  %v735 = vsel %vm707, %v678, %v679
  %v736 = vsel %vm707, %v677, %v678
  %v737 = vsel %vm707, %v676, %v677
  %v738 = vsel %vm707, %v675, %v676
  %v739 = vsel %vm707, %v706, %v675
  %vm740 = vcmp.ge.s32.totalorder %v636, 1
  %vm741 = vcmp.ge.s32.totalorder %v637, 1
  %vm742 = vcmp.ge.s32.totalorder %v638, 1
  %vm743 = vcmp.ge.s32.totalorder %v639, 1
  %vm744 = vcmp.ge.s32.totalorder %v640, 1
  %vm745 = vcmp.ge.s32.totalorder %v641, 1
  %vm746 = vcmp.ge.s32.totalorder %v642, 1
  %vm747 = vcmp.ge.s32.totalorder %v643, 1
  %vm748 = vcmp.ge.s32.totalorder %v644, 1
  %vm749 = vcmp.ge.s32.totalorder %v645, 1
  %vm750 = vcmp.ge.s32.totalorder %v646, 1
  %vm751 = vcmp.ge.s32.totalorder %v647, 1
  %vm752 = vcmp.ge.s32.totalorder %v648, 1
  %vm753 = vcmp.ge.s32.totalorder %v649, 1
  %vm754 = vcmp.ge.s32.totalorder %v650, 1
  %vm755 = vcmp.ge.s32.totalorder %v651, 1
  %vm756 = vcmp.ge.s32.totalorder %v652, 1
  %vm757 = vcmp.ge.s32.totalorder %v653, 1
  %vm758 = vcmp.ge.s32.totalorder %v654, 1
  %vm759 = vcmp.ge.s32.totalorder %v655, 1
  %vm760 = vcmp.ge.s32.totalorder %v656, 1
  %vm761 = vcmp.ge.s32.totalorder %v657, 1
  %vm762 = vcmp.ge.s32.totalorder %v658, 1
  %vm763 = vcmp.ge.s32.totalorder %v659, 1
  %vm764 = vcmp.ge.s32.totalorder %v660, 1
  %vm765 = vcmp.ge.s32.totalorder %v661, 1
  %vm766 = vcmp.ge.s32.totalorder %v662, 1
  %vm767 = vcmp.ge.s32.totalorder %v663, 1
  %vm768 = vcmp.ge.s32.totalorder %v664, 1
  %vm769 = vcmp.ge.s32.totalorder %v665, 1
  %vm770 = vcmp.ge.s32.totalorder %v666, 1
  %vm771 = vcmp.ge.s32.totalorder %v667, 1
  %v772 = vsel %vm740, 1, 0
  %v773 = vsel %vm741, 1, 0
  %v774 = vsel %vm742, 1, 0
  %v775 = vsel %vm743, 1, 0
  %v776 = vsel %vm744, 1, 0
  %v777 = vsel %vm745, 1, 0
  %v778 = vsel %vm746, 1, 0
  %v779 = vsel %vm747, 1, 0
  %v780 = vsel %vm748, 1, 0
  %v781 = vsel %vm749, 1, 0
  %v782 = vsel %vm750, 1, 0
  %v783 = vsel %vm751, 1, 0
  %v784 = vsel %vm752, 1, 0
  %v785 = vsel %vm753, 1, 0
  %v786 = vsel %vm754, 1, 0
  %v787 = vsel %vm755, 1, 0
  %v788 = vsel %vm756, 1, 0
  %v789 = vsel %vm757, 1, 0
  %v790 = vsel %vm758, 1, 0
  %v791 = vsel %vm759, 1, 0
  %v792 = vsel %vm760, 1, 0
  %v793 = vsel %vm761, 1, 0
  %v794 = vsel %vm762, 1, 0
  %v795 = vsel %vm763, 1, 0
  %v796 = vsel %vm764, 1, 0
  %v797 = vsel %vm765, 1, 0
  %v798 = vsel %vm766, 1, 0
  %v799 = vsel %vm767, 1, 0
  %v800 = vsel %vm768, 1, 0
  %v801 = vsel %vm769, 1, 0
  %v802 = vsel %vm770, 1, 0
  %v803 = vsel %vm771, 1, 0
  %vm804 = vcmp.eq.s32.totalorder %v772, 1
  %vm805 = vcmp.eq.s32.totalorder %v773, 1
  %vm806 = vcmp.eq.s32.totalorder %v774, 1
  %vm807 = vcmp.eq.s32.totalorder %v775, 1
  %vm808 = vcmp.eq.s32.totalorder %v776, 1
  %vm809 = vcmp.eq.s32.totalorder %v777, 1
  %vm810 = vcmp.eq.s32.totalorder %v778, 1
  %vm811 = vcmp.eq.s32.totalorder %v779, 1
  %vm812 = vcmp.eq.s32.totalorder %v780, 1
  %vm813 = vcmp.eq.s32.totalorder %v781, 1
  %vm814 = vcmp.eq.s32.totalorder %v782, 1
  %vm815 = vcmp.eq.s32.totalorder %v783, 1
  %vm816 = vcmp.eq.s32.totalorder %v784, 1
  %vm817 = vcmp.eq.s32.totalorder %v785, 1
  %vm818 = vcmp.eq.s32.totalorder %v786, 1
  %vm819 = vcmp.eq.s32.totalorder %v787, 1
  %vm820 = vcmp.eq.s32.totalorder %v788, 1
  %vm821 = vcmp.eq.s32.totalorder %v789, 1
  %vm822 = vcmp.eq.s32.totalorder %v790, 1
  %vm823 = vcmp.eq.s32.totalorder %v791, 1
  %vm824 = vcmp.eq.s32.totalorder %v792, 1
  %vm825 = vcmp.eq.s32.totalorder %v793, 1
  %vm826 = vcmp.eq.s32.totalorder %v794, 1
  %vm827 = vcmp.eq.s32.totalorder %v795, 1
  %vm828 = vcmp.eq.s32.totalorder %v796, 1
  %vm829 = vcmp.eq.s32.totalorder %v797, 1
  %vm830 = vcmp.eq.s32.totalorder %v798, 1
  %vm831 = vcmp.eq.s32.totalorder %v799, 1
  %vm832 = vcmp.eq.s32.totalorder %v800, 1
  %vm833 = vcmp.eq.s32.totalorder %v801, 1
  %vm834 = vcmp.eq.s32.totalorder %v802, 1
  %vm835 = vcmp.eq.s32.totalorder %v803, 1
  %v836 = vsel %vm804, %v739, 0.0
  %v837 = vsel %vm805, %v738, 0.0
  %v838 = vsel %vm806, %v737, 0.0
  %v839 = vsel %vm807, %v736, 0.0
  %v840 = vsel %vm808, %v735, 0.0
  %v841 = vsel %vm809, %v734, 0.0
  %v842 = vsel %vm810, %v733, 0.0
  %v843 = vsel %vm811, %v732, 0.0
  %v844 = vsel %vm812, %v731, 0.0
  %v845 = vsel %vm813, %v730, 0.0
  %v846 = vsel %vm814, %v729, 0.0
  %v847 = vsel %vm815, %v728, 0.0
  %v848 = vsel %vm816, %v727, 0.0
  %v849 = vsel %vm817, %v726, 0.0
  %v850 = vsel %vm818, %v725, 0.0
  %v851 = vsel %vm819, %v724, 0.0
  %v852 = vsel %vm820, %v723, 0.0
  %v853 = vsel %vm821, %v722, 0.0
  %v854 = vsel %vm822, %v721, 0.0
  %v855 = vsel %vm823, %v720, 0.0
  %v856 = vsel %vm824, %v719, 0.0
  %v857 = vsel %vm825, %v718, 0.0
  %v858 = vsel %vm826, %v717, 0.0
  %v859 = vsel %vm827, %v716, 0.0
  %v860 = vsel %vm828, %v715, 0.0
  %v861 = vsel %vm829, %v714, 0.0
  %v862 = vsel %vm830, %v713, 0.0
  %v863 = vsel %vm831, %v712, 0.0
  %v864 = vsel %vm832, %v711, 0.0
  %v865 = vsel %vm833, %v710, 0.0
  %v866 = vsel %vm834, %v709, 0.0
  %v867 = vsel %vm835, %v708, 0.0
  %v868 = vrot.slane %v219, 1
  %v869 = vrot.slane %v220, 1
  %v870 = vrot.slane %v221, 1
  %v871 = vrot.slane %v222, 1
  %v872 = vrot.slane %v223, 1
  %v873 = vrot.slane %v224, 1
  %v874 = vrot.slane %v225, 1
  %v875 = vrot.slane %v226, 1
  %v876 = vrot.slane %v227, 1
  %v877 = vrot.slane %v228, 1
  %v878 = vrot.slane %v229, 1
  %v879 = vrot.slane %v230, 1
  %v880 = vrot.slane %v231, 1
  %v881 = vrot.slane %v232, 1
  %v882 = vrot.slane %v233, 1
  %v883 = vrot.slane %v234, 1
  %v884 = vrot.slane %v235, 1
  %v885 = vrot.slane %v236, 1
  %v886 = vrot.slane %v237, 1
  %v887 = vrot.slane %v238, 1
  %v888 = vrot.slane %v239, 1
  %v889 = vrot.slane %v240, 1
  %v890 = vrot.slane %v241, 1
  %v891 = vrot.slane %v242, 1
  %v892 = vrot.slane %v243, 1
  %v893 = vrot.slane %v244, 1
  %v894 = vrot.slane %v245, 1
  %v895 = vrot.slane %v246, 1
  %v896 = vrot.slane %v247, 1
  %v897 = vrot.slane %v248, 1
  %v898 = vrot.slane %v249, 1
  %v899 = vrot.slane %v250, 1
  %vm900 = vcmp.lt.s32.totalorder %v252, 7
  %v901 = vsel %vm900, %v898, %v899
  %v902 = vsel %vm900, %v897, %v898
  %v903 = vsel %vm900, %v896, %v897
  %v904 = vsel %vm900, %v895, %v896
  %v905 = vsel %vm900, %v894, %v895
  %v906 = vsel %vm900, %v893, %v894
  %v907 = vsel %vm900, %v892, %v893
  %v908 = vsel %vm900, %v891, %v892
  %v909 = vsel %vm900, %v890, %v891
  %v910 = vsel %vm900, %v889, %v890
  %v911 = vsel %vm900, %v888, %v889
  %v912 = vsel %vm900, %v887, %v888
  %v913 = vsel %vm900, %v886, %v887
  %v914 = vsel %vm900, %v885, %v886
  %v915 = vsel %vm900, %v884, %v885
  %v916 = vsel %vm900, %v883, %v884
  %v917 = vsel %vm900, %v882, %v883
  %v918 = vsel %vm900, %v881, %v882
  %v919 = vsel %vm900, %v880, %v881
  %v920 = vsel %vm900, %v879, %v880
  %v921 = vsel %vm900, %v878, %v879
  %v922 = vsel %vm900, %v877, %v878
  %v923 = vsel %vm900, %v876, %v877
  %v924 = vsel %vm900, %v875, %v876
  %v925 = vsel %vm900, %v874, %v875
  %v926 = vsel %vm900, %v873, %v874
  %v927 = vsel %vm900, %v872, %v873
  %v928 = vsel %vm900, %v871, %v872
  %v929 = vsel %vm900, %v870, %v871
  %v930 = vsel %vm900, %v869, %v870
  %v931 = vsel %vm900, %v868, %v869
  %v932 = vsel %vm900, %v899, %v868
  %vm933 = vcmp.lt.s32.totalorder %v636, 127
  %vm934 = vcmp.lt.s32.totalorder %v637, 127
  %vm935 = vcmp.lt.s32.totalorder %v638, 127
  %vm936 = vcmp.lt.s32.totalorder %v639, 127
  %vm937 = vcmp.lt.s32.totalorder %v640, 127
  %vm938 = vcmp.lt.s32.totalorder %v641, 127
  %vm939 = vcmp.lt.s32.totalorder %v642, 127
  %vm940 = vcmp.lt.s32.totalorder %v643, 127
  %vm941 = vcmp.lt.s32.totalorder %v644, 127
  %vm942 = vcmp.lt.s32.totalorder %v645, 127
  %vm943 = vcmp.lt.s32.totalorder %v646, 127
  %vm944 = vcmp.lt.s32.totalorder %v647, 127
  %vm945 = vcmp.lt.s32.totalorder %v648, 127
  %vm946 = vcmp.lt.s32.totalorder %v649, 127
  %vm947 = vcmp.lt.s32.totalorder %v650, 127
  %vm948 = vcmp.lt.s32.totalorder %v651, 127
  %vm949 = vcmp.lt.s32.totalorder %v652, 127
  %vm950 = vcmp.lt.s32.totalorder %v653, 127
  %vm951 = vcmp.lt.s32.totalorder %v654, 127
  %vm952 = vcmp.lt.s32.totalorder %v655, 127
  %vm953 = vcmp.lt.s32.totalorder %v656, 127
  %vm954 = vcmp.lt.s32.totalorder %v657, 127
  %vm955 = vcmp.lt.s32.totalorder %v658, 127
  %vm956 = vcmp.lt.s32.totalorder %v659, 127
  %vm957 = vcmp.lt.s32.totalorder %v660, 127
  %vm958 = vcmp.lt.s32.totalorder %v661, 127
  %vm959 = vcmp.lt.s32.totalorder %v662, 127
  %vm960 = vcmp.lt.s32.totalorder %v663, 127
  %vm961 = vcmp.lt.s32.totalorder %v664, 127
  %vm962 = vcmp.lt.s32.totalorder %v665, 127
  %vm963 = vcmp.lt.s32.totalorder %v666, 127
  %vm964 = vcmp.lt.s32.totalorder %v667, 127
  %v965 = vsel %vm933, 1, 0
  %v966 = vsel %vm934, 1, 0
  %v967 = vsel %vm935, 1, 0
  %v968 = vsel %vm936, 1, 0
  %v969 = vsel %vm937, 1, 0
  %v970 = vsel %vm938, 1, 0
  %v971 = vsel %vm939, 1, 0
  %v972 = vsel %vm940, 1, 0
  %v973 = vsel %vm941, 1, 0
  %v974 = vsel %vm942, 1, 0
  %v975 = vsel %vm943, 1, 0
  %v976 = vsel %vm944, 1, 0
  %v977 = vsel %vm945, 1, 0
  %v978 = vsel %vm946, 1, 0
  %v979 = vsel %vm947, 1, 0
  %v980 = vsel %vm948, 1, 0
  %v981 = vsel %vm949, 1, 0
  %v982 = vsel %vm950, 1, 0
  %v983 = vsel %vm951, 1, 0
  %v984 = vsel %vm952, 1, 0
  %v985 = vsel %vm953, 1, 0
  %v986 = vsel %vm954, 1, 0
  %v987 = vsel %vm955, 1, 0
  %v988 = vsel %vm956, 1, 0
  %v989 = vsel %vm957, 1, 0
  %v990 = vsel %vm958, 1, 0
  %v991 = vsel %vm959, 1, 0
  %v992 = vsel %vm960, 1, 0
  %v993 = vsel %vm961, 1, 0
  %v994 = vsel %vm962, 1, 0
  %v995 = vsel %vm963, 1, 0
  %v996 = vsel %vm964, 1, 0
  %vm997 = vcmp.eq.s32.totalorder %v965, 1
  %vm998 = vcmp.eq.s32.totalorder %v966, 1
  %vm999 = vcmp.eq.s32.totalorder %v967, 1
  %vm1000 = vcmp.eq.s32.totalorder %v968, 1
  %vm1001 = vcmp.eq.s32.totalorder %v969, 1
  %vm1002 = vcmp.eq.s32.totalorder %v970, 1
  %vm1003 = vcmp.eq.s32.totalorder %v971, 1
  %vm1004 = vcmp.eq.s32.totalorder %v972, 1
  %vm1005 = vcmp.eq.s32.totalorder %v973, 1
  %vm1006 = vcmp.eq.s32.totalorder %v974, 1
  %vm1007 = vcmp.eq.s32.totalorder %v975, 1
  %vm1008 = vcmp.eq.s32.totalorder %v976, 1
  %vm1009 = vcmp.eq.s32.totalorder %v977, 1
  %vm1010 = vcmp.eq.s32.totalorder %v978, 1
  %vm1011 = vcmp.eq.s32.totalorder %v979, 1
  %vm1012 = vcmp.eq.s32.totalorder %v980, 1
  %vm1013 = vcmp.eq.s32.totalorder %v981, 1
  %vm1014 = vcmp.eq.s32.totalorder %v982, 1
  %vm1015 = vcmp.eq.s32.totalorder %v983, 1
  %vm1016 = vcmp.eq.s32.totalorder %v984, 1
  %vm1017 = vcmp.eq.s32.totalorder %v985, 1
  %vm1018 = vcmp.eq.s32.totalorder %v986, 1
  %vm1019 = vcmp.eq.s32.totalorder %v987, 1
  %vm1020 = vcmp.eq.s32.totalorder %v988, 1
  %vm1021 = vcmp.eq.s32.totalorder %v989, 1
  %vm1022 = vcmp.eq.s32.totalorder %v990, 1
  %vm1023 = vcmp.eq.s32.totalorder %v991, 1
  %vm1024 = vcmp.eq.s32.totalorder %v992, 1
  %vm1025 = vcmp.eq.s32.totalorder %v993, 1
  %vm1026 = vcmp.eq.s32.totalorder %v994, 1
  %vm1027 = vcmp.eq.s32.totalorder %v995, 1
  %vm1028 = vcmp.eq.s32.totalorder %v996, 1
  %v1029 = vsel %vm997, %v931, 0.0
  %v1030 = vsel %vm998, %v930, 0.0
  %v1031 = vsel %vm999, %v929, 0.0
  %v1032 = vsel %vm1000, %v928, 0.0
  %v1033 = vsel %vm1001, %v927, 0.0
  %v1034 = vsel %vm1002, %v926, 0.0
  %v1035 = vsel %vm1003, %v925, 0.0
  %v1036 = vsel %vm1004, %v924, 0.0
  %v1037 = vsel %vm1005, %v923, 0.0
  %v1038 = vsel %vm1006, %v922, 0.0
  %v1039 = vsel %vm1007, %v921, 0.0
  %v1040 = vsel %vm1008, %v920, 0.0
  %v1041 = vsel %vm1009, %v919, 0.0
  %v1042 = vsel %vm1010, %v918, 0.0
  %v1043 = vsel %vm1011, %v917, 0.0
  %v1044 = vsel %vm1012, %v916, 0.0
  %v1045 = vsel %vm1013, %v915, 0.0
  %v1046 = vsel %vm1014, %v914, 0.0
  %v1047 = vsel %vm1015, %v913, 0.0
  %v1048 = vsel %vm1016, %v912, 0.0
  %v1049 = vsel %vm1017, %v911, 0.0
  %v1050 = vsel %vm1018, %v910, 0.0
  %v1051 = vsel %vm1019, %v909, 0.0
  %v1052 = vsel %vm1020, %v908, 0.0
  %v1053 = vsel %vm1021, %v907, 0.0
  %v1054 = vsel %vm1022, %v906, 0.0
  %v1055 = vsel %vm1023, %v905, 0.0
  %v1056 = vsel %vm1024, %v904, 0.0
  %v1057 = vsel %vm1025, %v903, 0.0
  %v1058 = vsel %vm1026, %v902, 0.0
  %v1059 = vsel %vm1027, %v901, 0.0
  %v1060 = vsel %vm1028, %v932, 0.0
  %1093 = vrot.lane.b32.xlu0 %v219, 16
  %v1094 = vpop.permute.xlu0 %1093
  %1095 = vrot.lane.b32.xlu0 %v220, 16
  %v1096 = vpop.permute.xlu0 %1095
  %1097 = vrot.lane.b32.xlu0 %v221, 16
  %v1098 = vpop.permute.xlu0 %1097
  %1099 = vrot.lane.b32.xlu0 %v222, 16
  %v1100 = vpop.permute.xlu0 %1099
  %1101 = vrot.lane.b32.xlu0 %v223, 16
  %v1102 = vpop.permute.xlu0 %1101
  %1103 = vrot.lane.b32.xlu0 %v224, 16
  %v1104 = vpop.permute.xlu0 %1103
  %1105 = vrot.lane.b32.xlu0 %v225, 16
  %v1106 = vpop.permute.xlu0 %1105
  %1107 = vrot.lane.b32.xlu0 %v226, 16
  %v1108 = vpop.permute.xlu0 %1107
  %1109 = vrot.lane.b32.xlu0 %v227, 16
  %v1110 = vpop.permute.xlu0 %1109
  %1111 = vrot.lane.b32.xlu0 %v228, 16
  %v1112 = vpop.permute.xlu0 %1111
  %1113 = vrot.lane.b32.xlu0 %v229, 16
  %v1114 = vpop.permute.xlu0 %1113
  %1115 = vrot.lane.b32.xlu0 %v230, 16
  %v1116 = vpop.permute.xlu0 %1115
  %1117 = vrot.lane.b32.xlu0 %v231, 16
  %v1118 = vpop.permute.xlu0 %1117
  %1119 = vrot.lane.b32.xlu0 %v232, 16
  %v1120 = vpop.permute.xlu0 %1119
  %1121 = vrot.lane.b32.xlu0 %v233, 16
  %v1122 = vpop.permute.xlu0 %1121
  %1123 = vrot.lane.b32.xlu0 %v234, 16
  %v1124 = vpop.permute.xlu0 %1123
  %1125 = vrot.lane.b32.xlu0 %v235, 16
  %v1126 = vpop.permute.xlu0 %1125
  %1127 = vrot.lane.b32.xlu0 %v236, 16
  %v1128 = vpop.permute.xlu0 %1127
  %1129 = vrot.lane.b32.xlu0 %v237, 16
  %v1130 = vpop.permute.xlu0 %1129
  %1131 = vrot.lane.b32.xlu0 %v238, 16
  %v1132 = vpop.permute.xlu0 %1131
  %1133 = vrot.lane.b32.xlu0 %v239, 16
  %v1134 = vpop.permute.xlu0 %1133
  %1135 = vrot.lane.b32.xlu0 %v240, 16
  %v1136 = vpop.permute.xlu0 %1135
  %1137 = vrot.lane.b32.xlu0 %v241, 16
  %v1138 = vpop.permute.xlu0 %1137
  %1139 = vrot.lane.b32.xlu0 %v242, 16
  %v1140 = vpop.permute.xlu0 %1139
  %1141 = vrot.lane.b32.xlu0 %v243, 16
  %v1142 = vpop.permute.xlu0 %1141
  %1143 = vrot.lane.b32.xlu0 %v244, 16
  %v1144 = vpop.permute.xlu0 %1143
  %1145 = vrot.lane.b32.xlu0 %v245, 16
  %v1146 = vpop.permute.xlu0 %1145
  %1147 = vrot.lane.b32.xlu0 %v246, 16
  %v1148 = vpop.permute.xlu0 %1147
  %1149 = vrot.lane.b32.xlu0 %v247, 16
  %v1150 = vpop.permute.xlu0 %1149
  %1151 = vrot.lane.b32.xlu0 %v248, 16
  %v1152 = vpop.permute.xlu0 %1151
  %1153 = vrot.lane.b32.xlu0 %v249, 16
  %v1154 = vpop.permute.xlu0 %1153
  %1155 = vrot.lane.b32.xlu0 %v250, 16
  %v1156 = vpop.permute.xlu0 %1155
  %1221 = vrot.lane.b32.xlu0 %v1029, 32
  %v1222 = vpop.permute.xlu0 %1221
  %1223 = vrot.lane.b32.xlu0 %v1030, 32
  %v1224 = vpop.permute.xlu0 %1223
  %1225 = vrot.lane.b32.xlu0 %v1031, 32
  %v1226 = vpop.permute.xlu0 %1225
  %1227 = vrot.lane.b32.xlu0 %v1032, 32
  %v1228 = vpop.permute.xlu0 %1227
  %1229 = vrot.lane.b32.xlu0 %v1033, 32
  %v1230 = vpop.permute.xlu0 %1229
  %1231 = vrot.lane.b32.xlu0 %v1034, 32
  %v1232 = vpop.permute.xlu0 %1231
  %1233 = vrot.lane.b32.xlu0 %v1035, 32
  %v1234 = vpop.permute.xlu0 %1233
  %1235 = vrot.lane.b32.xlu0 %v1036, 32
  %v1236 = vpop.permute.xlu0 %1235
  %1237 = vrot.lane.b32.xlu0 %v1037, 32
  %v1238 = vpop.permute.xlu0 %1237
  %1239 = vrot.lane.b32.xlu0 %v1038, 32
  %v1240 = vpop.permute.xlu0 %1239
  %1241 = vrot.lane.b32.xlu0 %v1039, 32
  %v1242 = vpop.permute.xlu0 %1241
  %1243 = vrot.lane.b32.xlu0 %v1040, 32
  %v1244 = vpop.permute.xlu0 %1243
  %1245 = vrot.lane.b32.xlu0 %v1041, 32
  %v1246 = vpop.permute.xlu0 %1245
  %1247 = vrot.lane.b32.xlu0 %v1042, 32
  %v1248 = vpop.permute.xlu0 %1247
  %1249 = vrot.lane.b32.xlu0 %v1043, 32
  %v1250 = vpop.permute.xlu0 %1249
  %1251 = vrot.lane.b32.xlu0 %v1044, 32
  %v1252 = vpop.permute.xlu0 %1251
  %1253 = vrot.lane.b32.xlu0 %v1045, 32
  %v1254 = vpop.permute.xlu0 %1253
  %1255 = vrot.lane.b32.xlu0 %v1046, 32
  %v1256 = vpop.permute.xlu0 %1255
  %1257 = vrot.lane.b32.xlu0 %v1047, 32
  %v1258 = vpop.permute.xlu0 %1257
  %1259 = vrot.lane.b32.xlu0 %v1048, 32
  %v1260 = vpop.permute.xlu0 %1259
  %1261 = vrot.lane.b32.xlu0 %v1049, 32
  %v1262 = vpop.permute.xlu0 %1261
  %1263 = vrot.lane.b32.xlu0 %v1050, 32
  %v1264 = vpop.permute.xlu0 %1263
  %1265 = vrot.lane.b32.xlu0 %v1051, 32
  %v1266 = vpop.permute.xlu0 %1265
  %1267 = vrot.lane.b32.xlu0 %v1052, 32
  %v1268 = vpop.permute.xlu0 %1267
  %1269 = vrot.lane.b32.xlu0 %v1053, 32
  %v1270 = vpop.permute.xlu0 %1269
  %1271 = vrot.lane.b32.xlu0 %v1054, 32
  %v1272 = vpop.permute.xlu0 %1271
  %1273 = vrot.lane.b32.xlu0 %v1055, 32
  %v1274 = vpop.permute.xlu0 %1273
  %1275 = vrot.lane.b32.xlu0 %v1056, 32
  %v1276 = vpop.permute.xlu0 %1275
  %1277 = vrot.lane.b32.xlu0 %v1057, 32
  %v1278 = vpop.permute.xlu0 %1277
  %1279 = vrot.lane.b32.xlu0 %v1058, 32
  %v1280 = vpop.permute.xlu0 %1279
  %1281 = vrot.lane.b32.xlu0 %v1059, 32
  %v1282 = vpop.permute.xlu0 %1281
  %1283 = vrot.lane.b32.xlu0 %v1060, 32
  %v1284 = vpop.permute.xlu0 %1283
  %v1317 = vsel %vm31, %v836, %v1094
  %v1318 = vsel %vm31, %v837, %v1096
  %v1319 = vsel %vm31, %v838, %v1098
  %v1320 = vsel %vm31, %v839, %v1100
  %v1321 = vsel %vm31, %v840, %v1102
  %v1322 = vsel %vm31, %v841, %v1104
  %v1323 = vsel %vm31, %v842, %v1106
  %v1324 = vsel %vm31, %v843, %v1108
  %v1325 = vsel %vm31, %v844, %v1110
  %v1326 = vsel %vm31, %v845, %v1112
  %v1327 = vsel %vm31, %v846, %v1114
  %v1328 = vsel %vm31, %v847, %v1116
  %v1329 = vsel %vm31, %v848, %v1118
  %v1330 = vsel %vm31, %v849, %v1120
  %v1331 = vsel %vm31, %v850, %v1122
  %v1332 = vsel %vm31, %v851, %v1124
  %v1333 = vsel %vm31, %v852, %v1126
  %v1334 = vsel %vm31, %v853, %v1128
  %v1335 = vsel %vm31, %v854, %v1130
  %v1336 = vsel %vm31, %v855, %v1132
  %v1337 = vsel %vm31, %v856, %v1134
  %v1338 = vsel %vm31, %v857, %v1136
  %v1339 = vsel %vm31, %v858, %v1138
  %v1340 = vsel %vm31, %v859, %v1140
  %v1341 = vsel %vm31, %v860, %v1142
  %v1342 = vsel %vm31, %v861, %v1144
  %v1343 = vsel %vm31, %v862, %v1146
  %v1344 = vsel %vm31, %v863, %v1148
  %v1345 = vsel %vm31, %v864, %v1150
  %v1346 = vsel %vm31, %v865, %v1152
  %v1347 = vsel %vm31, %v866, %v1154
  %v1348 = vsel %vm31, %v867, %v1156
  %vm1349 = vcmask 261120
  %v1350 = vsel %vm1349, %v1317, %v1222
  %v1351 = vsel %vm1349, %v1318, %v1224
  %v1352 = vsel %vm1349, %v1319, %v1226
  %v1353 = vsel %vm1349, %v1320, %v1228
  %v1354 = vsel %vm1349, %v1321, %v1230
  %v1355 = vsel %vm1349, %v1322, %v1232
  %v1356 = vsel %vm1349, %v1323, %v1234
  %v1357 = vsel %vm1349, %v1324, %v1236
  %v1358 = vsel %vm1349, %v1325, %v1238
  %v1359 = vsel %vm1349, %v1326, %v1240
  %v1360 = vsel %vm1349, %v1327, %v1242
  %v1361 = vsel %vm1349, %v1328, %v1244
  %v1362 = vsel %vm1349, %v1329, %v1246
  %v1363 = vsel %vm1349, %v1330, %v1248
  %v1364 = vsel %vm1349, %v1331, %v1250
  %v1365 = vsel %vm1349, %v1332, %v1252
  %v1366 = vsel %vm1349, %v1333, %v1254
  %v1367 = vsel %vm1349, %v1334, %v1256
  %v1368 = vsel %vm1349, %v1335, %v1258
  %v1369 = vsel %vm1349, %v1336, %v1260
  %v1370 = vsel %vm1349, %v1337, %v1262
  %v1371 = vsel %vm1349, %v1338, %v1264
  %v1372 = vsel %vm1349, %v1339, %v1266
  %v1373 = vsel %vm1349, %v1340, %v1268
  %v1374 = vsel %vm1349, %v1341, %v1270
  %v1375 = vsel %vm1349, %v1342, %v1272
  %v1376 = vsel %vm1349, %v1343, %v1274
  %v1377 = vsel %vm1349, %v1344, %v1276
  %v1378 = vsel %vm1349, %v1345, %v1278
  %v1379 = vsel %vm1349, %v1346, %v1280
  %v1380 = vsel %vm1349, %v1347, %v1282
  %v1381 = vsel %vm1349, %v1348, %v1284
  %v1383 = vlaneseq
  %v1384 = vshrl.u32 %v1383, 7
  %v1385 = vsub.s32 0, %v1384
  %v1386 = vrot.slane %v674, %v1385
  %vm1388 = vcmask 392192
  %v1390 = vsel %vm1388, %v1350, 0
  %v1393 = vsel %vm1388, %v1351, 0
  %v1396 = vsel %vm1388, %v1352, 0
  %v1399 = vsel %vm1388, %v1353, 0
  %v1402 = vsel %vm1388, %v1354, 0
  %v1405 = vsel %vm1388, %v1355, 0
  %v1408 = vsel %vm1388, %v1356, 0
  %v1411 = vsel %vm1388, %v1357, 0
  %v1414 = vsel %vm1388, %v1358, 0
  %v1417 = vsel %vm1388, %v1359, 0
  %v1420 = vsel %vm1388, %v1360, 0
  %v1423 = vsel %vm1388, %v1361, 0
  %v1426 = vsel %vm1388, %v1362, 0
  %v1429 = vsel %vm1388, %v1363, 0
  %v1432 = vsel %vm1388, %v1364, 0
  %v1435 = vsel %vm1388, %v1365, 0
  %v1438 = vsel %vm1388, %v1366, 0
  %v1441 = vsel %vm1388, %v1367, 0
  %v1444 = vsel %vm1388, %v1368, 0
  %v1447 = vsel %vm1388, %v1369, 0
  %v1450 = vsel %vm1388, %v1370, 0
  %v1453 = vsel %vm1388, %v1371, 0
  %v1456 = vsel %vm1388, %v1372, 0
  %v1459 = vsel %vm1388, %v1373, 0
  %v1462 = vsel %vm1388, %v1374, 0
  %v1465 = vsel %vm1388, %v1375, 0
  %v1468 = vsel %vm1388, %v1376, 0
  %v1471 = vsel %vm1388, %v1377, 0
  %v1474 = vsel %vm1388, %v1378, 0
  %v1477 = vsel %vm1388, %v1379, 0
  %v1480 = vsel %vm1388, %v1380, 0
  %v1483 = vsel %vm1388, %v1381, 0
  %1485 = vmatprep.subr.mxu0 0.0
  %1486 = vmatpush1.msra.mxu0 %v668
  %1487 = vmatprep.subr.mxu0 0.0
  %1488 = vmatpush1.msra.mxu0 %v669
  %1489 = vmatprep.subr.mxu0 0.0
  %1490 = vmatpush1.msra.mxu0 %v670
  %1491 = vmatprep.subr.mxu0 0.0
  %1492 = vmatpush1.msra.mxu0 %v671
  %1493 = vmatprep.subr.mxu0 0.0
  %1494 = vmatpush1.msra.mxu0 %v672
  %1495 = vmatprep.subr.mxu0 0.0
  %1496 = vmatpush1.msra.mxu0 %v673
  %1497 = vmatprep.subr.mxu0 0.0
  %1498 = vmatpush1.msra.mxu0 0.0
  %1499 = vmatprep.subr.mxu0 0.0
  %1500 = vmatpush1.msra.mxu0 0.0
  %1501 = vmatprep.subr.mxu0 0.0
  %1502 = vmatpush1.msra.mxu0 0.0
  %1503 = vmatprep.subr.mxu0 0.0
  %1504 = vmatpush1.msra.mxu0 0.0
  %1505 = vmatprep.subr.mxu0 0.0
  %1506 = vmatpush1.msra.mxu0 0.0
  %1507 = vmatprep.subr.mxu0 0.0
  %1508 = vmatpush1.msra.mxu0 0.0
  %1509 = vmatprep.subr.mxu0 0.0
  %1510 = vmatpush1.msra.mxu0 0.0
  %1511 = vmatprep.subr.mxu0 0.0
  %1512 = vmatpush1.msra.mxu0 0.0
  %1513 = vmatprep.subr.mxu0 0.0
  %1514 = vmatpush1.msra.mxu0 0.0
  %1515 = vmatprep.subr.mxu0 0.0
  %1516 = vmatpush1.msra.mxu0 0.0
  %1517 = vmatprep.subr.mxu0 0.0
  %1518 = vmatpush1.msra.mxu0 0.0
  %1519 = vmatprep.subr.mxu0 0.0
  %1520 = vmatpush1.msra.mxu0 0.0
  %1521 = vmatprep.subr.mxu0 0.0
  %1522 = vmatpush1.msra.mxu0 0.0
  %1523 = vmatprep.subr.mxu0 0.0
  %1524 = vmatpush1.msra.mxu0 0.0
  %1525 = vmatprep.subr.mxu0 0.0
  %1526 = vmatpush1.msra.mxu0 0.0
  %1527 = vmatprep.subr.mxu0 0.0
  %1528 = vmatpush1.msra.mxu0 0.0
  %1529 = vmatprep.subr.mxu0 0.0
  %1530 = vmatpush1.msra.mxu0 0.0
  %1531 = vmatprep.subr.mxu0 0.0
  %1532 = vmatpush1.msra.mxu0 0.0
  %1533 = vmatprep.subr.mxu0 0.0
  %1534 = vmatpush1.msra.mxu0 0.0
  %1535 = vmatprep.subr.mxu0 0.0
  %1536 = vmatpush1.msra.mxu0 0.0
  %1537 = vmatprep.subr.mxu0 0.0
  %1538 = vmatpush1.msra.mxu0 0.0
  %1539 = vmatprep.subr.mxu0 0.0
  %1540 = vmatpush1.msra.mxu0 0.0
  %1541 = vmatprep.subr.mxu0 0.0
  %1542 = vmatpush1.msra.mxu0 0.0
  %1543 = vmatprep.subr.mxu0 0.0
  %1544 = vmatpush1.msra.mxu0 0.0
  %1545 = vmatprep.subr.mxu0 0.0
  %1546 = vmatpush1.msra.mxu0 0.0
  %1547 = vmatprep.subr.mxu0 0.0
  %1548 = vmatpush1.msra.mxu0 0.0
  %1549 = vmatprep.mubr.f32.mxu0 0.0
  %1550 = vmatmul.mubr.f32.gmra.mrb[0].mxu0 %v1390
  %v1551 = vpop.f32.mrb[0].mxu0
  %v1552 = vadd.f32 %v1386, %v1551
  %v1553 = vpop.f32.mrb[0].mxu0
  %1554 = vmatprep.mubr.f32.mxu0 0.0
  %1555 = vmatmul.mubr.f32.gmra.mrb[0].mxu0 %v1393
  %v1556 = vpop.f32.mrb[0].mxu0
  %v1557 = vadd.f32 %v1386, %v1556
  %v1558 = vpop.f32.mrb[0].mxu0
  %1559 = vmatprep.mubr.f32.mxu0 0.0
  %1560 = vmatmul.mubr.f32.gmra.mrb[0].mxu0 %v1396
  %v1561 = vpop.f32.mrb[0].mxu0
  %v1562 = vadd.f32 %v1386, %v1561
  %v1563 = vpop.f32.mrb[0].mxu0
  %1564 = vmatprep.mubr.f32.mxu0 0.0
  %1565 = vmatmul.mubr.f32.gmra.mrb[0].mxu0 %v1399
  %v1566 = vpop.f32.mrb[0].mxu0
  %v1567 = vadd.f32 %v1386, %v1566
  %v1568 = vpop.f32.mrb[0].mxu0
  %1569 = vmatprep.mubr.f32.mxu0 0.0
  %1570 = vmatmul.mubr.f32.gmra.mrb[0].mxu0 %v1402
  %v1571 = vpop.f32.mrb[0].mxu0
  %v1572 = vadd.f32 %v1386, %v1571
  %v1573 = vpop.f32.mrb[0].mxu0
  %1574 = vmatprep.mubr.f32.mxu0 0.0
  %1575 = vmatmul.mubr.f32.gmra.mrb[0].mxu0 %v1405
  %v1576 = vpop.f32.mrb[0].mxu0
  %v1577 = vadd.f32 %v1386, %v1576
  %v1578 = vpop.f32.mrb[0].mxu0
  %1579 = vmatprep.mubr.f32.mxu0 0.0
  %1580 = vmatmul.mubr.f32.gmra.mrb[0].mxu0 %v1408
  %v1581 = vpop.f32.mrb[0].mxu0
  %v1582 = vadd.f32 %v1386, %v1581
  %v1583 = vpop.f32.mrb[0].mxu0
  %1584 = vmatprep.mubr.f32.mxu0 0.0
  %1585 = vmatmul.mubr.f32.gmra.mrb[0].mxu0 %v1411
  %v1586 = vpop.f32.mrb[0].mxu0
  %v1587 = vadd.f32 %v1386, %v1586
  %v1588 = vpop.f32.mrb[0].mxu0
  %1589 = vmatprep.mubr.f32.mxu0 0.0
  %1590 = vmatmul.mubr.f32.gmra.mrb[0].mxu0 %v1414
  %v1591 = vpop.f32.mrb[0].mxu0
  %v1592 = vadd.f32 %v1386, %v1591
  %v1593 = vpop.f32.mrb[0].mxu0
  %1594 = vmatprep.mubr.f32.mxu0 0.0
  %1595 = vmatmul.mubr.f32.gmra.mrb[0].mxu0 %v1417
  %v1596 = vpop.f32.mrb[0].mxu0
  %v1597 = vadd.f32 %v1386, %v1596
  %v1598 = vpop.f32.mrb[0].mxu0
  %1599 = vmatprep.mubr.f32.mxu0 0.0
  %1600 = vmatmul.mubr.f32.gmra.mrb[0].mxu0 %v1420
  %v1601 = vpop.f32.mrb[0].mxu0
  %v1602 = vadd.f32 %v1386, %v1601
  %v1603 = vpop.f32.mrb[0].mxu0
  %1604 = vmatprep.mubr.f32.mxu0 0.0
  %1605 = vmatmul.mubr.f32.gmra.mrb[0].mxu0 %v1423
  %v1606 = vpop.f32.mrb[0].mxu0
  %v1607 = vadd.f32 %v1386, %v1606
  %v1608 = vpop.f32.mrb[0].mxu0
  %1609 = vmatprep.mubr.f32.mxu0 0.0
  %1610 = vmatmul.mubr.f32.gmra.mrb[0].mxu0 %v1426
  %v1611 = vpop.f32.mrb[0].mxu0
  %v1612 = vadd.f32 %v1386, %v1611
  %v1613 = vpop.f32.mrb[0].mxu0
  %1614 = vmatprep.mubr.f32.mxu0 0.0
  %1615 = vmatmul.mubr.f32.gmra.mrb[0].mxu0 %v1429
  %v1616 = vpop.f32.mrb[0].mxu0
  %v1617 = vadd.f32 %v1386, %v1616
  %v1618 = vpop.f32.mrb[0].mxu0
  %1619 = vmatprep.mubr.f32.mxu0 0.0
  %1620 = vmatmul.mubr.f32.gmra.mrb[0].mxu0 %v1432
  %v1621 = vpop.f32.mrb[0].mxu0
  %v1622 = vadd.f32 %v1386, %v1621
  %v1623 = vpop.f32.mrb[0].mxu0
  %1624 = vmatprep.mubr.f32.mxu0 0.0
  %1625 = vmatmul.mubr.f32.gmra.mrb[0].mxu0 %v1435
  %v1626 = vpop.f32.mrb[0].mxu0
  %v1627 = vadd.f32 %v1386, %v1626
  %v1628 = vpop.f32.mrb[0].mxu0
  %1629 = vmatprep.mubr.f32.mxu0 0.0
  %1630 = vmatmul.mubr.f32.gmra.mrb[0].mxu0 %v1438
  %v1631 = vpop.f32.mrb[0].mxu0
  %v1632 = vadd.f32 %v1386, %v1631
  %v1633 = vpop.f32.mrb[0].mxu0
  %1634 = vmatprep.mubr.f32.mxu0 0.0
  %1635 = vmatmul.mubr.f32.gmra.mrb[0].mxu0 %v1441
  %v1636 = vpop.f32.mrb[0].mxu0
  %v1637 = vadd.f32 %v1386, %v1636
  %v1638 = vpop.f32.mrb[0].mxu0
  %1639 = vmatprep.mubr.f32.mxu0 0.0
  %1640 = vmatmul.mubr.f32.gmra.mrb[0].mxu0 %v1444
  %v1641 = vpop.f32.mrb[0].mxu0
  %v1642 = vadd.f32 %v1386, %v1641
  %v1643 = vpop.f32.mrb[0].mxu0
  %1644 = vmatprep.mubr.f32.mxu0 0.0
  %1645 = vmatmul.mubr.f32.gmra.mrb[0].mxu0 %v1447
  %v1646 = vpop.f32.mrb[0].mxu0
  %v1647 = vadd.f32 %v1386, %v1646
  %v1648 = vpop.f32.mrb[0].mxu0
  %1649 = vmatprep.mubr.f32.mxu0 0.0
  %1650 = vmatmul.mubr.f32.gmra.mrb[0].mxu0 %v1450
  %v1651 = vpop.f32.mrb[0].mxu0
  %v1652 = vadd.f32 %v1386, %v1651
  %v1653 = vpop.f32.mrb[0].mxu0
  %1654 = vmatprep.mubr.f32.mxu0 0.0
  %1655 = vmatmul.mubr.f32.gmra.mrb[0].mxu0 %v1453
  %v1656 = vpop.f32.mrb[0].mxu0
  %v1657 = vadd.f32 %v1386, %v1656
  %v1658 = vpop.f32.mrb[0].mxu0
  %1659 = vmatprep.mubr.f32.mxu0 0.0
  %1660 = vmatmul.mubr.f32.gmra.mrb[0].mxu0 %v1456
  %v1661 = vpop.f32.mrb[0].mxu0
  %v1662 = vadd.f32 %v1386, %v1661
  %v1663 = vpop.f32.mrb[0].mxu0
  %1664 = vmatprep.mubr.f32.mxu0 0.0
  %1665 = vmatmul.mubr.f32.gmra.mrb[0].mxu0 %v1459
  %v1666 = vpop.f32.mrb[0].mxu0
  %v1667 = vadd.f32 %v1386, %v1666
  %v1668 = vpop.f32.mrb[0].mxu0
  %1669 = vmatprep.mubr.f32.mxu0 0.0
  %1670 = vmatmul.mubr.f32.gmra.mrb[0].mxu0 %v1462
  %v1671 = vpop.f32.mrb[0].mxu0
  %v1672 = vadd.f32 %v1386, %v1671
  %v1673 = vpop.f32.mrb[0].mxu0
  %1674 = vmatprep.mubr.f32.mxu0 0.0
  %1675 = vmatmul.mubr.f32.gmra.mrb[0].mxu0 %v1465
  %v1676 = vpop.f32.mrb[0].mxu0
  %v1677 = vadd.f32 %v1386, %v1676
  %v1678 = vpop.f32.mrb[0].mxu0
  %1679 = vmatprep.mubr.f32.mxu0 0.0
  %1680 = vmatmul.mubr.f32.gmra.mrb[0].mxu0 %v1468
  %v1681 = vpop.f32.mrb[0].mxu0
  %v1682 = vadd.f32 %v1386, %v1681
  %v1683 = vpop.f32.mrb[0].mxu0
  %1684 = vmatprep.mubr.f32.mxu0 0.0
  %1685 = vmatmul.mubr.f32.gmra.mrb[0].mxu0 %v1471
  %v1686 = vpop.f32.mrb[0].mxu0
  %v1687 = vadd.f32 %v1386, %v1686
  %v1688 = vpop.f32.mrb[0].mxu0
  %1689 = vmatprep.mubr.f32.mxu0 0.0
  %1690 = vmatmul.mubr.f32.gmra.mrb[0].mxu0 %v1474
  %v1691 = vpop.f32.mrb[0].mxu0
  %v1692 = vadd.f32 %v1386, %v1691
  %v1693 = vpop.f32.mrb[0].mxu0
  %1694 = vmatprep.mubr.f32.mxu0 0.0
  %1695 = vmatmul.mubr.f32.gmra.mrb[0].mxu0 %v1477
  %v1696 = vpop.f32.mrb[0].mxu0
  %v1697 = vadd.f32 %v1386, %v1696
  %v1698 = vpop.f32.mrb[0].mxu0
  %1699 = vmatprep.mubr.f32.mxu0 0.0
  %1700 = vmatmul.mubr.f32.gmra.mrb[0].mxu0 %v1480
  %v1701 = vpop.f32.mrb[0].mxu0
  %v1702 = vadd.f32 %v1386, %v1701
  %v1703 = vpop.f32.mrb[0].mxu0
  %1704 = vmatprep.mubr.f32.mxu0 0.0
  %1705 = vmatmul.mubr.f32.gmra.mrb[0].mxu0 %v1483
  %v1706 = vpop.f32.mrb[0].mxu0
  %v1707 = vadd.f32 %v1386, %v1706
  %v1708 = vpop.f32.mrb[0].mxu0
  %1709 = vdwg.mxu0
  %v1710 = vld [vmem:[%s5] sm:$0xff]
  %v1711 = vld [vmem:[%s5 + $0x8] sm:$0xff]
  %v1712 = vld [vmem:[%s5 + $0x10] sm:$0xff]
  %v1713 = vld [vmem:[%s5 + $0x18] sm:$0xff]
  %v1714 = vld [vmem:[%s5 + $0x20] sm:$0xff]
  %v1715 = vld [vmem:[%s5 + $0x28] sm:$0xff]
  %v1716 = vld [vmem:[%s5 + $0x30] sm:$0xff]
  %v1717 = vld [vmem:[%s5 + $0x38] sm:$0xff]
  %v1718 = vld [vmem:[%s5 + $0x40] sm:$0xff]
  %v1719 = vld [vmem:[%s5 + $0x48] sm:$0xff]
  %v1720 = vld [vmem:[%s5 + $0x50] sm:$0xff]
  %v1721 = vld [vmem:[%s5 + $0x58] sm:$0xff]
  %v1722 = vld [vmem:[%s6] sm:$0x1]
  %v1723 = vmax.f32 %v1552, 0.0
  %v1724 = vmax.f32 %v1557, 0.0
  %v1725 = vmax.f32 %v1562, 0.0
  %v1726 = vmax.f32 %v1567, 0.0
  %v1727 = vmax.f32 %v1572, 0.0
  %v1728 = vmax.f32 %v1577, 0.0
  %v1729 = vmax.f32 %v1582, 0.0
  %v1730 = vmax.f32 %v1587, 0.0
  %v1731 = vmax.f32 %v1592, 0.0
  %v1732 = vmax.f32 %v1597, 0.0
  %v1733 = vmax.f32 %v1602, 0.0
  %v1734 = vmax.f32 %v1607, 0.0
  %v1735 = vmax.f32 %v1612, 0.0
  %v1736 = vmax.f32 %v1617, 0.0
  %v1737 = vmax.f32 %v1622, 0.0
  %v1738 = vmax.f32 %v1627, 0.0
  %v1739 = vmax.f32 %v1632, 0.0
  %v1740 = vmax.f32 %v1637, 0.0
  %v1741 = vmax.f32 %v1642, 0.0
  %v1742 = vmax.f32 %v1647, 0.0
  %v1743 = vmax.f32 %v1652, 0.0
  %v1744 = vmax.f32 %v1657, 0.0
  %v1745 = vmax.f32 %v1662, 0.0
  %v1746 = vmax.f32 %v1667, 0.0
  %v1747 = vmax.f32 %v1672, 0.0
  %v1748 = vmax.f32 %v1677, 0.0
  %v1749 = vmax.f32 %v1682, 0.0
  %v1750 = vmax.f32 %v1687, 0.0
  %v1751 = vmax.f32 %v1692, 0.0
  %v1752 = vmax.f32 %v1697, 0.0
  %v1753 = vmax.f32 %v1702, 0.0
  %v1754 = vmax.f32 %v1707, 0.0
  %v1755 = vrot.slane %v1723, 7
  %v1756 = vrot.slane %v1724, 7
  %v1757 = vrot.slane %v1725, 7
  %v1758 = vrot.slane %v1726, 7
  %v1759 = vrot.slane %v1727, 7
  %v1760 = vrot.slane %v1728, 7
  %v1761 = vrot.slane %v1729, 7
  %v1762 = vrot.slane %v1730, 7
  %v1763 = vrot.slane %v1731, 7
  %v1764 = vrot.slane %v1732, 7
  %v1765 = vrot.slane %v1733, 7
  %v1766 = vrot.slane %v1734, 7
  %v1767 = vrot.slane %v1735, 7
  %v1768 = vrot.slane %v1736, 7
  %v1769 = vrot.slane %v1737, 7
  %v1770 = vrot.slane %v1738, 7
  %v1771 = vrot.slane %v1739, 7
  %v1772 = vrot.slane %v1740, 7
  %v1773 = vrot.slane %v1741, 7
  %v1774 = vrot.slane %v1742, 7
  %v1775 = vrot.slane %v1743, 7
  %v1776 = vrot.slane %v1744, 7
  %v1777 = vrot.slane %v1745, 7
  %v1778 = vrot.slane %v1746, 7
  %v1779 = vrot.slane %v1747, 7
  %v1780 = vrot.slane %v1748, 7
  %v1781 = vrot.slane %v1749, 7
  %v1782 = vrot.slane %v1750, 7
  %v1783 = vrot.slane %v1751, 7
  %v1784 = vrot.slane %v1752, 7
  %v1785 = vrot.slane %v1753, 7
  %v1786 = vrot.slane %v1754, 7
  %v1787 = vsel %vm707, %v1785, %v1786
  %v1788 = vsel %vm707, %v1784, %v1785
  %v1789 = vsel %vm707, %v1783, %v1784
  %v1790 = vsel %vm707, %v1782, %v1783
  %v1791 = vsel %vm707, %v1781, %v1782
  %v1792 = vsel %vm707, %v1780, %v1781
  %v1793 = vsel %vm707, %v1779, %v1780
  %v1794 = vsel %vm707, %v1778, %v1779
  %v1795 = vsel %vm707, %v1777, %v1778
  %v1796 = vsel %vm707, %v1776, %v1777
  %v1797 = vsel %vm707, %v1775, %v1776
  %v1798 = vsel %vm707, %v1774, %v1775
  %v1799 = vsel %vm707, %v1773, %v1774
  %v1800 = vsel %vm707, %v1772, %v1773
  %v1801 = vsel %vm707, %v1771, %v1772
  %v1802 = vsel %vm707, %v1770, %v1771
  %v1803 = vsel %vm707, %v1769, %v1770
  %v1804 = vsel %vm707, %v1768, %v1769
  %v1805 = vsel %vm707, %v1767, %v1768
  %v1806 = vsel %vm707, %v1766, %v1767
  %v1807 = vsel %vm707, %v1765, %v1766
  %v1808 = vsel %vm707, %v1764, %v1765
  %v1809 = vsel %vm707, %v1763, %v1764
  %v1810 = vsel %vm707, %v1762, %v1763
  %v1811 = vsel %vm707, %v1761, %v1762
  %v1812 = vsel %vm707, %v1760, %v1761
  %v1813 = vsel %vm707, %v1759, %v1760
  %v1814 = vsel %vm707, %v1758, %v1759
  %v1815 = vsel %vm707, %v1757, %v1758
  %v1816 = vsel %vm707, %v1756, %v1757
  %v1817 = vsel %vm707, %v1755, %v1756
  %v1818 = vsel %vm707, %v1786, %v1755
  %v1819 = vsel %vm804, %v1818, 0.0
  %v1820 = vsel %vm805, %v1817, 0.0
  %v1821 = vsel %vm806, %v1816, 0.0
  %v1822 = vsel %vm807, %v1815, 0.0
  %v1823 = vsel %vm808, %v1814, 0.0
  %v1824 = vsel %vm809, %v1813, 0.0
  %v1825 = vsel %vm810, %v1812, 0.0
  %v1826 = vsel %vm811, %v1811, 0.0
  %v1827 = vsel %vm812, %v1810, 0.0
  %v1828 = vsel %vm813, %v1809, 0.0
  %v1829 = vsel %vm814, %v1808, 0.0
  %v1830 = vsel %vm815, %v1807, 0.0
  %v1831 = vsel %vm816, %v1806, 0.0
  %v1832 = vsel %vm817, %v1805, 0.0
  %v1833 = vsel %vm818, %v1804, 0.0
  %v1834 = vsel %vm819, %v1803, 0.0
  %v1835 = vsel %vm820, %v1802, 0.0
  %v1836 = vsel %vm821, %v1801, 0.0
  %v1837 = vsel %vm822, %v1800, 0.0
  %v1838 = vsel %vm823, %v1799, 0.0
  %v1839 = vsel %vm824, %v1798, 0.0
  %v1840 = vsel %vm825, %v1797, 0.0
  %v1841 = vsel %vm826, %v1796, 0.0
  %v1842 = vsel %vm827, %v1795, 0.0
  %v1843 = vsel %vm828, %v1794, 0.0
  %v1844 = vsel %vm829, %v1793, 0.0
  %v1845 = vsel %vm830, %v1792, 0.0
  %v1846 = vsel %vm831, %v1791, 0.0
  %v1847 = vsel %vm832, %v1790, 0.0
  %v1848 = vsel %vm833, %v1789, 0.0
  %v1849 = vsel %vm834, %v1788, 0.0
  %v1850 = vsel %vm835, %v1787, 0.0
  %v1851 = vrot.slane %v1723, 1
  %v1852 = vrot.slane %v1724, 1
  %v1853 = vrot.slane %v1725, 1
  %v1854 = vrot.slane %v1726, 1
  %v1855 = vrot.slane %v1727, 1
  %v1856 = vrot.slane %v1728, 1
  %v1857 = vrot.slane %v1729, 1
  %v1858 = vrot.slane %v1730, 1
  %v1859 = vrot.slane %v1731, 1
  %v1860 = vrot.slane %v1732, 1
  %v1861 = vrot.slane %v1733, 1
  %v1862 = vrot.slane %v1734, 1
  %v1863 = vrot.slane %v1735, 1
  %v1864 = vrot.slane %v1736, 1
  %v1865 = vrot.slane %v1737, 1
  %v1866 = vrot.slane %v1738, 1
  %v1867 = vrot.slane %v1739, 1
  %v1868 = vrot.slane %v1740, 1
  %v1869 = vrot.slane %v1741, 1
  %v1870 = vrot.slane %v1742, 1
  %v1871 = vrot.slane %v1743, 1
  %v1872 = vrot.slane %v1744, 1
  %v1873 = vrot.slane %v1745, 1
  %v1874 = vrot.slane %v1746, 1
  %v1875 = vrot.slane %v1747, 1
  %v1876 = vrot.slane %v1748, 1
  %v1877 = vrot.slane %v1749, 1
  %v1878 = vrot.slane %v1750, 1
  %v1879 = vrot.slane %v1751, 1
  %v1880 = vrot.slane %v1752, 1
  %v1881 = vrot.slane %v1753, 1
  %v1882 = vrot.slane %v1754, 1
  %v1883 = vsel %vm900, %v1881, %v1882
  %v1884 = vsel %vm900, %v1880, %v1881
  %v1885 = vsel %vm900, %v1879, %v1880
  %v1886 = vsel %vm900, %v1878, %v1879
  %v1887 = vsel %vm900, %v1877, %v1878
  %v1888 = vsel %vm900, %v1876, %v1877
  %v1889 = vsel %vm900, %v1875, %v1876
  %v1890 = vsel %vm900, %v1874, %v1875
  %v1891 = vsel %vm900, %v1873, %v1874
  %v1892 = vsel %vm900, %v1872, %v1873
  %v1893 = vsel %vm900, %v1871, %v1872
  %v1894 = vsel %vm900, %v1870, %v1871
  %v1895 = vsel %vm900, %v1869, %v1870
  %v1896 = vsel %vm900, %v1868, %v1869
  %v1897 = vsel %vm900, %v1867, %v1868
  %v1898 = vsel %vm900, %v1866, %v1867
  %v1899 = vsel %vm900, %v1865, %v1866
  %v1900 = vsel %vm900, %v1864, %v1865
  %v1901 = vsel %vm900, %v1863, %v1864
  %v1902 = vsel %vm900, %v1862, %v1863
  %v1903 = vsel %vm900, %v1861, %v1862
  %v1904 = vsel %vm900, %v1860, %v1861
  %v1905 = vsel %vm900, %v1859, %v1860
  %v1906 = vsel %vm900, %v1858, %v1859
  %v1907 = vsel %vm900, %v1857, %v1858
  %v1908 = vsel %vm900, %v1856, %v1857
  %v1909 = vsel %vm900, %v1855, %v1856
  %v1910 = vsel %vm900, %v1854, %v1855
  %v1911 = vsel %vm900, %v1853, %v1854
  %v1912 = vsel %vm900, %v1852, %v1853
  %v1913 = vsel %vm900, %v1851, %v1852
  %v1914 = vsel %vm900, %v1882, %v1851
  %v1915 = vsel %vm997, %v1913, 0.0
  %v1916 = vsel %vm998, %v1912, 0.0
  %v1917 = vsel %vm999, %v1911, 0.0
  %v1918 = vsel %vm1000, %v1910, 0.0
  %v1919 = vsel %vm1001, %v1909, 0.0
  %v1920 = vsel %vm1002, %v1908, 0.0
  %v1921 = vsel %vm1003, %v1907, 0.0
  %v1922 = vsel %vm1004, %v1906, 0.0
  %v1923 = vsel %vm1005, %v1905, 0.0
  %v1924 = vsel %vm1006, %v1904, 0.0
  %v1925 = vsel %vm1007, %v1903, 0.0
  %v1926 = vsel %vm1008, %v1902, 0.0
  %v1927 = vsel %vm1009, %v1901, 0.0
  %v1928 = vsel %vm1010, %v1900, 0.0
  %v1929 = vsel %vm1011, %v1899, 0.0
  %v1930 = vsel %vm1012, %v1898, 0.0
  %v1931 = vsel %vm1013, %v1897, 0.0
  %v1932 = vsel %vm1014, %v1896, 0.0
  %v1933 = vsel %vm1015, %v1895, 0.0
  %v1934 = vsel %vm1016, %v1894, 0.0
  %v1935 = vsel %vm1017, %v1893, 0.0
  %v1936 = vsel %vm1018, %v1892, 0.0
  %v1937 = vsel %vm1019, %v1891, 0.0
  %v1938 = vsel %vm1020, %v1890, 0.0
  %v1939 = vsel %vm1021, %v1889, 0.0
  %v1940 = vsel %vm1022, %v1888, 0.0
  %v1941 = vsel %vm1023, %v1887, 0.0
  %v1942 = vsel %vm1024, %v1886, 0.0
  %v1943 = vsel %vm1025, %v1885, 0.0
  %v1944 = vsel %vm1026, %v1884, 0.0
  %v1945 = vsel %vm1027, %v1883, 0.0
  %v1946 = vsel %vm1028, %v1914, 0.0
  %1979 = vrot.lane.b32.xlu0 %v1723, 32
  %v1980 = vpop.permute.xlu0 %1979
  %1981 = vrot.lane.b32.xlu0 %v1724, 32
  %v1982 = vpop.permute.xlu0 %1981
  %1983 = vrot.lane.b32.xlu0 %v1725, 32
  %v1984 = vpop.permute.xlu0 %1983
  %1985 = vrot.lane.b32.xlu0 %v1726, 32
  %v1986 = vpop.permute.xlu0 %1985
  %1987 = vrot.lane.b32.xlu0 %v1727, 32
  %v1988 = vpop.permute.xlu0 %1987
  %1989 = vrot.lane.b32.xlu0 %v1728, 32
  %v1990 = vpop.permute.xlu0 %1989
  %1991 = vrot.lane.b32.xlu0 %v1729, 32
  %v1992 = vpop.permute.xlu0 %1991
  %1993 = vrot.lane.b32.xlu0 %v1730, 32
  %v1994 = vpop.permute.xlu0 %1993
  %1995 = vrot.lane.b32.xlu0 %v1731, 32
  %v1996 = vpop.permute.xlu0 %1995
  %1997 = vrot.lane.b32.xlu0 %v1732, 32
  %v1998 = vpop.permute.xlu0 %1997
  %1999 = vrot.lane.b32.xlu0 %v1733, 32
  %v2000 = vpop.permute.xlu0 %1999
  %2001 = vrot.lane.b32.xlu0 %v1734, 32
  %v2002 = vpop.permute.xlu0 %2001
  %2003 = vrot.lane.b32.xlu0 %v1735, 32
  %v2004 = vpop.permute.xlu0 %2003
  %2005 = vrot.lane.b32.xlu0 %v1736, 32
  %v2006 = vpop.permute.xlu0 %2005
  %2007 = vrot.lane.b32.xlu0 %v1737, 32
  %v2008 = vpop.permute.xlu0 %2007
  %2009 = vrot.lane.b32.xlu0 %v1738, 32
  %v2010 = vpop.permute.xlu0 %2009
  %2011 = vrot.lane.b32.xlu0 %v1739, 32
  %v2012 = vpop.permute.xlu0 %2011
  %2013 = vrot.lane.b32.xlu0 %v1740, 32
  %v2014 = vpop.permute.xlu0 %2013
  %2015 = vrot.lane.b32.xlu0 %v1741, 32
  %v2016 = vpop.permute.xlu0 %2015
  %2017 = vrot.lane.b32.xlu0 %v1742, 32
  %v2018 = vpop.permute.xlu0 %2017
  %2019 = vrot.lane.b32.xlu0 %v1743, 32
  %v2020 = vpop.permute.xlu0 %2019
  %2021 = vrot.lane.b32.xlu0 %v1744, 32
  %v2022 = vpop.permute.xlu0 %2021
  %2023 = vrot.lane.b32.xlu0 %v1745, 32
  %v2024 = vpop.permute.xlu0 %2023
  %2025 = vrot.lane.b32.xlu0 %v1746, 32
  %v2026 = vpop.permute.xlu0 %2025
  %2027 = vrot.lane.b32.xlu0 %v1747, 32
  %v2028 = vpop.permute.xlu0 %2027
  %2029 = vrot.lane.b32.xlu0 %v1748, 32
  %v2030 = vpop.permute.xlu0 %2029
  %2031 = vrot.lane.b32.xlu0 %v1749, 32
  %v2032 = vpop.permute.xlu0 %2031
  %2033 = vrot.lane.b32.xlu0 %v1750, 32
  %v2034 = vpop.permute.xlu0 %2033
  %2035 = vrot.lane.b32.xlu0 %v1751, 32
  %v2036 = vpop.permute.xlu0 %2035
  %2037 = vrot.lane.b32.xlu0 %v1752, 32
  %v2038 = vpop.permute.xlu0 %2037
  %2039 = vrot.lane.b32.xlu0 %v1753, 32
  %v2040 = vpop.permute.xlu0 %2039
  %2041 = vrot.lane.b32.xlu0 %v1754, 32
  %v2042 = vpop.permute.xlu0 %2041
  %2107 = vrot.lane.b32.xlu0 %v1915, 64
  %v2108 = vpop.permute.xlu0 %2107
  %2109 = vrot.lane.b32.xlu0 %v1916, 64
  %v2110 = vpop.permute.xlu0 %2109
  %2111 = vrot.lane.b32.xlu0 %v1917, 64
  %v2112 = vpop.permute.xlu0 %2111
  %2113 = vrot.lane.b32.xlu0 %v1918, 64
  %v2114 = vpop.permute.xlu0 %2113
  %2115 = vrot.lane.b32.xlu0 %v1919, 64
  %v2116 = vpop.permute.xlu0 %2115
  %2117 = vrot.lane.b32.xlu0 %v1920, 64
  %v2118 = vpop.permute.xlu0 %2117
  %2119 = vrot.lane.b32.xlu0 %v1921, 64
  %v2120 = vpop.permute.xlu0 %2119
  %2121 = vrot.lane.b32.xlu0 %v1922, 64
  %v2122 = vpop.permute.xlu0 %2121
  %2123 = vrot.lane.b32.xlu0 %v1923, 64
  %v2124 = vpop.permute.xlu0 %2123
  %2125 = vrot.lane.b32.xlu0 %v1924, 64
  %v2126 = vpop.permute.xlu0 %2125
  %2127 = vrot.lane.b32.xlu0 %v1925, 64
  %v2128 = vpop.permute.xlu0 %2127
  %2129 = vrot.lane.b32.xlu0 %v1926, 64
  %v2130 = vpop.permute.xlu0 %2129
  %2131 = vrot.lane.b32.xlu0 %v1927, 64
  %v2132 = vpop.permute.xlu0 %2131
  %2133 = vrot.lane.b32.xlu0 %v1928, 64
  %v2134 = vpop.permute.xlu0 %2133
  %2135 = vrot.lane.b32.xlu0 %v1929, 64
  %v2136 = vpop.permute.xlu0 %2135
  %2137 = vrot.lane.b32.xlu0 %v1930, 64
  %v2138 = vpop.permute.xlu0 %2137
  %2139 = vrot.lane.b32.xlu0 %v1931, 64
  %v2140 = vpop.permute.xlu0 %2139
  %2141 = vrot.lane.b32.xlu0 %v1932, 64
  %v2142 = vpop.permute.xlu0 %2141
  %2143 = vrot.lane.b32.xlu0 %v1933, 64
  %v2144 = vpop.permute.xlu0 %2143
  %2145 = vrot.lane.b32.xlu0 %v1934, 64
  %v2146 = vpop.permute.xlu0 %2145
  %2147 = vrot.lane.b32.xlu0 %v1935, 64
  %v2148 = vpop.permute.xlu0 %2147
  %2149 = vrot.lane.b32.xlu0 %v1936, 64
  %v2150 = vpop.permute.xlu0 %2149
  %2151 = vrot.lane.b32.xlu0 %v1937, 64
  %v2152 = vpop.permute.xlu0 %2151
  %2153 = vrot.lane.b32.xlu0 %v1938, 64
  %v2154 = vpop.permute.xlu0 %2153
  %2155 = vrot.lane.b32.xlu0 %v1939, 64
  %v2156 = vpop.permute.xlu0 %2155
  %2157 = vrot.lane.b32.xlu0 %v1940, 64
  %v2158 = vpop.permute.xlu0 %2157
  %2159 = vrot.lane.b32.xlu0 %v1941, 64
  %v2160 = vpop.permute.xlu0 %2159
  %2161 = vrot.lane.b32.xlu0 %v1942, 64
  %v2162 = vpop.permute.xlu0 %2161
  %2163 = vrot.lane.b32.xlu0 %v1943, 64
  %v2164 = vpop.permute.xlu0 %2163
  %2165 = vrot.lane.b32.xlu0 %v1944, 64
  %v2166 = vpop.permute.xlu0 %2165
  %2167 = vrot.lane.b32.xlu0 %v1945, 64
  %v2168 = vpop.permute.xlu0 %2167
  %2169 = vrot.lane.b32.xlu0 %v1946, 64
  %v2170 = vpop.permute.xlu0 %2169
  %v2203 = vsel %vm1349, %v1819, %v1980
  %v2204 = vsel %vm1349, %v1820, %v1982
  %v2205 = vsel %vm1349, %v1821, %v1984
  %v2206 = vsel %vm1349, %v1822, %v1986
  %v2207 = vsel %vm1349, %v1823, %v1988
  %v2208 = vsel %vm1349, %v1824, %v1990
  %v2209 = vsel %vm1349, %v1825, %v1992
  %v2210 = vsel %vm1349, %v1826, %v1994
  %v2211 = vsel %vm1349, %v1827, %v1996
  %v2212 = vsel %vm1349, %v1828, %v1998
  %v2213 = vsel %vm1349, %v1829, %v2000
  %v2214 = vsel %vm1349, %v1830, %v2002
  %v2215 = vsel %vm1349, %v1831, %v2004
  %v2216 = vsel %vm1349, %v1832, %v2006
  %v2217 = vsel %vm1349, %v1833, %v2008
  %v2218 = vsel %vm1349, %v1834, %v2010
  %v2219 = vsel %vm1349, %v1835, %v2012
  %v2220 = vsel %vm1349, %v1836, %v2014
  %v2221 = vsel %vm1349, %v1837, %v2016
  %v2222 = vsel %vm1349, %v1838, %v2018
  %v2223 = vsel %vm1349, %v1839, %v2020
  %v2224 = vsel %vm1349, %v1840, %v2022
  %v2225 = vsel %vm1349, %v1841, %v2024
  %v2226 = vsel %vm1349, %v1842, %v2026
  %v2227 = vsel %vm1349, %v1843, %v2028
  %v2228 = vsel %vm1349, %v1844, %v2030
  %v2229 = vsel %vm1349, %v1845, %v2032
  %v2230 = vsel %vm1349, %v1846, %v2034
  %v2231 = vsel %vm1349, %v1847, %v2036
  %v2232 = vsel %vm1349, %v1848, %v2038
  %v2233 = vsel %vm1349, %v1849, %v2040
  %v2234 = vsel %vm1349, %v1850, %v2042
  %vm2235 = vcmask 523264
  %v2236 = vsel %vm2235, %v2203, %v2108
  %v2237 = vsel %vm2235, %v2204, %v2110
  %v2238 = vsel %vm2235, %v2205, %v2112
  %v2239 = vsel %vm2235, %v2206, %v2114
  %v2240 = vsel %vm2235, %v2207, %v2116
  %v2241 = vsel %vm2235, %v2208, %v2118
  %v2242 = vsel %vm2235, %v2209, %v2120
  %v2243 = vsel %vm2235, %v2210, %v2122
  %v2244 = vsel %vm2235, %v2211, %v2124
  %v2245 = vsel %vm2235, %v2212, %v2126
  %v2246 = vsel %vm2235, %v2213, %v2128
  %v2247 = vsel %vm2235, %v2214, %v2130
  %v2248 = vsel %vm2235, %v2215, %v2132
  %v2249 = vsel %vm2235, %v2216, %v2134
  %v2250 = vsel %vm2235, %v2217, %v2136
  %v2251 = vsel %vm2235, %v2218, %v2138
  %v2252 = vsel %vm2235, %v2219, %v2140
  %v2253 = vsel %vm2235, %v2220, %v2142
  %v2254 = vsel %vm2235, %v2221, %v2144
  %v2255 = vsel %vm2235, %v2222, %v2146
  %v2256 = vsel %vm2235, %v2223, %v2148
  %v2257 = vsel %vm2235, %v2224, %v2150
  %v2258 = vsel %vm2235, %v2225, %v2152
  %v2259 = vsel %vm2235, %v2226, %v2154
  %v2260 = vsel %vm2235, %v2227, %v2156
  %v2261 = vsel %vm2235, %v2228, %v2158
  %v2262 = vsel %vm2235, %v2229, %v2160
  %v2263 = vsel %vm2235, %v2230, %v2162
  %v2264 = vsel %vm2235, %v2231, %v2164
  %v2265 = vsel %vm2235, %v2232, %v2166
  %v2266 = vsel %vm2235, %v2233, %v2168
  %v2267 = vsel %vm2235, %v2234, %v2170
  %v2269 = vlaneseq
  %v2270 = vshrl.u32 %v2269, 7
  %v2271 = vsub.s32 0, %v2270
  %v2272 = vrot.slane %v1722, %v2271
  %vm2274 = vcmask 785408
  %v2276 = vsel %vm2274, %v2236, 0
  %v2279 = vsel %vm2274, %v2237, 0
  %v2282 = vsel %vm2274, %v2238, 0
  %v2285 = vsel %vm2274, %v2239, 0
  %v2288 = vsel %vm2274, %v2240, 0
  %v2291 = vsel %vm2274, %v2241, 0
  %v2294 = vsel %vm2274, %v2242, 0
  %v2297 = vsel %vm2274, %v2243, 0
  %v2300 = vsel %vm2274, %v2244, 0
  %v2303 = vsel %vm2274, %v2245, 0
  %v2306 = vsel %vm2274, %v2246, 0
  %v2309 = vsel %vm2274, %v2247, 0
  %v2312 = vsel %vm2274, %v2248, 0
  %v2315 = vsel %vm2274, %v2249, 0
  %v2318 = vsel %vm2274, %v2250, 0
  %v2321 = vsel %vm2274, %v2251, 0
  %v2324 = vsel %vm2274, %v2252, 0
  %v2327 = vsel %vm2274, %v2253, 0
  %v2330 = vsel %vm2274, %v2254, 0
  %v2333 = vsel %vm2274, %v2255, 0
  %v2336 = vsel %vm2274, %v2256, 0
  %v2339 = vsel %vm2274, %v2257, 0
  %v2342 = vsel %vm2274, %v2258, 0
  %v2345 = vsel %vm2274, %v2259, 0
  %v2348 = vsel %vm2274, %v2260, 0
  %v2351 = vsel %vm2274, %v2261, 0
  %v2354 = vsel %vm2274, %v2262, 0
  %v2357 = vsel %vm2274, %v2263, 0
  %v2360 = vsel %vm2274, %v2264, 0
  %v2363 = vsel %vm2274, %v2265, 0
  %v2366 = vsel %vm2274, %v2266, 0
  %v2369 = vsel %vm2274, %v2267, 0
  %2371 = vmatprep.subr.mxu0 0.0
  %2372 = vmatpush1.msra.mxu0 %v1710
  %2373 = vmatprep.subr.mxu0 0.0
  %2374 = vmatpush1.msra.mxu0 %v1711
  %2375 = vmatprep.subr.mxu0 0.0
  %2376 = vmatpush1.msra.mxu0 %v1712
  %2377 = vmatprep.subr.mxu0 0.0
  %2378 = vmatpush1.msra.mxu0 %v1713
  %2379 = vmatprep.subr.mxu0 0.0
  %2380 = vmatpush1.msra.mxu0 %v1714
  %2381 = vmatprep.subr.mxu0 0.0
  %2382 = vmatpush1.msra.mxu0 %v1715
  %2383 = vmatprep.subr.mxu0 0.0
  %2384 = vmatpush1.msra.mxu0 %v1716
  %2385 = vmatprep.subr.mxu0 0.0
  %2386 = vmatpush1.msra.mxu0 %v1717
  %2387 = vmatprep.subr.mxu0 0.0
  %2388 = vmatpush1.msra.mxu0 %v1718
  %2389 = vmatprep.subr.mxu0 0.0
  %2390 = vmatpush1.msra.mxu0 %v1719
  %2391 = vmatprep.subr.mxu0 0.0
  %2392 = vmatpush1.msra.mxu0 %v1720
  %2393 = vmatprep.subr.mxu0 0.0
  %2394 = vmatpush1.msra.mxu0 %v1721
  %2395 = vmatprep.subr.mxu0 0.0
  %2396 = vmatpush1.msra.mxu0 0.0
  %2397 = vmatprep.subr.mxu0 0.0
  %2398 = vmatpush1.msra.mxu0 0.0
  %2399 = vmatprep.subr.mxu0 0.0
  %2400 = vmatpush1.msra.mxu0 0.0
  %2401 = vmatprep.subr.mxu0 0.0
  %2402 = vmatpush1.msra.mxu0 0.0
  %2403 = vmatprep.subr.mxu0 0.0
  %2404 = vmatpush1.msra.mxu0 0.0
  %2405 = vmatprep.subr.mxu0 0.0
  %2406 = vmatpush1.msra.mxu0 0.0
  %2407 = vmatprep.subr.mxu0 0.0
  %2408 = vmatpush1.msra.mxu0 0.0
  %2409 = vmatprep.subr.mxu0 0.0
  %2410 = vmatpush1.msra.mxu0 0.0
  %2411 = vmatprep.subr.mxu0 0.0
  %2412 = vmatpush1.msra.mxu0 0.0
  %2413 = vmatprep.subr.mxu0 0.0
  %2414 = vmatpush1.msra.mxu0 0.0
  %2415 = vmatprep.subr.mxu0 0.0
  %2416 = vmatpush1.msra.mxu0 0.0
  %2417 = vmatprep.subr.mxu0 0.0
  %2418 = vmatpush1.msra.mxu0 0.0
  %2419 = vmatprep.subr.mxu0 0.0
  %2420 = vmatpush1.msra.mxu0 0.0
  %2421 = vmatprep.subr.mxu0 0.0
  %2422 = vmatpush1.msra.mxu0 0.0
  %2423 = vmatprep.subr.mxu0 0.0
  %2424 = vmatpush1.msra.mxu0 0.0
  %2425 = vmatprep.subr.mxu0 0.0
  %2426 = vmatpush1.msra.mxu0 0.0
  %2427 = vmatprep.subr.mxu0 0.0
  %2428 = vmatpush1.msra.mxu0 0.0
  %2429 = vmatprep.subr.mxu0 0.0
  %2430 = vmatpush1.msra.mxu0 0.0
  %2431 = vmatprep.subr.mxu0 0.0
  %2432 = vmatpush1.msra.mxu0 0.0
  %2433 = vmatprep.subr.mxu0 0.0
  %2434 = vmatpush1.msra.mxu0 0.0
  %2435 = vmatprep.mubr.f32.mxu0 0.0
  %2436 = vmatmul.mubr.f32.gmra.mrb[0].mxu0 %v2276
  %v2437 = vpop.f32.mrb[0].mxu0
  %v2438 = vadd.f32 %v2272, %v2437
  %v2439 = vpop.f32.mrb[0].mxu0
  %2440 = vmatprep.mubr.f32.mxu0 0.0
  %2441 = vmatmul.mubr.f32.gmra.mrb[0].mxu0 %v2279
  %v2442 = vpop.f32.mrb[0].mxu0
  %v2443 = vadd.f32 %v2272, %v2442
  %v2444 = vpop.f32.mrb[0].mxu0
  %2445 = vmatprep.mubr.f32.mxu0 0.0
  %2446 = vmatmul.mubr.f32.gmra.mrb[0].mxu0 %v2282
  %v2447 = vpop.f32.mrb[0].mxu0
  %v2448 = vadd.f32 %v2272, %v2447
  %v2449 = vpop.f32.mrb[0].mxu0
  %2450 = vmatprep.mubr.f32.mxu0 0.0
  %2451 = vmatmul.mubr.f32.gmra.mrb[0].mxu0 %v2285
  %v2452 = vpop.f32.mrb[0].mxu0
  %v2453 = vadd.f32 %v2272, %v2452
  %v2454 = vpop.f32.mrb[0].mxu0
  %2455 = vmatprep.mubr.f32.mxu0 0.0
  %2456 = vmatmul.mubr.f32.gmra.mrb[0].mxu0 %v2288
  %v2457 = vpop.f32.mrb[0].mxu0
  %v2458 = vadd.f32 %v2272, %v2457
  %v2459 = vpop.f32.mrb[0].mxu0
  %2460 = vmatprep.mubr.f32.mxu0 0.0
  %2461 = vmatmul.mubr.f32.gmra.mrb[0].mxu0 %v2291
  %v2462 = vpop.f32.mrb[0].mxu0
  %v2463 = vadd.f32 %v2272, %v2462
  %v2464 = vpop.f32.mrb[0].mxu0
  %2465 = vmatprep.mubr.f32.mxu0 0.0
  %2466 = vmatmul.mubr.f32.gmra.mrb[0].mxu0 %v2294
  %v2467 = vpop.f32.mrb[0].mxu0
  %v2468 = vadd.f32 %v2272, %v2467
  %v2469 = vpop.f32.mrb[0].mxu0
  %2470 = vmatprep.mubr.f32.mxu0 0.0
  %2471 = vmatmul.mubr.f32.gmra.mrb[0].mxu0 %v2297
  %v2472 = vpop.f32.mrb[0].mxu0
  %v2473 = vadd.f32 %v2272, %v2472
  %v2474 = vpop.f32.mrb[0].mxu0
  %2475 = vmatprep.mubr.f32.mxu0 0.0
  %2476 = vmatmul.mubr.f32.gmra.mrb[0].mxu0 %v2300
  %v2477 = vpop.f32.mrb[0].mxu0
  %v2478 = vadd.f32 %v2272, %v2477
  %v2479 = vpop.f32.mrb[0].mxu0
  %2480 = vmatprep.mubr.f32.mxu0 0.0
  %2481 = vmatmul.mubr.f32.gmra.mrb[0].mxu0 %v2303
  %v2482 = vpop.f32.mrb[0].mxu0
  %v2483 = vadd.f32 %v2272, %v2482
  %v2484 = vpop.f32.mrb[0].mxu0
  %2485 = vmatprep.mubr.f32.mxu0 0.0
  %2486 = vmatmul.mubr.f32.gmra.mrb[0].mxu0 %v2306
  %v2487 = vpop.f32.mrb[0].mxu0
  %v2488 = vadd.f32 %v2272, %v2487
  %v2489 = vpop.f32.mrb[0].mxu0
  %2490 = vmatprep.mubr.f32.mxu0 0.0
  %2491 = vmatmul.mubr.f32.gmra.mrb[0].mxu0 %v2309
  %v2492 = vpop.f32.mrb[0].mxu0
  %v2493 = vadd.f32 %v2272, %v2492
  %v2494 = vpop.f32.mrb[0].mxu0
  %2495 = vmatprep.mubr.f32.mxu0 0.0
  %2496 = vmatmul.mubr.f32.gmra.mrb[0].mxu0 %v2312
  %v2497 = vpop.f32.mrb[0].mxu0
  %v2498 = vadd.f32 %v2272, %v2497
  %v2499 = vpop.f32.mrb[0].mxu0
  %2500 = vmatprep.mubr.f32.mxu0 0.0
  %2501 = vmatmul.mubr.f32.gmra.mrb[0].mxu0 %v2315
  %v2502 = vpop.f32.mrb[0].mxu0
  %v2503 = vadd.f32 %v2272, %v2502
  %v2504 = vpop.f32.mrb[0].mxu0
  %2505 = vmatprep.mubr.f32.mxu0 0.0
  %2506 = vmatmul.mubr.f32.gmra.mrb[0].mxu0 %v2318
  %v2507 = vpop.f32.mrb[0].mxu0
  %v2508 = vadd.f32 %v2272, %v2507
  %v2509 = vpop.f32.mrb[0].mxu0
  %2510 = vmatprep.mubr.f32.mxu0 0.0
  %2511 = vmatmul.mubr.f32.gmra.mrb[0].mxu0 %v2321
  %v2512 = vpop.f32.mrb[0].mxu0
  %v2513 = vadd.f32 %v2272, %v2512
  %v2514 = vpop.f32.mrb[0].mxu0
  %2515 = vmatprep.mubr.f32.mxu0 0.0
  %2516 = vmatmul.mubr.f32.gmra.mrb[0].mxu0 %v2324
  %v2517 = vpop.f32.mrb[0].mxu0
  %v2518 = vadd.f32 %v2272, %v2517
  %v2519 = vpop.f32.mrb[0].mxu0
  %2520 = vmatprep.mubr.f32.mxu0 0.0
  %2521 = vmatmul.mubr.f32.gmra.mrb[0].mxu0 %v2327
  %v2522 = vpop.f32.mrb[0].mxu0
  %v2523 = vadd.f32 %v2272, %v2522
  %v2524 = vpop.f32.mrb[0].mxu0
  %2525 = vmatprep.mubr.f32.mxu0 0.0
  %2526 = vmatmul.mubr.f32.gmra.mrb[0].mxu0 %v2330
  %v2527 = vpop.f32.mrb[0].mxu0
  %v2528 = vadd.f32 %v2272, %v2527
  %v2529 = vpop.f32.mrb[0].mxu0
  %2530 = vmatprep.mubr.f32.mxu0 0.0
  %2531 = vmatmul.mubr.f32.gmra.mrb[0].mxu0 %v2333
  %v2532 = vpop.f32.mrb[0].mxu0
  %v2533 = vadd.f32 %v2272, %v2532
  %v2534 = vpop.f32.mrb[0].mxu0
  %2535 = vmatprep.mubr.f32.mxu0 0.0
  %2536 = vmatmul.mubr.f32.gmra.mrb[0].mxu0 %v2336
  %v2537 = vpop.f32.mrb[0].mxu0
  %v2538 = vadd.f32 %v2272, %v2537
  %v2539 = vpop.f32.mrb[0].mxu0
  %2540 = vmatprep.mubr.f32.mxu0 0.0
  %2541 = vmatmul.mubr.f32.gmra.mrb[0].mxu0 %v2339
  %v2542 = vpop.f32.mrb[0].mxu0
  %v2543 = vadd.f32 %v2272, %v2542
  %v2544 = vpop.f32.mrb[0].mxu0
  %2545 = vmatprep.mubr.f32.mxu0 0.0
  %2546 = vmatmul.mubr.f32.gmra.mrb[0].mxu0 %v2342
  %v2547 = vpop.f32.mrb[0].mxu0
  %v2548 = vadd.f32 %v2272, %v2547
  %v2549 = vpop.f32.mrb[0].mxu0
  %2550 = vmatprep.mubr.f32.mxu0 0.0
  %2551 = vmatmul.mubr.f32.gmra.mrb[0].mxu0 %v2345
  %v2552 = vpop.f32.mrb[0].mxu0
  %v2553 = vadd.f32 %v2272, %v2552
  %v2554 = vpop.f32.mrb[0].mxu0
  %2555 = vmatprep.mubr.f32.mxu0 0.0
  %2556 = vmatmul.mubr.f32.gmra.mrb[0].mxu0 %v2348
  %v2557 = vpop.f32.mrb[0].mxu0
  %v2558 = vadd.f32 %v2272, %v2557
  %v2559 = vpop.f32.mrb[0].mxu0
  %2560 = vmatprep.mubr.f32.mxu0 0.0
  %2561 = vmatmul.mubr.f32.gmra.mrb[0].mxu0 %v2351
  %v2562 = vpop.f32.mrb[0].mxu0
  %v2563 = vadd.f32 %v2272, %v2562
  %v2564 = vpop.f32.mrb[0].mxu0
  %2565 = vmatprep.mubr.f32.mxu0 0.0
  %2566 = vmatmul.mubr.f32.gmra.mrb[0].mxu0 %v2354
  %v2567 = vpop.f32.mrb[0].mxu0
  %v2568 = vadd.f32 %v2272, %v2567
  %v2569 = vpop.f32.mrb[0].mxu0
  %2570 = vmatprep.mubr.f32.mxu0 0.0
  %2571 = vmatmul.mubr.f32.gmra.mrb[0].mxu0 %v2357
  %v2572 = vpop.f32.mrb[0].mxu0
  %v2573 = vadd.f32 %v2272, %v2572
  %v2574 = vpop.f32.mrb[0].mxu0
  %2575 = vmatprep.mubr.f32.mxu0 0.0
  %2576 = vmatmul.mubr.f32.gmra.mrb[0].mxu0 %v2360
  %v2577 = vpop.f32.mrb[0].mxu0
  %v2578 = vadd.f32 %v2272, %v2577
  %v2579 = vpop.f32.mrb[0].mxu0
  %2580 = vmatprep.mubr.f32.mxu0 0.0
  %2581 = vmatmul.mubr.f32.gmra.mrb[0].mxu0 %v2363
  %v2582 = vpop.f32.mrb[0].mxu0
  %v2583 = vadd.f32 %v2272, %v2582
  %v2584 = vpop.f32.mrb[0].mxu0
  %2585 = vmatprep.mubr.f32.mxu0 0.0
  %2586 = vmatmul.mubr.f32.gmra.mrb[0].mxu0 %v2366
  %v2587 = vpop.f32.mrb[0].mxu0
  %v2588 = vadd.f32 %v2272, %v2587
  %v2589 = vpop.f32.mrb[0].mxu0
  %2590 = vmatprep.mubr.f32.mxu0 0.0
  %2591 = vmatmul.mubr.f32.gmra.mrb[0].mxu0 %v2369
  %v2592 = vpop.f32.mrb[0].mxu0
  %v2593 = vadd.f32 %v2272, %v2592
  %v2594 = vpop.f32.mrb[0].mxu0
  %2595 = vdwg.mxu0
  %v2596 = vld [vmem:[%s1] sm:$0xff]
  %v2597 = vld [vmem:[%s1 + $0x8] sm:$0xff]
  %v2598 = vld [vmem:[%s1 + $0x10] sm:$0xff]
  %v2599 = vld [vmem:[%s1 + $0x18] sm:$0xff]
  %v2600 = vld [vmem:[%s1 + $0x20] sm:$0xff]
  %v2601 = vld [vmem:[%s1 + $0x28] sm:$0xff]
  %v2602 = vld [vmem:[%s1 + $0x30] sm:$0xff]
  %v2603 = vld [vmem:[%s1 + $0x38] sm:$0xff]
  %v2604 = vld [vmem:[%s1 + $0x40] sm:$0xff]
  %v2605 = vld [vmem:[%s1 + $0x48] sm:$0xff]
  %v2606 = vld [vmem:[%s1 + $0x50] sm:$0xff]
  %v2607 = vld [vmem:[%s1 + $0x58] sm:$0xff]
  %v2608 = vld [vmem:[%s1 + $0x60] sm:$0xff]
  %v2609 = vld [vmem:[%s1 + $0x68] sm:$0xff]
  %v2610 = vld [vmem:[%s1 + $0x70] sm:$0xff]
  %v2611 = vld [vmem:[%s1 + $0x78] sm:$0xff]
  %v2612 = vld [vmem:[%s1 + $0x80] sm:$0xff]
  %v2613 = vld [vmem:[%s1 + $0x88] sm:$0xff]
  %v2614 = vld [vmem:[%s1 + $0x90] sm:$0xff]
  %v2615 = vld [vmem:[%s1 + $0x98] sm:$0xff]
  %v2616 = vld [vmem:[%s1 + $0xa0] sm:$0xff]
  %v2617 = vld [vmem:[%s1 + $0xa8] sm:$0xff]
  %v2618 = vld [vmem:[%s1 + $0xb0] sm:$0xff]
  %v2619 = vld [vmem:[%s1 + $0xb8] sm:$0xff]
  %v2620 = vld [vmem:[%s1 + $0xc0] sm:$0xff]
  %v2621 = vld [vmem:[%s1 + $0xc8] sm:$0xff]
  %v2622 = vld [vmem:[%s1 + $0xd0] sm:$0xff]
  %v2623 = vld [vmem:[%s1 + $0xd8] sm:$0xff]
  %v2624 = vld [vmem:[%s1 + $0xe0] sm:$0xff]
  %v2625 = vld [vmem:[%s1 + $0xe8] sm:$0xff]
  %v2626 = vld [vmem:[%s1 + $0xf0] sm:$0xff]
  %v2627 = vld [vmem:[%s1 + $0xf8] sm:$0xff]
  %v2628 = vld [vmem:[%s2] sm:$0xff]
  %v2629 = vld [vmem:[%s2 + $0x8] sm:$0xff]
  %v2630 = vld [vmem:[%s2 + $0x10] sm:$0xff]
  %v2631 = vld [vmem:[%s2 + $0x18] sm:$0xff]
  %v2632 = vld [vmem:[%s2 + $0x20] sm:$0xff]
  %v2633 = vld [vmem:[%s2 + $0x28] sm:$0xff]
  %v2634 = vld [vmem:[%s2 + $0x30] sm:$0xff]
  %v2635 = vld [vmem:[%s2 + $0x38] sm:$0xff]
  %v2636 = vld [vmem:[%s2 + $0x40] sm:$0xff]
  %v2637 = vld [vmem:[%s2 + $0x48] sm:$0xff]
  %v2638 = vld [vmem:[%s2 + $0x50] sm:$0xff]
  %v2639 = vld [vmem:[%s2 + $0x58] sm:$0xff]
  %v2640 = vld [vmem:[%s2 + $0x60] sm:$0xff]
  %v2641 = vld [vmem:[%s2 + $0x68] sm:$0xff]
  %v2642 = vld [vmem:[%s2 + $0x70] sm:$0xff]
  %v2643 = vld [vmem:[%s2 + $0x78] sm:$0xff]
  %v2644 = vld [vmem:[%s2 + $0x80] sm:$0xff]
  %v2645 = vld [vmem:[%s2 + $0x88] sm:$0xff]
  %v2646 = vld [vmem:[%s2 + $0x90] sm:$0xff]
  %v2647 = vld [vmem:[%s2 + $0x98] sm:$0xff]
  %v2648 = vld [vmem:[%s2 + $0xa0] sm:$0xff]
  %v2649 = vld [vmem:[%s2 + $0xa8] sm:$0xff]
  %v2650 = vld [vmem:[%s2 + $0xb0] sm:$0xff]
  %v2651 = vld [vmem:[%s2 + $0xb8] sm:$0xff]
  %v2652 = vld [vmem:[%s2 + $0xc0] sm:$0xff]
  %v2653 = vld [vmem:[%s2 + $0xc8] sm:$0xff]
  %v2654 = vld [vmem:[%s2 + $0xd0] sm:$0xff]
  %v2655 = vld [vmem:[%s2 + $0xd8] sm:$0xff]
  %v2656 = vld [vmem:[%s2 + $0xe0] sm:$0xff]
  %v2657 = vld [vmem:[%s2 + $0xe8] sm:$0xff]
  %v2658 = vld [vmem:[%s2 + $0xf0] sm:$0xff]
  %v2659 = vld [vmem:[%s2 + $0xf8] sm:$0xff]
  %v2660 = vsub.f32 1.0, %v2628
  %v2661 = vsub.f32 1.0, %v2629
  %v2662 = vsub.f32 1.0, %v2630
  %v2663 = vsub.f32 1.0, %v2631
  %v2664 = vsub.f32 1.0, %v2632
  %v2665 = vsub.f32 1.0, %v2633
  %v2666 = vsub.f32 1.0, %v2634
  %v2667 = vsub.f32 1.0, %v2635
  %v2668 = vsub.f32 1.0, %v2636
  %v2669 = vsub.f32 1.0, %v2637
  %v2670 = vsub.f32 1.0, %v2638
  %v2671 = vsub.f32 1.0, %v2639
  %v2672 = vsub.f32 1.0, %v2640
  %v2673 = vsub.f32 1.0, %v2641
  %v2674 = vsub.f32 1.0, %v2642
  %v2675 = vsub.f32 1.0, %v2643
  %v2676 = vsub.f32 1.0, %v2644
  %v2677 = vsub.f32 1.0, %v2645
  %v2678 = vsub.f32 1.0, %v2646
  %v2679 = vsub.f32 1.0, %v2647
  %v2680 = vsub.f32 1.0, %v2648
  %v2681 = vsub.f32 1.0, %v2649
  %v2682 = vsub.f32 1.0, %v2650
  %v2683 = vsub.f32 1.0, %v2651
  %v2684 = vsub.f32 1.0, %v2652
  %v2685 = vsub.f32 1.0, %v2653
  %v2686 = vsub.f32 1.0, %v2654
  %v2687 = vsub.f32 1.0, %v2655
  %v2688 = vsub.f32 1.0, %v2656
  %v2689 = vsub.f32 1.0, %v2657
  %v2690 = vsub.f32 1.0, %v2658
  %v2691 = vsub.f32 1.0, %v2659
  %vm2692 = vcmask 64512
  %v2693 = vsel %vm2692, %v2438, -inf
  %2694 = vmax.xlane.f32.xlu0 %v2693
  %v2695 = vpop.xlane.xlu0 %2694
  %v2696 = vsel %vm2692, %v2443, -inf
  %2697 = vmax.xlane.f32.xlu0 %v2696
  %v2698 = vpop.xlane.xlu0 %2697
  %v2699 = vsel %vm2692, %v2448, -inf
  %2700 = vmax.xlane.f32.xlu0 %v2699
  %v2701 = vpop.xlane.xlu0 %2700
  %v2702 = vsel %vm2692, %v2453, -inf
  %2703 = vmax.xlane.f32.xlu0 %v2702
  %v2704 = vpop.xlane.xlu0 %2703
  %v2705 = vsel %vm2692, %v2458, -inf
  %2706 = vmax.xlane.f32.xlu0 %v2705
  %v2707 = vpop.xlane.xlu0 %2706
  %v2708 = vsel %vm2692, %v2463, -inf
  %2709 = vmax.xlane.f32.xlu0 %v2708
  %v2710 = vpop.xlane.xlu0 %2709
  %v2711 = vsel %vm2692, %v2468, -inf
  %2712 = vmax.xlane.f32.xlu0 %v2711
  %v2713 = vpop.xlane.xlu0 %2712
  %v2714 = vsel %vm2692, %v2473, -inf
  %2715 = vmax.xlane.f32.xlu0 %v2714
  %v2716 = vpop.xlane.xlu0 %2715
  %v2717 = vsel %vm2692, %v2478, -inf
  %2718 = vmax.xlane.f32.xlu0 %v2717
  %v2719 = vpop.xlane.xlu0 %2718
  %v2720 = vsel %vm2692, %v2483, -inf
  %2721 = vmax.xlane.f32.xlu0 %v2720
  %v2722 = vpop.xlane.xlu0 %2721
  %v2723 = vsel %vm2692, %v2488, -inf
  %2724 = vmax.xlane.f32.xlu0 %v2723
  %v2725 = vpop.xlane.xlu0 %2724
  %v2726 = vsel %vm2692, %v2493, -inf
  %2727 = vmax.xlane.f32.xlu0 %v2726
  %v2728 = vpop.xlane.xlu0 %2727
  %v2729 = vsel %vm2692, %v2498, -inf
  %2730 = vmax.xlane.f32.xlu0 %v2729
  %v2731 = vpop.xlane.xlu0 %2730
  %v2732 = vsel %vm2692, %v2503, -inf
  %2733 = vmax.xlane.f32.xlu0 %v2732
  %v2734 = vpop.xlane.xlu0 %2733
  %v2735 = vsel %vm2692, %v2508, -inf
  %2736 = vmax.xlane.f32.xlu0 %v2735
  %v2737 = vpop.xlane.xlu0 %2736
  %v2738 = vsel %vm2692, %v2513, -inf
  %2739 = vmax.xlane.f32.xlu0 %v2738
  %v2740 = vpop.xlane.xlu0 %2739
  %v2741 = vsel %vm2692, %v2518, -inf
  %2742 = vmax.xlane.f32.xlu0 %v2741
  %v2743 = vpop.xlane.xlu0 %2742
  %v2744 = vsel %vm2692, %v2523, -inf
  %2745 = vmax.xlane.f32.xlu0 %v2744
  %v2746 = vpop.xlane.xlu0 %2745
  %v2747 = vsel %vm2692, %v2528, -inf
  %2748 = vmax.xlane.f32.xlu0 %v2747
  %v2749 = vpop.xlane.xlu0 %2748
  %v2750 = vsel %vm2692, %v2533, -inf
  %2751 = vmax.xlane.f32.xlu0 %v2750
  %v2752 = vpop.xlane.xlu0 %2751
  %v2753 = vsel %vm2692, %v2538, -inf
  %2754 = vmax.xlane.f32.xlu0 %v2753
  %v2755 = vpop.xlane.xlu0 %2754
  %v2756 = vsel %vm2692, %v2543, -inf
  %2757 = vmax.xlane.f32.xlu0 %v2756
  %v2758 = vpop.xlane.xlu0 %2757
  %v2759 = vsel %vm2692, %v2548, -inf
  %2760 = vmax.xlane.f32.xlu0 %v2759
  %v2761 = vpop.xlane.xlu0 %2760
  %v2762 = vsel %vm2692, %v2553, -inf
  %2763 = vmax.xlane.f32.xlu0 %v2762
  %v2764 = vpop.xlane.xlu0 %2763
  %v2765 = vsel %vm2692, %v2558, -inf
  %2766 = vmax.xlane.f32.xlu0 %v2765
  %v2767 = vpop.xlane.xlu0 %2766
  %v2768 = vsel %vm2692, %v2563, -inf
  %2769 = vmax.xlane.f32.xlu0 %v2768
  %v2770 = vpop.xlane.xlu0 %2769
  %v2771 = vsel %vm2692, %v2568, -inf
  %2772 = vmax.xlane.f32.xlu0 %v2771
  %v2773 = vpop.xlane.xlu0 %2772
  %v2774 = vsel %vm2692, %v2573, -inf
  %2775 = vmax.xlane.f32.xlu0 %v2774
  %v2776 = vpop.xlane.xlu0 %2775
  %v2777 = vsel %vm2692, %v2578, -inf
  %2778 = vmax.xlane.f32.xlu0 %v2777
  %v2779 = vpop.xlane.xlu0 %2778
  %v2780 = vsel %vm2692, %v2583, -inf
  %2781 = vmax.xlane.f32.xlu0 %v2780
  %v2782 = vpop.xlane.xlu0 %2781
  %v2783 = vsel %vm2692, %v2588, -inf
  %2784 = vmax.xlane.f32.xlu0 %v2783
  %v2785 = vpop.xlane.xlu0 %2784
  %v2786 = vsel %vm2692, %v2593, -inf
  %2787 = vmax.xlane.f32.xlu0 %v2786
  %v2788 = vpop.xlane.xlu0 %2787
  %v2789 = vsub.f32 %v2438, %v2695
  %v2790 = vsub.f32 %v2443, %v2698
  %v2791 = vsub.f32 %v2448, %v2701
  %v2792 = vsub.f32 %v2453, %v2704
  %v2793 = vsub.f32 %v2458, %v2707
  %v2794 = vsub.f32 %v2463, %v2710
  %v2795 = vsub.f32 %v2468, %v2713
  %v2796 = vsub.f32 %v2473, %v2716
  %v2797 = vsub.f32 %v2478, %v2719
  %v2798 = vsub.f32 %v2483, %v2722
  %v2799 = vsub.f32 %v2488, %v2725
  %v2800 = vsub.f32 %v2493, %v2728
  %v2801 = vsub.f32 %v2498, %v2731
  %v2802 = vsub.f32 %v2503, %v2734
  %v2803 = vsub.f32 %v2508, %v2737
  %v2804 = vsub.f32 %v2513, %v2740
  %v2805 = vsub.f32 %v2518, %v2743
  %v2806 = vsub.f32 %v2523, %v2746
  %v2807 = vsub.f32 %v2528, %v2749
  %v2808 = vsub.f32 %v2533, %v2752
  %v2809 = vsub.f32 %v2538, %v2755
  %v2810 = vsub.f32 %v2543, %v2758
  %v2811 = vsub.f32 %v2548, %v2761
  %v2812 = vsub.f32 %v2553, %v2764
  %v2813 = vsub.f32 %v2558, %v2767
  %v2814 = vsub.f32 %v2563, %v2770
  %v2815 = vsub.f32 %v2568, %v2773
  %v2816 = vsub.f32 %v2573, %v2776
  %v2817 = vsub.f32 %v2578, %v2779
  %v2818 = vsub.f32 %v2583, %v2782
  %v2819 = vsub.f32 %v2588, %v2785
  %v2820 = vsub.f32 %v2593, %v2788
  %v2821 = vmul.f32 %v2789, 1.442695
  %v2822 = vpow.pop %v2821
  %v2823 = vmul.f32 %v2790, 1.442695
  %v2824 = vpow.pop %v2823
  %v2825 = vmul.f32 %v2791, 1.442695
  %v2826 = vpow.pop %v2825
  %v2827 = vmul.f32 %v2792, 1.442695
  %v2828 = vpow.pop %v2827
  %v2829 = vmul.f32 %v2793, 1.442695
  %v2830 = vpow.pop %v2829
  %v2831 = vmul.f32 %v2794, 1.442695
  %v2832 = vpow.pop %v2831
  %v2833 = vmul.f32 %v2795, 1.442695
  %v2834 = vpow.pop %v2833
  %v2835 = vmul.f32 %v2796, 1.442695
  %v2836 = vpow.pop %v2835
  %v2837 = vmul.f32 %v2797, 1.442695
  %v2838 = vpow.pop %v2837
  %v2839 = vmul.f32 %v2798, 1.442695
  %v2840 = vpow.pop %v2839
  %v2841 = vmul.f32 %v2799, 1.442695
  %v2842 = vpow.pop %v2841
  %v2843 = vmul.f32 %v2800, 1.442695
  %v2844 = vpow.pop %v2843
  %v2845 = vmul.f32 %v2801, 1.442695
  %v2846 = vpow.pop %v2845
  %v2847 = vmul.f32 %v2802, 1.442695
  %v2848 = vpow.pop %v2847
  %v2849 = vmul.f32 %v2803, 1.442695
  %v2850 = vpow.pop %v2849
  %v2851 = vmul.f32 %v2804, 1.442695
  %v2852 = vpow.pop %v2851
  %v2853 = vmul.f32 %v2805, 1.442695
  %v2854 = vpow.pop %v2853
  %v2855 = vmul.f32 %v2806, 1.442695
  %v2856 = vpow.pop %v2855
  %v2857 = vmul.f32 %v2807, 1.442695
  %v2858 = vpow.pop %v2857
  %v2859 = vmul.f32 %v2808, 1.442695
  %v2860 = vpow.pop %v2859
  %v2861 = vmul.f32 %v2809, 1.442695
  %v2862 = vpow.pop %v2861
  %v2863 = vmul.f32 %v2810, 1.442695
  %v2864 = vpow.pop %v2863
  %v2865 = vmul.f32 %v2811, 1.442695
  %v2866 = vpow.pop %v2865
  %v2867 = vmul.f32 %v2812, 1.442695
  %v2868 = vpow.pop %v2867
  %v2869 = vmul.f32 %v2813, 1.442695
  %v2870 = vpow.pop %v2869
  %v2871 = vmul.f32 %v2814, 1.442695
  %v2872 = vpow.pop %v2871
  %v2873 = vmul.f32 %v2815, 1.442695
  %v2874 = vpow.pop %v2873
  %v2875 = vmul.f32 %v2816, 1.442695
  %v2876 = vpow.pop %v2875
  %v2877 = vmul.f32 %v2817, 1.442695
  %v2878 = vpow.pop %v2877
  %v2879 = vmul.f32 %v2818, 1.442695
  %v2880 = vpow.pop %v2879
  %v2881 = vmul.f32 %v2819, 1.442695
  %v2882 = vpow.pop %v2881
  %v2883 = vmul.f32 %v2820, 1.442695
  %v2884 = vpow.pop %v2883
  %v2885 = vsel %vm2692, %v2822, 0.0
  %2886 = vadd.xlane.f32.xlu0 %v2885
  %v2887 = vpop.xlane.xlu0 %2886
  %v2888 = vsel %vm2692, %v2824, 0.0
  %2889 = vadd.xlane.f32.xlu0 %v2888
  %v2890 = vpop.xlane.xlu0 %2889
  %v2891 = vsel %vm2692, %v2826, 0.0
  %2892 = vadd.xlane.f32.xlu0 %v2891
  %v2893 = vpop.xlane.xlu0 %2892
  %v2894 = vsel %vm2692, %v2828, 0.0
  %2895 = vadd.xlane.f32.xlu0 %v2894
  %v2896 = vpop.xlane.xlu0 %2895
  %v2897 = vsel %vm2692, %v2830, 0.0
  %2898 = vadd.xlane.f32.xlu0 %v2897
  %v2899 = vpop.xlane.xlu0 %2898
  %v2900 = vsel %vm2692, %v2832, 0.0
  %2901 = vadd.xlane.f32.xlu0 %v2900
  %v2902 = vpop.xlane.xlu0 %2901
  %v2903 = vsel %vm2692, %v2834, 0.0
  %2904 = vadd.xlane.f32.xlu0 %v2903
  %v2905 = vpop.xlane.xlu0 %2904
  %v2906 = vsel %vm2692, %v2836, 0.0
  %2907 = vadd.xlane.f32.xlu0 %v2906
  %v2908 = vpop.xlane.xlu0 %2907
  %v2909 = vsel %vm2692, %v2838, 0.0
  %2910 = vadd.xlane.f32.xlu0 %v2909
  %v2911 = vpop.xlane.xlu0 %2910
  %v2912 = vsel %vm2692, %v2840, 0.0
  %2913 = vadd.xlane.f32.xlu0 %v2912
  %v2914 = vpop.xlane.xlu0 %2913
  %v2915 = vsel %vm2692, %v2842, 0.0
  %2916 = vadd.xlane.f32.xlu0 %v2915
  %v2917 = vpop.xlane.xlu0 %2916
  %v2918 = vsel %vm2692, %v2844, 0.0
  %2919 = vadd.xlane.f32.xlu0 %v2918
  %v2920 = vpop.xlane.xlu0 %2919
  %v2921 = vsel %vm2692, %v2846, 0.0
  %2922 = vadd.xlane.f32.xlu0 %v2921
  %v2923 = vpop.xlane.xlu0 %2922
  %v2924 = vsel %vm2692, %v2848, 0.0
  %2925 = vadd.xlane.f32.xlu0 %v2924
  %v2926 = vpop.xlane.xlu0 %2925
  %v2927 = vsel %vm2692, %v2850, 0.0
  %2928 = vadd.xlane.f32.xlu0 %v2927
  %v2929 = vpop.xlane.xlu0 %2928
  %v2930 = vsel %vm2692, %v2852, 0.0
  %2931 = vadd.xlane.f32.xlu0 %v2930
  %v2932 = vpop.xlane.xlu0 %2931
  %v2933 = vsel %vm2692, %v2854, 0.0
  %2934 = vadd.xlane.f32.xlu0 %v2933
  %v2935 = vpop.xlane.xlu0 %2934
  %v2936 = vsel %vm2692, %v2856, 0.0
  %2937 = vadd.xlane.f32.xlu0 %v2936
  %v2938 = vpop.xlane.xlu0 %2937
  %v2939 = vsel %vm2692, %v2858, 0.0
  %2940 = vadd.xlane.f32.xlu0 %v2939
  %v2941 = vpop.xlane.xlu0 %2940
  %v2942 = vsel %vm2692, %v2860, 0.0
  %2943 = vadd.xlane.f32.xlu0 %v2942
  %v2944 = vpop.xlane.xlu0 %2943
  %v2945 = vsel %vm2692, %v2862, 0.0
  %2946 = vadd.xlane.f32.xlu0 %v2945
  %v2947 = vpop.xlane.xlu0 %2946
  %v2948 = vsel %vm2692, %v2864, 0.0
  %2949 = vadd.xlane.f32.xlu0 %v2948
  %v2950 = vpop.xlane.xlu0 %2949
  %v2951 = vsel %vm2692, %v2866, 0.0
  %2952 = vadd.xlane.f32.xlu0 %v2951
  %v2953 = vpop.xlane.xlu0 %2952
  %v2954 = vsel %vm2692, %v2868, 0.0
  %2955 = vadd.xlane.f32.xlu0 %v2954
  %v2956 = vpop.xlane.xlu0 %2955
  %v2957 = vsel %vm2692, %v2870, 0.0
  %2958 = vadd.xlane.f32.xlu0 %v2957
  %v2959 = vpop.xlane.xlu0 %2958
  %v2960 = vsel %vm2692, %v2872, 0.0
  %2961 = vadd.xlane.f32.xlu0 %v2960
  %v2962 = vpop.xlane.xlu0 %2961
  %v2963 = vsel %vm2692, %v2874, 0.0
  %2964 = vadd.xlane.f32.xlu0 %v2963
  %v2965 = vpop.xlane.xlu0 %2964
  %v2966 = vsel %vm2692, %v2876, 0.0
  %2967 = vadd.xlane.f32.xlu0 %v2966
  %v2968 = vpop.xlane.xlu0 %2967
  %v2969 = vsel %vm2692, %v2878, 0.0
  %2970 = vadd.xlane.f32.xlu0 %v2969
  %v2971 = vpop.xlane.xlu0 %2970
  %v2972 = vsel %vm2692, %v2880, 0.0
  %2973 = vadd.xlane.f32.xlu0 %v2972
  %v2974 = vpop.xlane.xlu0 %2973
  %v2975 = vsel %vm2692, %v2882, 0.0
  %2976 = vadd.xlane.f32.xlu0 %v2975
  %v2977 = vpop.xlane.xlu0 %2976
  %v2978 = vsel %vm2692, %v2884, 0.0
  %2979 = vadd.xlane.f32.xlu0 %v2978
  %v2980 = vpop.xlane.xlu0 %2979
  %v2981 = vlog2.pop %v2887
  %v2982 = vmul.f32 %v2981, 0.6931472
  %v2983 = vlog2.pop %v2890
  %v2984 = vmul.f32 %v2983, 0.6931472
  %v2985 = vlog2.pop %v2893
  %v2986 = vmul.f32 %v2985, 0.6931472
  %v2987 = vlog2.pop %v2896
  %v2988 = vmul.f32 %v2987, 0.6931472
  %v2989 = vlog2.pop %v2899
  %v2990 = vmul.f32 %v2989, 0.6931472
  %v2991 = vlog2.pop %v2902
  %v2992 = vmul.f32 %v2991, 0.6931472
  %v2993 = vlog2.pop %v2905
  %v2994 = vmul.f32 %v2993, 0.6931472
  %v2995 = vlog2.pop %v2908
  %v2996 = vmul.f32 %v2995, 0.6931472
  %v2997 = vlog2.pop %v2911
  %v2998 = vmul.f32 %v2997, 0.6931472
  %v2999 = vlog2.pop %v2914
  %v3000 = vmul.f32 %v2999, 0.6931472
  %v3001 = vlog2.pop %v2917
  %v3002 = vmul.f32 %v3001, 0.6931472
  %v3003 = vlog2.pop %v2920
  %v3004 = vmul.f32 %v3003, 0.6931472
  %v3005 = vlog2.pop %v2923
  %v3006 = vmul.f32 %v3005, 0.6931472
  %v3007 = vlog2.pop %v2926
  %v3008 = vmul.f32 %v3007, 0.6931472
  %v3009 = vlog2.pop %v2929
  %v3010 = vmul.f32 %v3009, 0.6931472
  %v3011 = vlog2.pop %v2932
  %v3012 = vmul.f32 %v3011, 0.6931472
  %v3013 = vlog2.pop %v2935
  %v3014 = vmul.f32 %v3013, 0.6931472
  %v3015 = vlog2.pop %v2938
  %v3016 = vmul.f32 %v3015, 0.6931472
  %v3017 = vlog2.pop %v2941
  %v3018 = vmul.f32 %v3017, 0.6931472
  %v3019 = vlog2.pop %v2944
  %v3020 = vmul.f32 %v3019, 0.6931472
  %v3021 = vlog2.pop %v2947
  %v3022 = vmul.f32 %v3021, 0.6931472
  %v3023 = vlog2.pop %v2950
  %v3024 = vmul.f32 %v3023, 0.6931472
  %v3025 = vlog2.pop %v2953
  %v3026 = vmul.f32 %v3025, 0.6931472
  %v3027 = vlog2.pop %v2956
  %v3028 = vmul.f32 %v3027, 0.6931472
  %v3029 = vlog2.pop %v2959
  %v3030 = vmul.f32 %v3029, 0.6931472
  %v3031 = vlog2.pop %v2962
  %v3032 = vmul.f32 %v3031, 0.6931472
  %v3033 = vlog2.pop %v2965
  %v3034 = vmul.f32 %v3033, 0.6931472
  %v3035 = vlog2.pop %v2968
  %v3036 = vmul.f32 %v3035, 0.6931472
  %v3037 = vlog2.pop %v2971
  %v3038 = vmul.f32 %v3037, 0.6931472
  %v3039 = vlog2.pop %v2974
  %v3040 = vmul.f32 %v3039, 0.6931472
  %v3041 = vlog2.pop %v2977
  %v3042 = vmul.f32 %v3041, 0.6931472
  %v3043 = vlog2.pop %v2980
  %v3044 = vmul.f32 %v3043, 0.6931472
  %v3045 = vadd.f32 %v2695, %v2982
  %v3046 = vadd.f32 %v2698, %v2984
  %v3047 = vadd.f32 %v2701, %v2986
  %v3048 = vadd.f32 %v2704, %v2988
  %v3049 = vadd.f32 %v2707, %v2990
  %v3050 = vadd.f32 %v2710, %v2992
  %v3051 = vadd.f32 %v2713, %v2994
  %v3052 = vadd.f32 %v2716, %v2996
  %v3053 = vadd.f32 %v2719, %v2998
  %v3054 = vadd.f32 %v2722, %v3000
  %v3055 = vadd.f32 %v2725, %v3002
  %v3056 = vadd.f32 %v2728, %v3004
  %v3057 = vadd.f32 %v2731, %v3006
  %v3058 = vadd.f32 %v2734, %v3008
  %v3059 = vadd.f32 %v2737, %v3010
  %v3060 = vadd.f32 %v2740, %v3012
  %v3061 = vadd.f32 %v2743, %v3014
  %v3062 = vadd.f32 %v2746, %v3016
  %v3063 = vadd.f32 %v2749, %v3018
  %v3064 = vadd.f32 %v2752, %v3020
  %v3065 = vadd.f32 %v2755, %v3022
  %v3066 = vadd.f32 %v2758, %v3024
  %v3067 = vadd.f32 %v2761, %v3026
  %v3068 = vadd.f32 %v2764, %v3028
  %v3069 = vadd.f32 %v2767, %v3030
  %v3070 = vadd.f32 %v2770, %v3032
  %v3071 = vadd.f32 %v2773, %v3034
  %v3072 = vadd.f32 %v2776, %v3036
  %v3073 = vadd.f32 %v2779, %v3038
  %v3074 = vadd.f32 %v2782, %v3040
  %v3075 = vadd.f32 %v2785, %v3042
  %v3076 = vadd.f32 %v2788, %v3044
  %v3077 = vlaneseq
  %v3078 = vand.u32 %v3077, 127
  %3079 = vset.pattern.permute.xlu0 0
  %3080 = vperm.xlu0 %3079, %v2596
  %v3081 = vpop.permute.xlu0 %3080
  %3082 = vset.pattern.permute.xlu0 0
  %3083 = vperm.xlu0 %3082, %v2597
  %v3084 = vpop.permute.xlu0 %3083
  %3085 = vset.pattern.permute.xlu0 0
  %3086 = vperm.xlu0 %3085, %v2598
  %v3087 = vpop.permute.xlu0 %3086
  %3088 = vset.pattern.permute.xlu0 0
  %3089 = vperm.xlu0 %3088, %v2599
  %v3090 = vpop.permute.xlu0 %3089
  %3091 = vset.pattern.permute.xlu0 0
  %3092 = vperm.xlu0 %3091, %v2600
  %v3093 = vpop.permute.xlu0 %3092
  %3094 = vset.pattern.permute.xlu0 0
  %3095 = vperm.xlu0 %3094, %v2601
  %v3096 = vpop.permute.xlu0 %3095
  %3097 = vset.pattern.permute.xlu0 0
  %3098 = vperm.xlu0 %3097, %v2602
  %v3099 = vpop.permute.xlu0 %3098
  %3100 = vset.pattern.permute.xlu0 0
  %3101 = vperm.xlu0 %3100, %v2603
  %v3102 = vpop.permute.xlu0 %3101
  %3103 = vset.pattern.permute.xlu0 0
  %3104 = vperm.xlu0 %3103, %v2604
  %v3105 = vpop.permute.xlu0 %3104
  %3106 = vset.pattern.permute.xlu0 0
  %3107 = vperm.xlu0 %3106, %v2605
  %v3108 = vpop.permute.xlu0 %3107
  %3109 = vset.pattern.permute.xlu0 0
  %3110 = vperm.xlu0 %3109, %v2606
  %v3111 = vpop.permute.xlu0 %3110
  %3112 = vset.pattern.permute.xlu0 0
  %3113 = vperm.xlu0 %3112, %v2607
  %v3114 = vpop.permute.xlu0 %3113
  %3115 = vset.pattern.permute.xlu0 0
  %3116 = vperm.xlu0 %3115, %v2608
  %v3117 = vpop.permute.xlu0 %3116
  %3118 = vset.pattern.permute.xlu0 0
  %3119 = vperm.xlu0 %3118, %v2609
  %v3120 = vpop.permute.xlu0 %3119
  %3121 = vset.pattern.permute.xlu0 0
  %3122 = vperm.xlu0 %3121, %v2610
  %v3123 = vpop.permute.xlu0 %3122
  %3124 = vset.pattern.permute.xlu0 0
  %3125 = vperm.xlu0 %3124, %v2611
  %v3126 = vpop.permute.xlu0 %3125
  %3127 = vset.pattern.permute.xlu0 0
  %3128 = vperm.xlu0 %3127, %v2612
  %v3129 = vpop.permute.xlu0 %3128
  %3130 = vset.pattern.permute.xlu0 0
  %3131 = vperm.xlu0 %3130, %v2613
  %v3132 = vpop.permute.xlu0 %3131
  %3133 = vset.pattern.permute.xlu0 0
  %3134 = vperm.xlu0 %3133, %v2614
  %v3135 = vpop.permute.xlu0 %3134
  %3136 = vset.pattern.permute.xlu0 0
  %3137 = vperm.xlu0 %3136, %v2615
  %v3138 = vpop.permute.xlu0 %3137
  %3139 = vset.pattern.permute.xlu0 0
  %3140 = vperm.xlu0 %3139, %v2616
  %v3141 = vpop.permute.xlu0 %3140
  %3142 = vset.pattern.permute.xlu0 0
  %3143 = vperm.xlu0 %3142, %v2617
  %v3144 = vpop.permute.xlu0 %3143
  %3145 = vset.pattern.permute.xlu0 0
  %3146 = vperm.xlu0 %3145, %v2618
  %v3147 = vpop.permute.xlu0 %3146
  %3148 = vset.pattern.permute.xlu0 0
  %3149 = vperm.xlu0 %3148, %v2619
  %v3150 = vpop.permute.xlu0 %3149
  %3151 = vset.pattern.permute.xlu0 0
  %3152 = vperm.xlu0 %3151, %v2620
  %v3153 = vpop.permute.xlu0 %3152
  %3154 = vset.pattern.permute.xlu0 0
  %3155 = vperm.xlu0 %3154, %v2621
  %v3156 = vpop.permute.xlu0 %3155
  %3157 = vset.pattern.permute.xlu0 0
  %3158 = vperm.xlu0 %3157, %v2622
  %v3159 = vpop.permute.xlu0 %3158
  %3160 = vset.pattern.permute.xlu0 0
  %3161 = vperm.xlu0 %3160, %v2623
  %v3162 = vpop.permute.xlu0 %3161
  %3163 = vset.pattern.permute.xlu0 0
  %3164 = vperm.xlu0 %3163, %v2624
  %v3165 = vpop.permute.xlu0 %3164
  %3166 = vset.pattern.permute.xlu0 0
  %3167 = vperm.xlu0 %3166, %v2625
  %v3168 = vpop.permute.xlu0 %3167
  %3169 = vset.pattern.permute.xlu0 0
  %3170 = vperm.xlu0 %3169, %v2626
  %v3171 = vpop.permute.xlu0 %3170
  %3172 = vset.pattern.permute.xlu0 0
  %3173 = vperm.xlu0 %3172, %v2627
  %v3174 = vpop.permute.xlu0 %3173
  %vm3175 = vcmp.eq.s32.totalorder %v3078, %v3081
  %vm3176 = vcmp.eq.s32.totalorder %v3078, %v3084
  %vm3177 = vcmp.eq.s32.totalorder %v3078, %v3087
  %vm3178 = vcmp.eq.s32.totalorder %v3078, %v3090
  %vm3179 = vcmp.eq.s32.totalorder %v3078, %v3093
  %vm3180 = vcmp.eq.s32.totalorder %v3078, %v3096
  %vm3181 = vcmp.eq.s32.totalorder %v3078, %v3099
  %vm3182 = vcmp.eq.s32.totalorder %v3078, %v3102
  %vm3183 = vcmp.eq.s32.totalorder %v3078, %v3105
  %vm3184 = vcmp.eq.s32.totalorder %v3078, %v3108
  %vm3185 = vcmp.eq.s32.totalorder %v3078, %v3111
  %vm3186 = vcmp.eq.s32.totalorder %v3078, %v3114
  %vm3187 = vcmp.eq.s32.totalorder %v3078, %v3117
  %vm3188 = vcmp.eq.s32.totalorder %v3078, %v3120
  %vm3189 = vcmp.eq.s32.totalorder %v3078, %v3123
  %vm3190 = vcmp.eq.s32.totalorder %v3078, %v3126
  %vm3191 = vcmp.eq.s32.totalorder %v3078, %v3129
  %vm3192 = vcmp.eq.s32.totalorder %v3078, %v3132
  %vm3193 = vcmp.eq.s32.totalorder %v3078, %v3135
  %vm3194 = vcmp.eq.s32.totalorder %v3078, %v3138
  %vm3195 = vcmp.eq.s32.totalorder %v3078, %v3141
  %vm3196 = vcmp.eq.s32.totalorder %v3078, %v3144
  %vm3197 = vcmp.eq.s32.totalorder %v3078, %v3147
  %vm3198 = vcmp.eq.s32.totalorder %v3078, %v3150
  %vm3199 = vcmp.eq.s32.totalorder %v3078, %v3153
  %vm3200 = vcmp.eq.s32.totalorder %v3078, %v3156
  %vm3201 = vcmp.eq.s32.totalorder %v3078, %v3159
  %vm3202 = vcmp.eq.s32.totalorder %v3078, %v3162
  %vm3203 = vcmp.eq.s32.totalorder %v3078, %v3165
  %vm3204 = vcmp.eq.s32.totalorder %v3078, %v3168
  %vm3205 = vcmp.eq.s32.totalorder %v3078, %v3171
  %vm3206 = vcmp.eq.s32.totalorder %v3078, %v3174
  %v3207 = vsel %vm3175, 1, 0
  %v3208 = vsel %vm3176, 1, 0
  %v3209 = vsel %vm3177, 1, 0
  %v3210 = vsel %vm3178, 1, 0
  %v3211 = vsel %vm3179, 1, 0
  %v3212 = vsel %vm3180, 1, 0
  %v3213 = vsel %vm3181, 1, 0
  %v3214 = vsel %vm3182, 1, 0
  %v3215 = vsel %vm3183, 1, 0
  %v3216 = vsel %vm3184, 1, 0
  %v3217 = vsel %vm3185, 1, 0
  %v3218 = vsel %vm3186, 1, 0
  %v3219 = vsel %vm3187, 1, 0
  %v3220 = vsel %vm3188, 1, 0
  %v3221 = vsel %vm3189, 1, 0
  %v3222 = vsel %vm3190, 1, 0
  %v3223 = vsel %vm3191, 1, 0
  %v3224 = vsel %vm3192, 1, 0
  %v3225 = vsel %vm3193, 1, 0
  %v3226 = vsel %vm3194, 1, 0
  %v3227 = vsel %vm3195, 1, 0
  %v3228 = vsel %vm3196, 1, 0
  %v3229 = vsel %vm3197, 1, 0
  %v3230 = vsel %vm3198, 1, 0
  %v3231 = vsel %vm3199, 1, 0
  %v3232 = vsel %vm3200, 1, 0
  %v3233 = vsel %vm3201, 1, 0
  %v3234 = vsel %vm3202, 1, 0
  %v3235 = vsel %vm3203, 1, 0
  %v3236 = vsel %vm3204, 1, 0
  %v3237 = vsel %vm3205, 1, 0
  %v3238 = vsel %vm3206, 1, 0
  %v3239 = vcvt.s32.f32 %v3207
  %v3240 = vcvt.s32.f32 %v3208
  %v3241 = vcvt.s32.f32 %v3209
  %v3242 = vcvt.s32.f32 %v3210
  %v3243 = vcvt.s32.f32 %v3211
  %v3244 = vcvt.s32.f32 %v3212
  %v3245 = vcvt.s32.f32 %v3213
  %v3246 = vcvt.s32.f32 %v3214
  %v3247 = vcvt.s32.f32 %v3215
  %v3248 = vcvt.s32.f32 %v3216
  %v3249 = vcvt.s32.f32 %v3217
  %v3250 = vcvt.s32.f32 %v3218
  %v3251 = vcvt.s32.f32 %v3219
  %v3252 = vcvt.s32.f32 %v3220
  %v3253 = vcvt.s32.f32 %v3221
  %v3254 = vcvt.s32.f32 %v3222
  %v3255 = vcvt.s32.f32 %v3223
  %v3256 = vcvt.s32.f32 %v3224
  %v3257 = vcvt.s32.f32 %v3225
  %v3258 = vcvt.s32.f32 %v3226
  %v3259 = vcvt.s32.f32 %v3227
  %v3260 = vcvt.s32.f32 %v3228
  %v3261 = vcvt.s32.f32 %v3229
  %v3262 = vcvt.s32.f32 %v3230
  %v3263 = vcvt.s32.f32 %v3231
  %v3264 = vcvt.s32.f32 %v3232
  %v3265 = vcvt.s32.f32 %v3233
  %v3266 = vcvt.s32.f32 %v3234
  %v3267 = vcvt.s32.f32 %v3235
  %v3268 = vcvt.s32.f32 %v3236
  %v3269 = vcvt.s32.f32 %v3237
  %v3270 = vcvt.s32.f32 %v3238
  %v3271 = vmul.f32 %v2438, %v3239
  %v3272 = vmul.f32 %v2443, %v3240
  %v3273 = vmul.f32 %v2448, %v3241
  %v3274 = vmul.f32 %v2453, %v3242
  %v3275 = vmul.f32 %v2458, %v3243
  %v3276 = vmul.f32 %v2463, %v3244
  %v3277 = vmul.f32 %v2468, %v3245
  %v3278 = vmul.f32 %v2473, %v3246
  %v3279 = vmul.f32 %v2478, %v3247
  %v3280 = vmul.f32 %v2483, %v3248
  %v3281 = vmul.f32 %v2488, %v3249
  %v3282 = vmul.f32 %v2493, %v3250
  %v3283 = vmul.f32 %v2498, %v3251
  %v3284 = vmul.f32 %v2503, %v3252
  %v3285 = vmul.f32 %v2508, %v3253
  %v3286 = vmul.f32 %v2513, %v3254
  %v3287 = vmul.f32 %v2518, %v3255
  %v3288 = vmul.f32 %v2523, %v3256
  %v3289 = vmul.f32 %v2528, %v3257
  %v3290 = vmul.f32 %v2533, %v3258
  %v3291 = vmul.f32 %v2538, %v3259
  %v3292 = vmul.f32 %v2543, %v3260
  %v3293 = vmul.f32 %v2548, %v3261
  %v3294 = vmul.f32 %v2553, %v3262
  %v3295 = vmul.f32 %v2558, %v3263
  %v3296 = vmul.f32 %v2563, %v3264
  %v3297 = vmul.f32 %v2568, %v3265
  %v3298 = vmul.f32 %v2573, %v3266
  %v3299 = vmul.f32 %v2578, %v3267
  %v3300 = vmul.f32 %v2583, %v3268
  %v3301 = vmul.f32 %v2588, %v3269
  %v3302 = vmul.f32 %v2593, %v3270
  %v3303 = vsel %vm2692, %v3271, 0.0
  %3304 = vadd.xlane.f32.xlu0 %v3303
  %v3305 = vpop.xlane.xlu0 %3304
  %v3306 = vsel %vm2692, %v3272, 0.0
  %3307 = vadd.xlane.f32.xlu0 %v3306
  %v3308 = vpop.xlane.xlu0 %3307
  %v3309 = vsel %vm2692, %v3273, 0.0
  %3310 = vadd.xlane.f32.xlu0 %v3309
  %v3311 = vpop.xlane.xlu0 %3310
  %v3312 = vsel %vm2692, %v3274, 0.0
  %3313 = vadd.xlane.f32.xlu0 %v3312
  %v3314 = vpop.xlane.xlu0 %3313
  %v3315 = vsel %vm2692, %v3275, 0.0
  %3316 = vadd.xlane.f32.xlu0 %v3315
  %v3317 = vpop.xlane.xlu0 %3316
  %v3318 = vsel %vm2692, %v3276, 0.0
  %3319 = vadd.xlane.f32.xlu0 %v3318
  %v3320 = vpop.xlane.xlu0 %3319
  %v3321 = vsel %vm2692, %v3277, 0.0
  %3322 = vadd.xlane.f32.xlu0 %v3321
  %v3323 = vpop.xlane.xlu0 %3322
  %v3324 = vsel %vm2692, %v3278, 0.0
  %3325 = vadd.xlane.f32.xlu0 %v3324
  %v3326 = vpop.xlane.xlu0 %3325
  %v3327 = vsel %vm2692, %v3279, 0.0
  %3328 = vadd.xlane.f32.xlu0 %v3327
  %v3329 = vpop.xlane.xlu0 %3328
  %v3330 = vsel %vm2692, %v3280, 0.0
  %3331 = vadd.xlane.f32.xlu0 %v3330
  %v3332 = vpop.xlane.xlu0 %3331
  %v3333 = vsel %vm2692, %v3281, 0.0
  %3334 = vadd.xlane.f32.xlu0 %v3333
  %v3335 = vpop.xlane.xlu0 %3334
  %v3336 = vsel %vm2692, %v3282, 0.0
  %3337 = vadd.xlane.f32.xlu0 %v3336
  %v3338 = vpop.xlane.xlu0 %3337
  %v3339 = vsel %vm2692, %v3283, 0.0
  %3340 = vadd.xlane.f32.xlu0 %v3339
  %v3341 = vpop.xlane.xlu0 %3340
  %v3342 = vsel %vm2692, %v3284, 0.0
  %3343 = vadd.xlane.f32.xlu0 %v3342
  %v3344 = vpop.xlane.xlu0 %3343
  %v3345 = vsel %vm2692, %v3285, 0.0
  %3346 = vadd.xlane.f32.xlu0 %v3345
  %v3347 = vpop.xlane.xlu0 %3346
  %v3348 = vsel %vm2692, %v3286, 0.0
  %3349 = vadd.xlane.f32.xlu0 %v3348
  %v3350 = vpop.xlane.xlu0 %3349
  %v3351 = vsel %vm2692, %v3287, 0.0
  %3352 = vadd.xlane.f32.xlu0 %v3351
  %v3353 = vpop.xlane.xlu0 %3352
  %v3354 = vsel %vm2692, %v3288, 0.0
  %3355 = vadd.xlane.f32.xlu0 %v3354
  %v3356 = vpop.xlane.xlu0 %3355
  %v3357 = vsel %vm2692, %v3289, 0.0
  %3358 = vadd.xlane.f32.xlu0 %v3357
  %v3359 = vpop.xlane.xlu0 %3358
  %v3360 = vsel %vm2692, %v3290, 0.0
  %3361 = vadd.xlane.f32.xlu0 %v3360
  %v3362 = vpop.xlane.xlu0 %3361
  %v3363 = vsel %vm2692, %v3291, 0.0
  %3364 = vadd.xlane.f32.xlu0 %v3363
  %v3365 = vpop.xlane.xlu0 %3364
  %v3366 = vsel %vm2692, %v3292, 0.0
  %3367 = vadd.xlane.f32.xlu0 %v3366
  %v3368 = vpop.xlane.xlu0 %3367
  %v3369 = vsel %vm2692, %v3293, 0.0
  %3370 = vadd.xlane.f32.xlu0 %v3369
  %v3371 = vpop.xlane.xlu0 %3370
  %v3372 = vsel %vm2692, %v3294, 0.0
  %3373 = vadd.xlane.f32.xlu0 %v3372
  %v3374 = vpop.xlane.xlu0 %3373
  %v3375 = vsel %vm2692, %v3295, 0.0
  %3376 = vadd.xlane.f32.xlu0 %v3375
  %v3377 = vpop.xlane.xlu0 %3376
  %v3378 = vsel %vm2692, %v3296, 0.0
  %3379 = vadd.xlane.f32.xlu0 %v3378
  %v3380 = vpop.xlane.xlu0 %3379
  %v3381 = vsel %vm2692, %v3297, 0.0
  %3382 = vadd.xlane.f32.xlu0 %v3381
  %v3383 = vpop.xlane.xlu0 %3382
  %v3384 = vsel %vm2692, %v3298, 0.0
  %3385 = vadd.xlane.f32.xlu0 %v3384
  %v3386 = vpop.xlane.xlu0 %3385
  %v3387 = vsel %vm2692, %v3299, 0.0
  %3388 = vadd.xlane.f32.xlu0 %v3387
  %v3389 = vpop.xlane.xlu0 %3388
  %v3390 = vsel %vm2692, %v3300, 0.0
  %3391 = vadd.xlane.f32.xlu0 %v3390
  %v3392 = vpop.xlane.xlu0 %3391
  %v3393 = vsel %vm2692, %v3301, 0.0
  %3394 = vadd.xlane.f32.xlu0 %v3393
  %v3395 = vpop.xlane.xlu0 %3394
  %v3396 = vsel %vm2692, %v3302, 0.0
  %3397 = vadd.xlane.f32.xlu0 %v3396
  %v3398 = vpop.xlane.xlu0 %3397
  %v3399 = vsub.f32 %v3045, %v3305
  %v3400 = vsub.f32 %v3046, %v3308
  %v3401 = vsub.f32 %v3047, %v3311
  %v3402 = vsub.f32 %v3048, %v3314
  %v3403 = vsub.f32 %v3049, %v3317
  %v3404 = vsub.f32 %v3050, %v3320
  %v3405 = vsub.f32 %v3051, %v3323
  %v3406 = vsub.f32 %v3052, %v3326
  %v3407 = vsub.f32 %v3053, %v3329
  %v3408 = vsub.f32 %v3054, %v3332
  %v3409 = vsub.f32 %v3055, %v3335
  %v3410 = vsub.f32 %v3056, %v3338
  %v3411 = vsub.f32 %v3057, %v3341
  %v3412 = vsub.f32 %v3058, %v3344
  %v3413 = vsub.f32 %v3059, %v3347
  %v3414 = vsub.f32 %v3060, %v3350
  %v3415 = vsub.f32 %v3061, %v3353
  %v3416 = vsub.f32 %v3062, %v3356
  %v3417 = vsub.f32 %v3063, %v3359
  %v3418 = vsub.f32 %v3064, %v3362
  %v3419 = vsub.f32 %v3065, %v3365
  %v3420 = vsub.f32 %v3066, %v3368
  %v3421 = vsub.f32 %v3067, %v3371
  %v3422 = vsub.f32 %v3068, %v3374
  %v3423 = vsub.f32 %v3069, %v3377
  %v3424 = vsub.f32 %v3070, %v3380
  %v3425 = vsub.f32 %v3071, %v3383
  %v3426 = vsub.f32 %v3072, %v3386
  %v3427 = vsub.f32 %v3073, %v3389
  %v3428 = vsub.f32 %v3074, %v3392
  %v3429 = vsub.f32 %v3075, %v3395
  %v3430 = vsub.f32 %v3076, %v3398
  %v3431 = vmul.f32 %v2660, %v3399
  %v3432 = vmul.f32 %v2661, %v3400
  %v3433 = vmul.f32 %v2662, %v3401
  %v3434 = vmul.f32 %v2663, %v3402
  %v3435 = vmul.f32 %v2664, %v3403
  %v3436 = vmul.f32 %v2665, %v3404
  %v3437 = vmul.f32 %v2666, %v3405
  %v3438 = vmul.f32 %v2667, %v3406
  %v3439 = vmul.f32 %v2668, %v3407
  %v3440 = vmul.f32 %v2669, %v3408
  %v3441 = vmul.f32 %v2670, %v3409
  %v3442 = vmul.f32 %v2671, %v3410
  %v3443 = vmul.f32 %v2672, %v3411
  %v3444 = vmul.f32 %v2673, %v3412
  %v3445 = vmul.f32 %v2674, %v3413
  %v3446 = vmul.f32 %v2675, %v3414
  %v3447 = vmul.f32 %v2676, %v3415
  %v3448 = vmul.f32 %v2677, %v3416
  %v3449 = vmul.f32 %v2678, %v3417
  %v3450 = vmul.f32 %v2679, %v3418
  %v3451 = vmul.f32 %v2680, %v3419
  %v3452 = vmul.f32 %v2681, %v3420
  %v3453 = vmul.f32 %v2682, %v3421
  %v3454 = vmul.f32 %v2683, %v3422
  %v3455 = vmul.f32 %v2684, %v3423
  %v3456 = vmul.f32 %v2685, %v3424
  %v3457 = vmul.f32 %v2686, %v3425
  %v3458 = vmul.f32 %v2687, %v3426
  %v3459 = vmul.f32 %v2688, %v3427
  %v3460 = vmul.f32 %v2689, %v3428
  %v3461 = vmul.f32 %v2690, %v3429
  %v3462 = vmul.f32 %v2691, %v3430
  %vm3463 = vcmask 7168
  %v3464 = vsel %vm3463, %v3431, 0.0
  %v3465 = vsel %vm3463, %v3432, 0.0
  %v3466 = vadd.f32 %v3464, %v3465
  %v3467 = vsel %vm3463, %v3433, 0.0
  %v3468 = vadd.f32 %v3466, %v3467
  %v3469 = vsel %vm3463, %v3434, 0.0
  %v3470 = vadd.f32 %v3468, %v3469
  %v3471 = vsel %vm3463, %v3435, 0.0
  %v3472 = vadd.f32 %v3470, %v3471
  %v3473 = vsel %vm3463, %v3436, 0.0
  %v3474 = vadd.f32 %v3472, %v3473
  %v3475 = vsel %vm3463, %v3437, 0.0
  %v3476 = vadd.f32 %v3474, %v3475
  %v3477 = vsel %vm3463, %v3438, 0.0
  %v3478 = vadd.f32 %v3476, %v3477
  %v3479 = vsel %vm3463, %v3439, 0.0
  %v3480 = vadd.f32 %v3478, %v3479
  %v3481 = vsel %vm3463, %v3440, 0.0
  %v3482 = vadd.f32 %v3480, %v3481
  %v3483 = vsel %vm3463, %v3441, 0.0
  %v3484 = vadd.f32 %v3482, %v3483
  %v3485 = vsel %vm3463, %v3442, 0.0
  %v3486 = vadd.f32 %v3484, %v3485
  %v3487 = vsel %vm3463, %v3443, 0.0
  %v3488 = vadd.f32 %v3486, %v3487
  %v3489 = vsel %vm3463, %v3444, 0.0
  %v3490 = vadd.f32 %v3488, %v3489
  %v3491 = vsel %vm3463, %v3445, 0.0
  %v3492 = vadd.f32 %v3490, %v3491
  %v3493 = vsel %vm3463, %v3446, 0.0
  %v3494 = vadd.f32 %v3492, %v3493
  %v3495 = vsel %vm3463, %v3447, 0.0
  %v3496 = vadd.f32 %v3494, %v3495
  %v3497 = vsel %vm3463, %v3448, 0.0
  %v3498 = vadd.f32 %v3496, %v3497
  %v3499 = vsel %vm3463, %v3449, 0.0
  %v3500 = vadd.f32 %v3498, %v3499
  %v3501 = vsel %vm3463, %v3450, 0.0
  %v3502 = vadd.f32 %v3500, %v3501
  %v3503 = vsel %vm3463, %v3451, 0.0
  %v3504 = vadd.f32 %v3502, %v3503
  %v3505 = vsel %vm3463, %v3452, 0.0
  %v3506 = vadd.f32 %v3504, %v3505
  %v3507 = vsel %vm3463, %v3453, 0.0
  %v3508 = vadd.f32 %v3506, %v3507
  %v3509 = vsel %vm3463, %v3454, 0.0
  %v3510 = vadd.f32 %v3508, %v3509
  %v3511 = vsel %vm3463, %v3455, 0.0
  %v3512 = vadd.f32 %v3510, %v3511
  %v3513 = vsel %vm3463, %v3456, 0.0
  %v3514 = vadd.f32 %v3512, %v3513
  %v3515 = vsel %vm3463, %v3457, 0.0
  %v3516 = vadd.f32 %v3514, %v3515
  %v3517 = vsel %vm3463, %v3458, 0.0
  %v3518 = vadd.f32 %v3516, %v3517
  %v3519 = vsel %vm3463, %v3459, 0.0
  %v3520 = vadd.f32 %v3518, %v3519
  %v3521 = vsel %vm3463, %v3460, 0.0
  %v3522 = vadd.f32 %v3520, %v3521
  %v3523 = vsel %vm3463, %v3461, 0.0
  %v3524 = vadd.f32 %v3522, %v3523
  %v3525 = vsel %vm3463, %v3462, 0.0
  %v3526 = vadd.f32 %v3524, %v3525
  %3527 = vadd.xlane.f32.xlu0 %v3526
  %v3528 = vpop.xlane.xlu0 %3527
  %v3529 = vrot.slane %v3528, 4
  %v3530 = vadd.f32 %v3528, %v3529
  %v3531 = vrot.slane %v3530, 2
  %v3532 = vadd.f32 %v3530, %v3531
  %v3533 = vrot.slane %v3532, 1
  %v3534 = vadd.f32 %v3532, %v3533
  %s3535 = vtos %v3534
  %v3536 = vsel %vm3463, %v2660, 0.0
  %v3537 = vsel %vm3463, %v2661, 0.0
  %v3538 = vadd.f32 %v3536, %v3537
  %v3539 = vsel %vm3463, %v2662, 0.0
  %v3540 = vadd.f32 %v3538, %v3539
  %v3541 = vsel %vm3463, %v2663, 0.0
  %v3542 = vadd.f32 %v3540, %v3541
  %v3543 = vsel %vm3463, %v2664, 0.0
  %v3544 = vadd.f32 %v3542, %v3543
  %v3545 = vsel %vm3463, %v2665, 0.0
  %v3546 = vadd.f32 %v3544, %v3545
  %v3547 = vsel %vm3463, %v2666, 0.0
  %v3548 = vadd.f32 %v3546, %v3547
  %v3549 = vsel %vm3463, %v2667, 0.0
  %v3550 = vadd.f32 %v3548, %v3549
  %v3551 = vsel %vm3463, %v2668, 0.0
  %v3552 = vadd.f32 %v3550, %v3551
  %v3553 = vsel %vm3463, %v2669, 0.0
  %v3554 = vadd.f32 %v3552, %v3553
  %v3555 = vsel %vm3463, %v2670, 0.0
  %v3556 = vadd.f32 %v3554, %v3555
  %v3557 = vsel %vm3463, %v2671, 0.0
  %v3558 = vadd.f32 %v3556, %v3557
  %v3559 = vsel %vm3463, %v2672, 0.0
  %v3560 = vadd.f32 %v3558, %v3559
  %v3561 = vsel %vm3463, %v2673, 0.0
  %v3562 = vadd.f32 %v3560, %v3561
  %v3563 = vsel %vm3463, %v2674, 0.0
  %v3564 = vadd.f32 %v3562, %v3563
  %v3565 = vsel %vm3463, %v2675, 0.0
  %v3566 = vadd.f32 %v3564, %v3565
  %v3567 = vsel %vm3463, %v2676, 0.0
  %v3568 = vadd.f32 %v3566, %v3567
  %v3569 = vsel %vm3463, %v2677, 0.0
  %v3570 = vadd.f32 %v3568, %v3569
  %v3571 = vsel %vm3463, %v2678, 0.0
  %v3572 = vadd.f32 %v3570, %v3571
  %v3573 = vsel %vm3463, %v2679, 0.0
  %v3574 = vadd.f32 %v3572, %v3573
  %v3575 = vsel %vm3463, %v2680, 0.0
  %v3576 = vadd.f32 %v3574, %v3575
  %v3577 = vsel %vm3463, %v2681, 0.0
  %v3578 = vadd.f32 %v3576, %v3577
  %v3579 = vsel %vm3463, %v2682, 0.0
  %v3580 = vadd.f32 %v3578, %v3579
  %v3581 = vsel %vm3463, %v2683, 0.0
  %v3582 = vadd.f32 %v3580, %v3581
  %v3583 = vsel %vm3463, %v2684, 0.0
  %v3584 = vadd.f32 %v3582, %v3583
  %v3585 = vsel %vm3463, %v2685, 0.0
  %v3586 = vadd.f32 %v3584, %v3585
  %v3587 = vsel %vm3463, %v2686, 0.0
  %v3588 = vadd.f32 %v3586, %v3587
  %v3589 = vsel %vm3463, %v2687, 0.0
  %v3590 = vadd.f32 %v3588, %v3589
  %v3591 = vsel %vm3463, %v2688, 0.0
  %v3592 = vadd.f32 %v3590, %v3591
  %v3593 = vsel %vm3463, %v2689, 0.0
  %v3594 = vadd.f32 %v3592, %v3593
  %v3595 = vsel %vm3463, %v2690, 0.0
  %v3596 = vadd.f32 %v3594, %v3595
  %v3597 = vsel %vm3463, %v2691, 0.0
  %v3598 = vadd.f32 %v3596, %v3597
  %3599 = vadd.xlane.f32.xlu0 %v3598
  %v3600 = vpop.xlane.xlu0 %3599
  %v3601 = vrot.slane %v3600, 4
  %v3602 = vadd.f32 %v3600, %v3601
  %v3603 = vrot.slane %v3602, 2
  %v3604 = vadd.f32 %v3602, %v3603
  %v3605 = vrot.slane %v3604, 1
  %v3606 = vadd.f32 %v3604, %v3605
  %s3607 = vtos %v3606
  %vm3608 = vcmp.eq.f32.partialorder %v2438, %v2695
  %vm3609 = vcmp.eq.f32.partialorder %v2443, %v2698
  %vm3610 = vcmp.eq.f32.partialorder %v2448, %v2701
  %vm3611 = vcmp.eq.f32.partialorder %v2453, %v2704
  %vm3612 = vcmp.eq.f32.partialorder %v2458, %v2707
  %vm3613 = vcmp.eq.f32.partialorder %v2463, %v2710
  %vm3614 = vcmp.eq.f32.partialorder %v2468, %v2713
  %vm3615 = vcmp.eq.f32.partialorder %v2473, %v2716
  %vm3616 = vcmp.eq.f32.partialorder %v2478, %v2719
  %vm3617 = vcmp.eq.f32.partialorder %v2483, %v2722
  %vm3618 = vcmp.eq.f32.partialorder %v2488, %v2725
  %vm3619 = vcmp.eq.f32.partialorder %v2493, %v2728
  %vm3620 = vcmp.eq.f32.partialorder %v2498, %v2731
  %vm3621 = vcmp.eq.f32.partialorder %v2503, %v2734
  %vm3622 = vcmp.eq.f32.partialorder %v2508, %v2737
  %vm3623 = vcmp.eq.f32.partialorder %v2513, %v2740
  %vm3624 = vcmp.eq.f32.partialorder %v2518, %v2743
  %vm3625 = vcmp.eq.f32.partialorder %v2523, %v2746
  %vm3626 = vcmp.eq.f32.partialorder %v2528, %v2749
  %vm3627 = vcmp.eq.f32.partialorder %v2533, %v2752
  %vm3628 = vcmp.eq.f32.partialorder %v2538, %v2755
  %vm3629 = vcmp.eq.f32.partialorder %v2543, %v2758
  %vm3630 = vcmp.eq.f32.partialorder %v2548, %v2761
  %vm3631 = vcmp.eq.f32.partialorder %v2553, %v2764
  %vm3632 = vcmp.eq.f32.partialorder %v2558, %v2767
  %vm3633 = vcmp.eq.f32.partialorder %v2563, %v2770
  %vm3634 = vcmp.eq.f32.partialorder %v2568, %v2773
  %vm3635 = vcmp.eq.f32.partialorder %v2573, %v2776
  %vm3636 = vcmp.eq.f32.partialorder %v2578, %v2779
  %vm3637 = vcmp.eq.f32.partialorder %v2583, %v2782
  %vm3638 = vcmp.eq.f32.partialorder %v2588, %v2785
  %vm3639 = vcmp.eq.f32.partialorder %v2593, %v2788
  %v3640 = vsel %vm3608, %v3078, 8
  %v3641 = vsel %vm3609, %v3078, 8
  %v3642 = vsel %vm3610, %v3078, 8
  %v3643 = vsel %vm3611, %v3078, 8
  %v3644 = vsel %vm3612, %v3078, 8
  %v3645 = vsel %vm3613, %v3078, 8
  %v3646 = vsel %vm3614, %v3078, 8
  %v3647 = vsel %vm3615, %v3078, 8
  %v3648 = vsel %vm3616, %v3078, 8
  %v3649 = vsel %vm3617, %v3078, 8
  %v3650 = vsel %vm3618, %v3078, 8
  %v3651 = vsel %vm3619, %v3078, 8
  %v3652 = vsel %vm3620, %v3078, 8
  %v3653 = vsel %vm3621, %v3078, 8
  %v3654 = vsel %vm3622, %v3078, 8
  %v3655 = vsel %vm3623, %v3078, 8
  %v3656 = vsel %vm3624, %v3078, 8
  %v3657 = vsel %vm3625, %v3078, 8
  %v3658 = vsel %vm3626, %v3078, 8
  %v3659 = vsel %vm3627, %v3078, 8
  %v3660 = vsel %vm3628, %v3078, 8
  %v3661 = vsel %vm3629, %v3078, 8
  %v3662 = vsel %vm3630, %v3078, 8
  %v3663 = vsel %vm3631, %v3078, 8
  %v3664 = vsel %vm3632, %v3078, 8
  %v3665 = vsel %vm3633, %v3078, 8
  %v3666 = vsel %vm3634, %v3078, 8
  %v3667 = vsel %vm3635, %v3078, 8
  %v3668 = vsel %vm3636, %v3078, 8
  %v3669 = vsel %vm3637, %v3078, 8
  %v3670 = vsel %vm3638, %v3078, 8
  %v3671 = vsel %vm3639, %v3078, 8
  %v3672 = vsel %vm2692, %v3640, 2147483647
  %v3673 = vand.u32 %v3672, 65535
  %v3674 = vshra.s32 %v3672, 16
  %v3675 = vcvt.s32.f32 %v3673
  %v3676 = vcvt.s32.f32 %v3674
  %3677 = vmin.xlane.f32.xlu0 %v3676
  %v3678 = vpop.xlane.xlu0 %3677
  %vm3679 = vcmp.eq.f32.partialorder %v3676, %v3678
  %v3680 = vsel %vm3679, %v3675, inf
  %3681 = vmin.xlane.f32.xlu0 %v3680
  %v3682 = vpop.xlane.xlu0 %3681
  %v3683 = vcvt.f32.s32 %v3682
  %v3684 = vcvt.f32.s32 %v3678
  %v3685 = vshll.u32 %v3684, 16
  %v3686 = vadd.s32 %v3685, %v3683
  %v3687 = vsel %vm2692, %v3641, 2147483647
  %v3688 = vand.u32 %v3687, 65535
  %v3689 = vshra.s32 %v3687, 16
  %v3690 = vcvt.s32.f32 %v3688
  %v3691 = vcvt.s32.f32 %v3689
  %3692 = vmin.xlane.f32.xlu0 %v3691
  %v3693 = vpop.xlane.xlu0 %3692
  %vm3694 = vcmp.eq.f32.partialorder %v3691, %v3693
  %v3695 = vsel %vm3694, %v3690, inf
  %3696 = vmin.xlane.f32.xlu0 %v3695
  %v3697 = vpop.xlane.xlu0 %3696
  %v3698 = vcvt.f32.s32 %v3697
  %v3699 = vcvt.f32.s32 %v3693
  %v3700 = vshll.u32 %v3699, 16
  %v3701 = vadd.s32 %v3700, %v3698
  %v3702 = vsel %vm2692, %v3642, 2147483647
  %v3703 = vand.u32 %v3702, 65535
  %v3704 = vshra.s32 %v3702, 16
  %v3705 = vcvt.s32.f32 %v3703
  %v3706 = vcvt.s32.f32 %v3704
  %3707 = vmin.xlane.f32.xlu0 %v3706
  %v3708 = vpop.xlane.xlu0 %3707
  %vm3709 = vcmp.eq.f32.partialorder %v3706, %v3708
  %v3710 = vsel %vm3709, %v3705, inf
  %3711 = vmin.xlane.f32.xlu0 %v3710
  %v3712 = vpop.xlane.xlu0 %3711
  %v3713 = vcvt.f32.s32 %v3712
  %v3714 = vcvt.f32.s32 %v3708
  %v3715 = vshll.u32 %v3714, 16
  %v3716 = vadd.s32 %v3715, %v3713
  %v3717 = vsel %vm2692, %v3643, 2147483647
  %v3718 = vand.u32 %v3717, 65535
  %v3719 = vshra.s32 %v3717, 16
  %v3720 = vcvt.s32.f32 %v3718
  %v3721 = vcvt.s32.f32 %v3719
  %3722 = vmin.xlane.f32.xlu0 %v3721
  %v3723 = vpop.xlane.xlu0 %3722
  %vm3724 = vcmp.eq.f32.partialorder %v3721, %v3723
  %v3725 = vsel %vm3724, %v3720, inf
  %3726 = vmin.xlane.f32.xlu0 %v3725
  %v3727 = vpop.xlane.xlu0 %3726
  %v3728 = vcvt.f32.s32 %v3727
  %v3729 = vcvt.f32.s32 %v3723
  %v3730 = vshll.u32 %v3729, 16
  %v3731 = vadd.s32 %v3730, %v3728
  %v3732 = vsel %vm2692, %v3644, 2147483647
  %v3733 = vand.u32 %v3732, 65535
  %v3734 = vshra.s32 %v3732, 16
  %v3735 = vcvt.s32.f32 %v3733
  %v3736 = vcvt.s32.f32 %v3734
  %3737 = vmin.xlane.f32.xlu0 %v3736
  %v3738 = vpop.xlane.xlu0 %3737
  %vm3739 = vcmp.eq.f32.partialorder %v3736, %v3738
  %v3740 = vsel %vm3739, %v3735, inf
  %3741 = vmin.xlane.f32.xlu0 %v3740
  %v3742 = vpop.xlane.xlu0 %3741
  %v3743 = vcvt.f32.s32 %v3742
  %v3744 = vcvt.f32.s32 %v3738
  %v3745 = vshll.u32 %v3744, 16
  %v3746 = vadd.s32 %v3745, %v3743
  %v3747 = vsel %vm2692, %v3645, 2147483647
  %v3748 = vand.u32 %v3747, 65535
  %v3749 = vshra.s32 %v3747, 16
  %v3750 = vcvt.s32.f32 %v3748
  %v3751 = vcvt.s32.f32 %v3749
  %3752 = vmin.xlane.f32.xlu0 %v3751
  %v3753 = vpop.xlane.xlu0 %3752
  %vm3754 = vcmp.eq.f32.partialorder %v3751, %v3753
  %v3755 = vsel %vm3754, %v3750, inf
  %3756 = vmin.xlane.f32.xlu0 %v3755
  %v3757 = vpop.xlane.xlu0 %3756
  %v3758 = vcvt.f32.s32 %v3757
  %v3759 = vcvt.f32.s32 %v3753
  %v3760 = vshll.u32 %v3759, 16
  %v3761 = vadd.s32 %v3760, %v3758
  %v3762 = vsel %vm2692, %v3646, 2147483647
  %v3763 = vand.u32 %v3762, 65535
  %v3764 = vshra.s32 %v3762, 16
  %v3765 = vcvt.s32.f32 %v3763
  %v3766 = vcvt.s32.f32 %v3764
  %3767 = vmin.xlane.f32.xlu0 %v3766
  %v3768 = vpop.xlane.xlu0 %3767
  %vm3769 = vcmp.eq.f32.partialorder %v3766, %v3768
  %v3770 = vsel %vm3769, %v3765, inf
  %3771 = vmin.xlane.f32.xlu0 %v3770
  %v3772 = vpop.xlane.xlu0 %3771
  %v3773 = vcvt.f32.s32 %v3772
  %v3774 = vcvt.f32.s32 %v3768
  %v3775 = vshll.u32 %v3774, 16
  %v3776 = vadd.s32 %v3775, %v3773
  %v3777 = vsel %vm2692, %v3647, 2147483647
  %v3778 = vand.u32 %v3777, 65535
  %v3779 = vshra.s32 %v3777, 16
  %v3780 = vcvt.s32.f32 %v3778
  %v3781 = vcvt.s32.f32 %v3779
  %3782 = vmin.xlane.f32.xlu0 %v3781
  %v3783 = vpop.xlane.xlu0 %3782
  %vm3784 = vcmp.eq.f32.partialorder %v3781, %v3783
  %v3785 = vsel %vm3784, %v3780, inf
  %3786 = vmin.xlane.f32.xlu0 %v3785
  %v3787 = vpop.xlane.xlu0 %3786
  %v3788 = vcvt.f32.s32 %v3787
  %v3789 = vcvt.f32.s32 %v3783
  %v3790 = vshll.u32 %v3789, 16
  %v3791 = vadd.s32 %v3790, %v3788
  %v3792 = vsel %vm2692, %v3648, 2147483647
  %v3793 = vand.u32 %v3792, 65535
  %v3794 = vshra.s32 %v3792, 16
  %v3795 = vcvt.s32.f32 %v3793
  %v3796 = vcvt.s32.f32 %v3794
  %3797 = vmin.xlane.f32.xlu0 %v3796
  %v3798 = vpop.xlane.xlu0 %3797
  %vm3799 = vcmp.eq.f32.partialorder %v3796, %v3798
  %v3800 = vsel %vm3799, %v3795, inf
  %3801 = vmin.xlane.f32.xlu0 %v3800
  %v3802 = vpop.xlane.xlu0 %3801
  %v3803 = vcvt.f32.s32 %v3802
  %v3804 = vcvt.f32.s32 %v3798
  %v3805 = vshll.u32 %v3804, 16
  %v3806 = vadd.s32 %v3805, %v3803
  %v3807 = vsel %vm2692, %v3649, 2147483647
  %v3808 = vand.u32 %v3807, 65535
  %v3809 = vshra.s32 %v3807, 16
  %v3810 = vcvt.s32.f32 %v3808
  %v3811 = vcvt.s32.f32 %v3809
  %3812 = vmin.xlane.f32.xlu0 %v3811
  %v3813 = vpop.xlane.xlu0 %3812
  %vm3814 = vcmp.eq.f32.partialorder %v3811, %v3813
  %v3815 = vsel %vm3814, %v3810, inf
  %3816 = vmin.xlane.f32.xlu0 %v3815
  %v3817 = vpop.xlane.xlu0 %3816
  %v3818 = vcvt.f32.s32 %v3817
  %v3819 = vcvt.f32.s32 %v3813
  %v3820 = vshll.u32 %v3819, 16
  %v3821 = vadd.s32 %v3820, %v3818
  %v3822 = vsel %vm2692, %v3650, 2147483647
  %v3823 = vand.u32 %v3822, 65535
  %v3824 = vshra.s32 %v3822, 16
  %v3825 = vcvt.s32.f32 %v3823
  %v3826 = vcvt.s32.f32 %v3824
  %3827 = vmin.xlane.f32.xlu0 %v3826
  %v3828 = vpop.xlane.xlu0 %3827
  %vm3829 = vcmp.eq.f32.partialorder %v3826, %v3828
  %v3830 = vsel %vm3829, %v3825, inf
  %3831 = vmin.xlane.f32.xlu0 %v3830
  %v3832 = vpop.xlane.xlu0 %3831
  %v3833 = vcvt.f32.s32 %v3832
  %v3834 = vcvt.f32.s32 %v3828
  %v3835 = vshll.u32 %v3834, 16
  %v3836 = vadd.s32 %v3835, %v3833
  %v3837 = vsel %vm2692, %v3651, 2147483647
  %v3838 = vand.u32 %v3837, 65535
  %v3839 = vshra.s32 %v3837, 16
  %v3840 = vcvt.s32.f32 %v3838
  %v3841 = vcvt.s32.f32 %v3839
  %3842 = vmin.xlane.f32.xlu0 %v3841
  %v3843 = vpop.xlane.xlu0 %3842
  %vm3844 = vcmp.eq.f32.partialorder %v3841, %v3843
  %v3845 = vsel %vm3844, %v3840, inf
  %3846 = vmin.xlane.f32.xlu0 %v3845
  %v3847 = vpop.xlane.xlu0 %3846
  %v3848 = vcvt.f32.s32 %v3847
  %v3849 = vcvt.f32.s32 %v3843
  %v3850 = vshll.u32 %v3849, 16
  %v3851 = vadd.s32 %v3850, %v3848
  %v3852 = vsel %vm2692, %v3652, 2147483647
  %v3853 = vand.u32 %v3852, 65535
  %v3854 = vshra.s32 %v3852, 16
  %v3855 = vcvt.s32.f32 %v3853
  %v3856 = vcvt.s32.f32 %v3854
  %3857 = vmin.xlane.f32.xlu0 %v3856
  %v3858 = vpop.xlane.xlu0 %3857
  %vm3859 = vcmp.eq.f32.partialorder %v3856, %v3858
  %v3860 = vsel %vm3859, %v3855, inf
  %3861 = vmin.xlane.f32.xlu0 %v3860
  %v3862 = vpop.xlane.xlu0 %3861
  %v3863 = vcvt.f32.s32 %v3862
  %v3864 = vcvt.f32.s32 %v3858
  %v3865 = vshll.u32 %v3864, 16
  %v3866 = vadd.s32 %v3865, %v3863
  %v3867 = vsel %vm2692, %v3653, 2147483647
  %v3868 = vand.u32 %v3867, 65535
  %v3869 = vshra.s32 %v3867, 16
  %v3870 = vcvt.s32.f32 %v3868
  %v3871 = vcvt.s32.f32 %v3869
  %3872 = vmin.xlane.f32.xlu0 %v3871
  %v3873 = vpop.xlane.xlu0 %3872
  %vm3874 = vcmp.eq.f32.partialorder %v3871, %v3873
  %v3875 = vsel %vm3874, %v3870, inf
  %3876 = vmin.xlane.f32.xlu0 %v3875
  %v3877 = vpop.xlane.xlu0 %3876
  %v3878 = vcvt.f32.s32 %v3877
  %v3879 = vcvt.f32.s32 %v3873
  %v3880 = vshll.u32 %v3879, 16
  %v3881 = vadd.s32 %v3880, %v3878
  %v3882 = vsel %vm2692, %v3654, 2147483647
  %v3883 = vand.u32 %v3882, 65535
  %v3884 = vshra.s32 %v3882, 16
  %v3885 = vcvt.s32.f32 %v3883
  %v3886 = vcvt.s32.f32 %v3884
  %3887 = vmin.xlane.f32.xlu0 %v3886
  %v3888 = vpop.xlane.xlu0 %3887
  %vm3889 = vcmp.eq.f32.partialorder %v3886, %v3888
  %v3890 = vsel %vm3889, %v3885, inf
  %3891 = vmin.xlane.f32.xlu0 %v3890
  %v3892 = vpop.xlane.xlu0 %3891
  %v3893 = vcvt.f32.s32 %v3892
  %v3894 = vcvt.f32.s32 %v3888
  %v3895 = vshll.u32 %v3894, 16
  %v3896 = vadd.s32 %v3895, %v3893
  %v3897 = vsel %vm2692, %v3655, 2147483647
  %v3898 = vand.u32 %v3897, 65535
  %v3899 = vshra.s32 %v3897, 16
  %v3900 = vcvt.s32.f32 %v3898
  %v3901 = vcvt.s32.f32 %v3899
  %3902 = vmin.xlane.f32.xlu0 %v3901
  %v3903 = vpop.xlane.xlu0 %3902
  %vm3904 = vcmp.eq.f32.partialorder %v3901, %v3903
  %v3905 = vsel %vm3904, %v3900, inf
  %3906 = vmin.xlane.f32.xlu0 %v3905
  %v3907 = vpop.xlane.xlu0 %3906
  %v3908 = vcvt.f32.s32 %v3907
  %v3909 = vcvt.f32.s32 %v3903
  %v3910 = vshll.u32 %v3909, 16
  %v3911 = vadd.s32 %v3910, %v3908
  %v3912 = vsel %vm2692, %v3656, 2147483647
  %v3913 = vand.u32 %v3912, 65535
  %v3914 = vshra.s32 %v3912, 16
  %v3915 = vcvt.s32.f32 %v3913
  %v3916 = vcvt.s32.f32 %v3914
  %3917 = vmin.xlane.f32.xlu0 %v3916
  %v3918 = vpop.xlane.xlu0 %3917
  %vm3919 = vcmp.eq.f32.partialorder %v3916, %v3918
  %v3920 = vsel %vm3919, %v3915, inf
  %3921 = vmin.xlane.f32.xlu0 %v3920
  %v3922 = vpop.xlane.xlu0 %3921
  %v3923 = vcvt.f32.s32 %v3922
  %v3924 = vcvt.f32.s32 %v3918
  %v3925 = vshll.u32 %v3924, 16
  %v3926 = vadd.s32 %v3925, %v3923
  %v3927 = vsel %vm2692, %v3657, 2147483647
  %v3928 = vand.u32 %v3927, 65535
  %v3929 = vshra.s32 %v3927, 16
  %v3930 = vcvt.s32.f32 %v3928
  %v3931 = vcvt.s32.f32 %v3929
  %3932 = vmin.xlane.f32.xlu0 %v3931
  %v3933 = vpop.xlane.xlu0 %3932
  %vm3934 = vcmp.eq.f32.partialorder %v3931, %v3933
  %v3935 = vsel %vm3934, %v3930, inf
  %3936 = vmin.xlane.f32.xlu0 %v3935
  %v3937 = vpop.xlane.xlu0 %3936
  %v3938 = vcvt.f32.s32 %v3937
  %v3939 = vcvt.f32.s32 %v3933
  %v3940 = vshll.u32 %v3939, 16
  %v3941 = vadd.s32 %v3940, %v3938
  %v3942 = vsel %vm2692, %v3658, 2147483647
  %v3943 = vand.u32 %v3942, 65535
  %v3944 = vshra.s32 %v3942, 16
  %v3945 = vcvt.s32.f32 %v3943
  %v3946 = vcvt.s32.f32 %v3944
  %3947 = vmin.xlane.f32.xlu0 %v3946
  %v3948 = vpop.xlane.xlu0 %3947
  %vm3949 = vcmp.eq.f32.partialorder %v3946, %v3948
  %v3950 = vsel %vm3949, %v3945, inf
  %3951 = vmin.xlane.f32.xlu0 %v3950
  %v3952 = vpop.xlane.xlu0 %3951
  %v3953 = vcvt.f32.s32 %v3952
  %v3954 = vcvt.f32.s32 %v3948
  %v3955 = vshll.u32 %v3954, 16
  %v3956 = vadd.s32 %v3955, %v3953
  %v3957 = vsel %vm2692, %v3659, 2147483647
  %v3958 = vand.u32 %v3957, 65535
  %v3959 = vshra.s32 %v3957, 16
  %v3960 = vcvt.s32.f32 %v3958
  %v3961 = vcvt.s32.f32 %v3959
  %3962 = vmin.xlane.f32.xlu0 %v3961
  %v3963 = vpop.xlane.xlu0 %3962
  %vm3964 = vcmp.eq.f32.partialorder %v3961, %v3963
  %v3965 = vsel %vm3964, %v3960, inf
  %3966 = vmin.xlane.f32.xlu0 %v3965
  %v3967 = vpop.xlane.xlu0 %3966
  %v3968 = vcvt.f32.s32 %v3967
  %v3969 = vcvt.f32.s32 %v3963
  %v3970 = vshll.u32 %v3969, 16
  %v3971 = vadd.s32 %v3970, %v3968
  %v3972 = vsel %vm2692, %v3660, 2147483647
  %v3973 = vand.u32 %v3972, 65535
  %v3974 = vshra.s32 %v3972, 16
  %v3975 = vcvt.s32.f32 %v3973
  %v3976 = vcvt.s32.f32 %v3974
  %3977 = vmin.xlane.f32.xlu0 %v3976
  %v3978 = vpop.xlane.xlu0 %3977
  %vm3979 = vcmp.eq.f32.partialorder %v3976, %v3978
  %v3980 = vsel %vm3979, %v3975, inf
  %3981 = vmin.xlane.f32.xlu0 %v3980
  %v3982 = vpop.xlane.xlu0 %3981
  %v3983 = vcvt.f32.s32 %v3982
  %v3984 = vcvt.f32.s32 %v3978
  %v3985 = vshll.u32 %v3984, 16
  %v3986 = vadd.s32 %v3985, %v3983
  %v3987 = vsel %vm2692, %v3661, 2147483647
  %v3988 = vand.u32 %v3987, 65535
  %v3989 = vshra.s32 %v3987, 16
  %v3990 = vcvt.s32.f32 %v3988
  %v3991 = vcvt.s32.f32 %v3989
  %3992 = vmin.xlane.f32.xlu0 %v3991
  %v3993 = vpop.xlane.xlu0 %3992
  %vm3994 = vcmp.eq.f32.partialorder %v3991, %v3993
  %v3995 = vsel %vm3994, %v3990, inf
  %3996 = vmin.xlane.f32.xlu0 %v3995
  %v3997 = vpop.xlane.xlu0 %3996
  %v3998 = vcvt.f32.s32 %v3997
  %v3999 = vcvt.f32.s32 %v3993
  %v4000 = vshll.u32 %v3999, 16
  %v4001 = vadd.s32 %v4000, %v3998
  %v4002 = vsel %vm2692, %v3662, 2147483647
  %v4003 = vand.u32 %v4002, 65535
  %v4004 = vshra.s32 %v4002, 16
  %v4005 = vcvt.s32.f32 %v4003
  %v4006 = vcvt.s32.f32 %v4004
  %4007 = vmin.xlane.f32.xlu0 %v4006
  %v4008 = vpop.xlane.xlu0 %4007
  %vm4009 = vcmp.eq.f32.partialorder %v4006, %v4008
  %v4010 = vsel %vm4009, %v4005, inf
  %4011 = vmin.xlane.f32.xlu0 %v4010
  %v4012 = vpop.xlane.xlu0 %4011
  %v4013 = vcvt.f32.s32 %v4012
  %v4014 = vcvt.f32.s32 %v4008
  %v4015 = vshll.u32 %v4014, 16
  %v4016 = vadd.s32 %v4015, %v4013
  %v4017 = vsel %vm2692, %v3663, 2147483647
  %v4018 = vand.u32 %v4017, 65535
  %v4019 = vshra.s32 %v4017, 16
  %v4020 = vcvt.s32.f32 %v4018
  %v4021 = vcvt.s32.f32 %v4019
  %4022 = vmin.xlane.f32.xlu0 %v4021
  %v4023 = vpop.xlane.xlu0 %4022
  %vm4024 = vcmp.eq.f32.partialorder %v4021, %v4023
  %v4025 = vsel %vm4024, %v4020, inf
  %4026 = vmin.xlane.f32.xlu0 %v4025
  %v4027 = vpop.xlane.xlu0 %4026
  %v4028 = vcvt.f32.s32 %v4027
  %v4029 = vcvt.f32.s32 %v4023
  %v4030 = vshll.u32 %v4029, 16
  %v4031 = vadd.s32 %v4030, %v4028
  %v4032 = vsel %vm2692, %v3664, 2147483647
  %v4033 = vand.u32 %v4032, 65535
  %v4034 = vshra.s32 %v4032, 16
  %v4035 = vcvt.s32.f32 %v4033
  %v4036 = vcvt.s32.f32 %v4034
  %4037 = vmin.xlane.f32.xlu0 %v4036
  %v4038 = vpop.xlane.xlu0 %4037
  %vm4039 = vcmp.eq.f32.partialorder %v4036, %v4038
  %v4040 = vsel %vm4039, %v4035, inf
  %4041 = vmin.xlane.f32.xlu0 %v4040
  %v4042 = vpop.xlane.xlu0 %4041
  %v4043 = vcvt.f32.s32 %v4042
  %v4044 = vcvt.f32.s32 %v4038
  %v4045 = vshll.u32 %v4044, 16
  %v4046 = vadd.s32 %v4045, %v4043
  %v4047 = vsel %vm2692, %v3665, 2147483647
  %v4048 = vand.u32 %v4047, 65535
  %v4049 = vshra.s32 %v4047, 16
  %v4050 = vcvt.s32.f32 %v4048
  %v4051 = vcvt.s32.f32 %v4049
  %4052 = vmin.xlane.f32.xlu0 %v4051
  %v4053 = vpop.xlane.xlu0 %4052
  %vm4054 = vcmp.eq.f32.partialorder %v4051, %v4053
  %v4055 = vsel %vm4054, %v4050, inf
  %4056 = vmin.xlane.f32.xlu0 %v4055
  %v4057 = vpop.xlane.xlu0 %4056
  %v4058 = vcvt.f32.s32 %v4057
  %v4059 = vcvt.f32.s32 %v4053
  %v4060 = vshll.u32 %v4059, 16
  %v4061 = vadd.s32 %v4060, %v4058
  %v4062 = vsel %vm2692, %v3666, 2147483647
  %v4063 = vand.u32 %v4062, 65535
  %v4064 = vshra.s32 %v4062, 16
  %v4065 = vcvt.s32.f32 %v4063
  %v4066 = vcvt.s32.f32 %v4064
  %4067 = vmin.xlane.f32.xlu0 %v4066
  %v4068 = vpop.xlane.xlu0 %4067
  %vm4069 = vcmp.eq.f32.partialorder %v4066, %v4068
  %v4070 = vsel %vm4069, %v4065, inf
  %4071 = vmin.xlane.f32.xlu0 %v4070
  %v4072 = vpop.xlane.xlu0 %4071
  %v4073 = vcvt.f32.s32 %v4072
  %v4074 = vcvt.f32.s32 %v4068
  %v4075 = vshll.u32 %v4074, 16
  %v4076 = vadd.s32 %v4075, %v4073
  %v4077 = vsel %vm2692, %v3667, 2147483647
  %v4078 = vand.u32 %v4077, 65535
  %v4079 = vshra.s32 %v4077, 16
  %v4080 = vcvt.s32.f32 %v4078
  %v4081 = vcvt.s32.f32 %v4079
  %4082 = vmin.xlane.f32.xlu0 %v4081
  %v4083 = vpop.xlane.xlu0 %4082
  %vm4084 = vcmp.eq.f32.partialorder %v4081, %v4083
  %v4085 = vsel %vm4084, %v4080, inf
  %4086 = vmin.xlane.f32.xlu0 %v4085
  %v4087 = vpop.xlane.xlu0 %4086
  %v4088 = vcvt.f32.s32 %v4087
  %v4089 = vcvt.f32.s32 %v4083
  %v4090 = vshll.u32 %v4089, 16
  %v4091 = vadd.s32 %v4090, %v4088
  %v4092 = vsel %vm2692, %v3668, 2147483647
  %v4093 = vand.u32 %v4092, 65535
  %v4094 = vshra.s32 %v4092, 16
  %v4095 = vcvt.s32.f32 %v4093
  %v4096 = vcvt.s32.f32 %v4094
  %4097 = vmin.xlane.f32.xlu0 %v4096
  %v4098 = vpop.xlane.xlu0 %4097
  %vm4099 = vcmp.eq.f32.partialorder %v4096, %v4098
  %v4100 = vsel %vm4099, %v4095, inf
  %4101 = vmin.xlane.f32.xlu0 %v4100
  %v4102 = vpop.xlane.xlu0 %4101
  %v4103 = vcvt.f32.s32 %v4102
  %v4104 = vcvt.f32.s32 %v4098
  %v4105 = vshll.u32 %v4104, 16
  %v4106 = vadd.s32 %v4105, %v4103
  %v4107 = vsel %vm2692, %v3669, 2147483647
  %v4108 = vand.u32 %v4107, 65535
  %v4109 = vshra.s32 %v4107, 16
  %v4110 = vcvt.s32.f32 %v4108
  %v4111 = vcvt.s32.f32 %v4109
  %4112 = vmin.xlane.f32.xlu0 %v4111
  %v4113 = vpop.xlane.xlu0 %4112
  %vm4114 = vcmp.eq.f32.partialorder %v4111, %v4113
  %v4115 = vsel %vm4114, %v4110, inf
  %4116 = vmin.xlane.f32.xlu0 %v4115
  %v4117 = vpop.xlane.xlu0 %4116
  %v4118 = vcvt.f32.s32 %v4117
  %v4119 = vcvt.f32.s32 %v4113
  %v4120 = vshll.u32 %v4119, 16
  %v4121 = vadd.s32 %v4120, %v4118
  %v4122 = vsel %vm2692, %v3670, 2147483647
  %v4123 = vand.u32 %v4122, 65535
  %v4124 = vshra.s32 %v4122, 16
  %v4125 = vcvt.s32.f32 %v4123
  %v4126 = vcvt.s32.f32 %v4124
  %4127 = vmin.xlane.f32.xlu0 %v4126
  %v4128 = vpop.xlane.xlu0 %4127
  %vm4129 = vcmp.eq.f32.partialorder %v4126, %v4128
  %v4130 = vsel %vm4129, %v4125, inf
  %4131 = vmin.xlane.f32.xlu0 %v4130
  %v4132 = vpop.xlane.xlu0 %4131
  %v4133 = vcvt.f32.s32 %v4132
  %v4134 = vcvt.f32.s32 %v4128
  %v4135 = vshll.u32 %v4134, 16
  %v4136 = vadd.s32 %v4135, %v4133
  %v4137 = vsel %vm2692, %v3671, 2147483647
  %v4138 = vand.u32 %v4137, 65535
  %v4139 = vshra.s32 %v4137, 16
  %v4140 = vcvt.s32.f32 %v4138
  %v4141 = vcvt.s32.f32 %v4139
  %4142 = vmin.xlane.f32.xlu0 %v4141
  %v4143 = vpop.xlane.xlu0 %4142
  %vm4144 = vcmp.eq.f32.partialorder %v4141, %v4143
  %v4145 = vsel %vm4144, %v4140, inf
  %4146 = vmin.xlane.f32.xlu0 %v4145
  %v4147 = vpop.xlane.xlu0 %4146
  %v4148 = vcvt.f32.s32 %v4147
  %v4149 = vcvt.f32.s32 %v4143
  %v4150 = vshll.u32 %v4149, 16
  %v4151 = vadd.s32 %v4150, %v4148
  %vm4152 = vcmp.eq.s32.totalorder %v3686, %v2596
  %vm4153 = vcmp.eq.s32.totalorder %v3701, %v2597
  %vm4154 = vcmp.eq.s32.totalorder %v3716, %v2598
  %vm4155 = vcmp.eq.s32.totalorder %v3731, %v2599
  %vm4156 = vcmp.eq.s32.totalorder %v3746, %v2600
  %vm4157 = vcmp.eq.s32.totalorder %v3761, %v2601
  %vm4158 = vcmp.eq.s32.totalorder %v3776, %v2602
  %vm4159 = vcmp.eq.s32.totalorder %v3791, %v2603
  %vm4160 = vcmp.eq.s32.totalorder %v3806, %v2604
  %vm4161 = vcmp.eq.s32.totalorder %v3821, %v2605
  %vm4162 = vcmp.eq.s32.totalorder %v3836, %v2606
  %vm4163 = vcmp.eq.s32.totalorder %v3851, %v2607
  %vm4164 = vcmp.eq.s32.totalorder %v3866, %v2608
  %vm4165 = vcmp.eq.s32.totalorder %v3881, %v2609
  %vm4166 = vcmp.eq.s32.totalorder %v3896, %v2610
  %vm4167 = vcmp.eq.s32.totalorder %v3911, %v2611
  %vm4168 = vcmp.eq.s32.totalorder %v3926, %v2612
  %vm4169 = vcmp.eq.s32.totalorder %v3941, %v2613
  %vm4170 = vcmp.eq.s32.totalorder %v3956, %v2614
  %vm4171 = vcmp.eq.s32.totalorder %v3971, %v2615
  %vm4172 = vcmp.eq.s32.totalorder %v3986, %v2616
  %vm4173 = vcmp.eq.s32.totalorder %v4001, %v2617
  %vm4174 = vcmp.eq.s32.totalorder %v4016, %v2618
  %vm4175 = vcmp.eq.s32.totalorder %v4031, %v2619
  %vm4176 = vcmp.eq.s32.totalorder %v4046, %v2620
  %vm4177 = vcmp.eq.s32.totalorder %v4061, %v2621
  %vm4178 = vcmp.eq.s32.totalorder %v4076, %v2622
  %vm4179 = vcmp.eq.s32.totalorder %v4091, %v2623
  %vm4180 = vcmp.eq.s32.totalorder %v4106, %v2624
  %vm4181 = vcmp.eq.s32.totalorder %v4121, %v2625
  %vm4182 = vcmp.eq.s32.totalorder %v4136, %v2626
  %vm4183 = vcmp.eq.s32.totalorder %v4151, %v2627
  %v4184 = vsel %vm4152, 1, 0
  %v4185 = vsel %vm4153, 1, 0
  %v4186 = vsel %vm4154, 1, 0
  %v4187 = vsel %vm4155, 1, 0
  %v4188 = vsel %vm4156, 1, 0
  %v4189 = vsel %vm4157, 1, 0
  %v4190 = vsel %vm4158, 1, 0
  %v4191 = vsel %vm4159, 1, 0
  %v4192 = vsel %vm4160, 1, 0
  %v4193 = vsel %vm4161, 1, 0
  %v4194 = vsel %vm4162, 1, 0
  %v4195 = vsel %vm4163, 1, 0
  %v4196 = vsel %vm4164, 1, 0
  %v4197 = vsel %vm4165, 1, 0
  %v4198 = vsel %vm4166, 1, 0
  %v4199 = vsel %vm4167, 1, 0
  %v4200 = vsel %vm4168, 1, 0
  %v4201 = vsel %vm4169, 1, 0
  %v4202 = vsel %vm4170, 1, 0
  %v4203 = vsel %vm4171, 1, 0
  %v4204 = vsel %vm4172, 1, 0
  %v4205 = vsel %vm4173, 1, 0
  %v4206 = vsel %vm4174, 1, 0
  %v4207 = vsel %vm4175, 1, 0
  %v4208 = vsel %vm4176, 1, 0
  %v4209 = vsel %vm4177, 1, 0
  %v4210 = vsel %vm4178, 1, 0
  %v4211 = vsel %vm4179, 1, 0
  %v4212 = vsel %vm4180, 1, 0
  %v4213 = vsel %vm4181, 1, 0
  %v4214 = vsel %vm4182, 1, 0
  %v4215 = vsel %vm4183, 1, 0
  %v4216 = vcvt.s32.f32 %v4184
  %v4217 = vcvt.s32.f32 %v4185
  %v4218 = vcvt.s32.f32 %v4186
  %v4219 = vcvt.s32.f32 %v4187
  %v4220 = vcvt.s32.f32 %v4188
  %v4221 = vcvt.s32.f32 %v4189
  %v4222 = vcvt.s32.f32 %v4190
  %v4223 = vcvt.s32.f32 %v4191
  %v4224 = vcvt.s32.f32 %v4192
  %v4225 = vcvt.s32.f32 %v4193
  %v4226 = vcvt.s32.f32 %v4194
  %v4227 = vcvt.s32.f32 %v4195
  %v4228 = vcvt.s32.f32 %v4196
  %v4229 = vcvt.s32.f32 %v4197
  %v4230 = vcvt.s32.f32 %v4198
  %v4231 = vcvt.s32.f32 %v4199
  %v4232 = vcvt.s32.f32 %v4200
  %v4233 = vcvt.s32.f32 %v4201
  %v4234 = vcvt.s32.f32 %v4202
  %v4235 = vcvt.s32.f32 %v4203
  %v4236 = vcvt.s32.f32 %v4204
  %v4237 = vcvt.s32.f32 %v4205
  %v4238 = vcvt.s32.f32 %v4206
  %v4239 = vcvt.s32.f32 %v4207
  %v4240 = vcvt.s32.f32 %v4208
  %v4241 = vcvt.s32.f32 %v4209
  %v4242 = vcvt.s32.f32 %v4210
  %v4243 = vcvt.s32.f32 %v4211
  %v4244 = vcvt.s32.f32 %v4212
  %v4245 = vcvt.s32.f32 %v4213
  %v4246 = vcvt.s32.f32 %v4214
  %v4247 = vcvt.s32.f32 %v4215
  %v4248 = vmul.f32 %v2660, %v4216
  %v4249 = vmul.f32 %v2661, %v4217
  %v4250 = vmul.f32 %v2662, %v4218
  %v4251 = vmul.f32 %v2663, %v4219
  %v4252 = vmul.f32 %v2664, %v4220
  %v4253 = vmul.f32 %v2665, %v4221
  %v4254 = vmul.f32 %v2666, %v4222
  %v4255 = vmul.f32 %v2667, %v4223
  %v4256 = vmul.f32 %v2668, %v4224
  %v4257 = vmul.f32 %v2669, %v4225
  %v4258 = vmul.f32 %v2670, %v4226
  %v4259 = vmul.f32 %v2671, %v4227
  %v4260 = vmul.f32 %v2672, %v4228
  %v4261 = vmul.f32 %v2673, %v4229
  %v4262 = vmul.f32 %v2674, %v4230
  %v4263 = vmul.f32 %v2675, %v4231
  %v4264 = vmul.f32 %v2676, %v4232
  %v4265 = vmul.f32 %v2677, %v4233
  %v4266 = vmul.f32 %v2678, %v4234
  %v4267 = vmul.f32 %v2679, %v4235
  %v4268 = vmul.f32 %v2680, %v4236
  %v4269 = vmul.f32 %v2681, %v4237
  %v4270 = vmul.f32 %v2682, %v4238
  %v4271 = vmul.f32 %v2683, %v4239
  %v4272 = vmul.f32 %v2684, %v4240
  %v4273 = vmul.f32 %v2685, %v4241
  %v4274 = vmul.f32 %v2686, %v4242
  %v4275 = vmul.f32 %v2687, %v4243
  %v4276 = vmul.f32 %v2688, %v4244
  %v4277 = vmul.f32 %v2689, %v4245
  %v4278 = vmul.f32 %v2690, %v4246
  %v4279 = vmul.f32 %v2691, %v4247
  %v4280 = vsel %vm3463, %v4248, 0.0
  %v4281 = vsel %vm3463, %v4249, 0.0
  %v4282 = vadd.f32 %v4280, %v4281
  %v4283 = vsel %vm3463, %v4250, 0.0
  %v4284 = vadd.f32 %v4282, %v4283
  %v4285 = vsel %vm3463, %v4251, 0.0
  %v4286 = vadd.f32 %v4284, %v4285
  %v4287 = vsel %vm3463, %v4252, 0.0
  %v4288 = vadd.f32 %v4286, %v4287
  %v4289 = vsel %vm3463, %v4253, 0.0
  %v4290 = vadd.f32 %v4288, %v4289
  %v4291 = vsel %vm3463, %v4254, 0.0
  %v4292 = vadd.f32 %v4290, %v4291
  %v4293 = vsel %vm3463, %v4255, 0.0
  %v4294 = vadd.f32 %v4292, %v4293
  %v4295 = vsel %vm3463, %v4256, 0.0
  %v4296 = vadd.f32 %v4294, %v4295
  %v4297 = vsel %vm3463, %v4257, 0.0
  %v4298 = vadd.f32 %v4296, %v4297
  %v4299 = vsel %vm3463, %v4258, 0.0
  %v4300 = vadd.f32 %v4298, %v4299
  %v4301 = vsel %vm3463, %v4259, 0.0
  %v4302 = vadd.f32 %v4300, %v4301
  %v4303 = vsel %vm3463, %v4260, 0.0
  %v4304 = vadd.f32 %v4302, %v4303
  %v4305 = vsel %vm3463, %v4261, 0.0
  %v4306 = vadd.f32 %v4304, %v4305
  %v4307 = vsel %vm3463, %v4262, 0.0
  %v4308 = vadd.f32 %v4306, %v4307
  %v4309 = vsel %vm3463, %v4263, 0.0
  %v4310 = vadd.f32 %v4308, %v4309
  %v4311 = vsel %vm3463, %v4264, 0.0
  %v4312 = vadd.f32 %v4310, %v4311
  %v4313 = vsel %vm3463, %v4265, 0.0
  %v4314 = vadd.f32 %v4312, %v4313
  %v4315 = vsel %vm3463, %v4266, 0.0
  %v4316 = vadd.f32 %v4314, %v4315
  %v4317 = vsel %vm3463, %v4267, 0.0
  %v4318 = vadd.f32 %v4316, %v4317
  %v4319 = vsel %vm3463, %v4268, 0.0
  %v4320 = vadd.f32 %v4318, %v4319
  %v4321 = vsel %vm3463, %v4269, 0.0
  %v4322 = vadd.f32 %v4320, %v4321
  %v4323 = vsel %vm3463, %v4270, 0.0
  %v4324 = vadd.f32 %v4322, %v4323
  %v4325 = vsel %vm3463, %v4271, 0.0
  %v4326 = vadd.f32 %v4324, %v4325
  %v4327 = vsel %vm3463, %v4272, 0.0
  %v4328 = vadd.f32 %v4326, %v4327
  %v4329 = vsel %vm3463, %v4273, 0.0
  %v4330 = vadd.f32 %v4328, %v4329
  %v4331 = vsel %vm3463, %v4274, 0.0
  %v4332 = vadd.f32 %v4330, %v4331
  %v4333 = vsel %vm3463, %v4275, 0.0
  %v4334 = vadd.f32 %v4332, %v4333
  %v4335 = vsel %vm3463, %v4276, 0.0
  %v4336 = vadd.f32 %v4334, %v4335
  %v4337 = vsel %vm3463, %v4277, 0.0
  %v4338 = vadd.f32 %v4336, %v4337
  %v4339 = vsel %vm3463, %v4278, 0.0
  %v4340 = vadd.f32 %v4338, %v4339
  %v4341 = vsel %vm3463, %v4279, 0.0
  %v4342 = vadd.f32 %v4340, %v4341
  %4343 = vadd.xlane.f32.xlu0 %v4342
  %v4344 = vpop.xlane.xlu0 %4343
  %v4345 = vrot.slane %v4344, 4
  %v4346 = vadd.f32 %v4344, %v4345
  %v4347 = vrot.slane %v4346, 2
  %v4348 = vadd.f32 %v4346, %v4347
  %v4349 = vrot.slane %v4348, 1
  %v4350 = vadd.f32 %v4348, %v4349
  %s4351 = vtos %v4350
  %vm4352 = vcmp.eq.s32.totalorder %v252, 0
  %v4353 = vstv %s3535
  %v4354 = vsel %vm4352, %v4353, 0.0
  %vm4355 = vcmp.eq.s32.totalorder %v252, 1
  %v4356 = vstv %s3607
  %v4357 = vsel %vm4355, %v4356, 0.0
  %v4358 = vadd.f32 %v4354, %v4357
  %vm4359 = vcmp.eq.s32.totalorder %v252, 2
  %v4360 = vstv %s4351
  %v4361 = vsel %vm4359, %v4360, 0.0
  %v4362 = vadd.f32 %v4358, %v4361
  %4363 = vst [vmem:[%s7] sm:$0xff] %v4362
  // Predicated region
  $region30: #{conv1d_probe_forward.1} parent=0 // pred_check
    _
  $region31: #{conv1d_probe_forward.1} parent=0 // pred_check_branch
    %4365 = sbr.rel (0) target = $region33
  $region32: #{conv1d_probe_forward.1} parent=0 // pred_region
    _
  $region33: #{conv1d_probe_forward.1} parent=0 // pred_fallthru
    _
  // Predicated region
  $region34: #{conv1d_probe_forward.1} parent=0 // pred_check
    _
  $region35: #{conv1d_probe_forward.1} parent=0 // pred_check_branch
    %4367 = sbr.rel (0) target = $region37
  $region36: #{conv1d_probe_forward.1} parent=0 // pred_region
    _
  $region37: #{conv1d_probe_forward.1} parent=0 // pred_fallthru
    _

</llo_original>
